<compile_context>
chip_gen: v7x
topology: tpu7x:2x2x1
jax: 0.10.0
libtpu: 0.0.40
codegen_flags: <defaults>
</compile_context>

<pallas_src>
import functools

import jax
import jax.numpy as jnp
import numpy as np
from jax import lax
from jax.experimental import pallas as pl
from jax.experimental.pallas import tpu as pltpu


# ----------------------------------------------------------------------------
# weight slab packing (one constant operand instead of 44)
# ----------------------------------------------------------------------------
def _build_weight_slab(p, attn_dim):
    """Pack every weight/bias into one f32 slab with 8-row-aligned entries.

    - ally/enemy encoders are fused into `enc_w` = [ally_w; enemy_w; ally_b;
      enemy_b] (the two bias rows are selected by indicator columns appended to
      the kernel input).
    - 1/sqrt(attn_dim) is folded into the (temp_)query weights/biases.
    Returns (slab [rows, width] f32, layout dict name -> (row_off, rows, cols)).
    """
    inv = attn_dim ** -0.5
    packed = {}
    packed['enc_w'] = jnp.concatenate(
        [p['ally_w'], p['enemy_w'], p['ally_b'], p['enemy_b']], axis=0)
    packed['temp_q_w'] = p['temp_query_w'] * inv
    packed['temp_q_b'] = p['temp_query_b'] * inv
    packed['temp_k_w'] = p['temp_key_w']
    packed['temp_k_b'] = p['temp_key_b']
    packed['query_w'] = p['query_w'] * inv
    packed['query_b'] = p['query_b'] * inv
    packed['key_w'] = p['key_w']
    packed['key_b'] = p['key_b']
    for pre in ('traj', 'agent'):
        for nm in ('ln1_g', 'ln1_b', 'ff_w1', 'ff_b1', 'ff_w2', 'ff_b2',
                   'ff_w3', 'ff_b3', 'ff_w4', 'ff_b4', 'ln2_g', 'ln2_b'):
            packed[f'{pre}_{nm}'] = p[f'{pre}_{nm}']
    packed['wproj_w'] = p['wproj_w']
    packed['wproj_b'] = p['wproj_b']
    packed['nproj_w1'] = p['nproj_w1']
    packed['nproj_b1'] = p['nproj_b1']
    packed['nproj_w2'] = p['nproj_w2']
    packed['nproj_b2'] = p['nproj_b2']
    packed['nproj_w3t'] = p['nproj_w3'].T          # [1, E]
    packed['nproj_b3'] = p['nproj_b3']             # [1, 1]

    width = max(a.shape[1] for a in packed.values())
    layout = {}
    off = 0
    for name, a in packed.items():
        r, c = a.shape
        layout[name] = (off, r, c)
        off += ((r + 7) // 8) * 8                  # keep every entry sublane-aligned
    slab = jnp.zeros((off, width), jnp.float32)
    for name, a in packed.items():
        o, r, c = layout[name]
        slab = slab.at[o:o + r, :c].set(a.astype(jnp.float32))
    return slab, layout


# ----------------------------------------------------------------------------
# fused TaskHead kernel: one block of B batch elements per grid step
# ----------------------------------------------------------------------------
def task_head_kernel(x_ref, bias_ref, mcol_ref, slab_ref, avg_sel_ref,
                     agent_bias_ref, avg_agents_ref, w_out_ref, n_out_ref,
                     *, layout, mxu_dtype):
    def W(name):
        off, r, c = layout[name]
        return slab_ref[off:off + r, :c]           # static slice -> cheap load

    def mdot(a, b):                                # MXU matmul, bf16 operands
        return jnp.dot(a.astype(mxu_dtype), b.astype(mxu_dtype),
                       preferred_element_type=jnp.float32)

    def mdot_nt(a, b):                             # a @ b.T without transpose
        return lax.dot_general(a.astype(mxu_dtype), b.astype(mxu_dtype),
                               (((1,), (1,)), ((), ())),
                               preferred_element_type=jnp.float32)

    def layernorm(v, g, b, eps=1e-5):
        mu = jnp.mean(v, axis=-1, keepdims=True)
        var = jnp.mean(jnp.square(v - mu), axis=-1, keepdims=True)
        return (v - mu) * lax.rsqrt(var + eps) * g + b

    def fcnet(h, pre):
        h = jnp.maximum(mdot(h, W(pre + '_ff_w1')) + W(pre + '_ff_b1'), 0.0)
        h = jnp.maximum(mdot(h, W(pre + '_ff_w2')) + W(pre + '_ff_b2'), 0.0)
        h = jnp.maximum(mdot(h, W(pre + '_ff_w3')) + W(pre + '_ff_b3'), 0.0)
        return mdot(h, W(pre + '_ff_w4')) + W(pre + '_ff_b4')

    def softmax(e):
        e = e - jnp.max(e, axis=-1, keepdims=True)
        pe = jnp.exp(e)
        return pe * pl.reciprocal(jnp.sum(pe, axis=-1, keepdims=True),
                                  approx=True)

    x = x_ref[0]                                             # [B*R, F2]
    v2 = mdot(x, W('enc_w'))                                 # [B*R, E] (biases via indicator cols)

    # --- temporal (per-trajectory) attention, flattened over (batch, entity) --
    q = mdot(v2, W('temp_q_w')) + W('temp_q_b')              # 1/sqrt(A) pre-folded
    k = mdot(v2, W('temp_k_w')) + W('temp_k_b')
    score = softmax(mdot_nt(q, k) + bias_ref[0])             # [B*R, B*R]
    attn = mdot(score, v2) * mcol_ref[0]                     # [B*R, E]

    h1 = layernorm(attn + v2, W('traj_ln1_g'), W('traj_ln1_b'))
    h2 = layernorm(h1 + fcnet(h1, 'traj'), W('traj_ln2_g'), W('traj_ln2_b'))

    # --- per-entity mean over time via precomputed averaging matrix (f32) -----
    ent_out = jnp.dot(avg_sel_ref[...], h2,
                      preferred_element_type=jnp.float32)    # [B*n_ent, E]

    # --- agent (cross-entity) attention, block-diagonal over the batch --------
    q2 = mdot(ent_out, W('query_w')) + W('query_b')
    k2 = mdot(ent_out, W('key_w')) + W('key_b')
    sc2 = softmax(mdot_nt(q2, k2) + agent_bias_ref[...])
    at2 = mdot(sc2, ent_out)

    g1 = layernorm(at2 + ent_out, W('agent_ln1_g'), W('agent_ln1_b'))
    g2 = layernorm(g1 + fcnet(g1, 'agent'), W('agent_ln2_g'), W('agent_ln2_b'))

    out = jnp.dot(avg_agents_ref[...], g2,
                  preferred_element_type=jnp.float32)        # [B, E]
    w_out_ref[0] = jnp.abs(mdot(out, W('wproj_w')) + W('wproj_b'))   # [B, PHI]

    # --- n_proj over every trajectory row (enemy rows discarded by wrapper),
    #     final layer emitted lane-dense as [1, B*R] -----------------------------
    nh = jnp.maximum(mdot(h2, W('nproj_w1')) + W('nproj_b1'), 0.0)
    nh = jnp.maximum(mdot(nh, W('nproj_w2')) + W('nproj_b2'), 0.0)
    n_out_ref[0] = jnp.abs(mdot_nt(W('nproj_w3t'), nh) + W('nproj_b3'))  # [1, B*R]


# ----------------------------------------------------------------------------
# wrapper: layout-only JAX glue + single pallas_call
# ----------------------------------------------------------------------------
def _const_spec(arr):
    nd = arr.ndim
    return pl.BlockSpec(arr.shape, lambda b, _nd=nd: (0,) * _nd)


def task_head_forward(state, state_mask, p, *, n_agents, n_enemies, nf_al,
                      nf_en, E, A, PHI, batch_block=4,
                      mxu_dtype=jnp.bfloat16):
    bs, t, _ = state.shape
    n_ent = n_agents + n_enemies
    R = n_ent * t
    M = n_agents * t
    B = batch_block
    if bs % B != 0:
        # TODO(synk): pad the batch to a multiple of the block instead.
        raise ValueError(f"bs={bs} must be a multiple of batch_block={B}")
    nb = bs // B
    F2 = nf_al + nf_en + 2          # fused encoder input (+2 bias indicator cols)

    # ---- synthetic decomposer + entity-major row layout ----------------------
    ally = state[..., : n_agents * nf_al].reshape(bs, t, n_agents, nf_al)
    enemy = state[..., n_agents * nf_al:].reshape(bs, t, n_enemies, nf_en)
    ally = jnp.transpose(ally, (0, 2, 1, 3)).reshape(bs, n_agents * t, nf_al)
    enemy = jnp.transpose(enemy, (0, 2, 1, 3)).reshape(bs, n_enemies * t, nf_en)
    ones_al = jnp.ones((bs, n_agents * t, 1), jnp.float32)
    ones_en = jnp.ones((bs, n_enemies * t, 1), jnp.float32)
    x_ally = jnp.concatenate(
        [ally, jnp.zeros((bs, n_agents * t, nf_en), jnp.float32),
         ones_al, jnp.zeros_like(ones_al)], axis=-1)
    x_enemy = jnp.concatenate(
        [jnp.zeros((bs, n_enemies * t, nf_al), jnp.float32), enemy,
         jnp.zeros_like(ones_en), ones_en], axis=-1)
    x = jnp.concatenate([x_ally, x_enemy], axis=1).reshape(nb, B * R, F2)

    # ---- per-block column mask + additive softmax bias (mask folded in) -------
    m = state_mask[..., 0].astype(jnp.float32)               # [bs, t]
    m_ent = jnp.tile(m, (1, n_ent))                          # [bs, R] entity-major
    m_col = m_ent.reshape(nb, B * R, 1)

    same_ent = (np.arange(R)[:, None] // t ==
                np.arange(R)[None, :] // t).astype(np.float32)          # [R, R]
    keep = m_ent[:, :, None] * m_ent[:, None, :] * same_ent             # [bs, R, R]
    keep = jnp.einsum('nbqk,bc->nbqck', keep.reshape(nb, B, R, R),
                      np.eye(B, dtype=np.float32))
    attn_bias = (keep.reshape(nb, B * R, B * R) - 1.0) * 1e6            # 0 / -1e6

    # ---- grid-invariant constants (resident via constant index_map) ----------
    rows = np.arange(B * n_ent)
    avg_sel = (rows[:, None] == np.arange(B * R)[None, :] // t
               ).astype(np.float32) / t                                  # [B*n_ent, B*R]
    same_batch = rows[:, None] // n_ent == rows[None, :] // n_ent
    agent_bias = np.where(same_batch, 0.0, -1e6).astype(np.float32)      # [B*n_ent, B*n_ent]
    avg_agents = (np.arange(B)[:, None] == rows[None, :] // n_ent
                  ).astype(np.float32) / n_ent                           # [B, B*n_ent]

    slab, layout = _build_weight_slab(p, A)

    kernel = functools.partial(task_head_kernel, layout=layout,
                               mxu_dtype=mxu_dtype)

    w_out, n_out = pl.pallas_call(
        kernel,
        out_shape=(jax.ShapeDtypeStruct((nb, B, PHI), jnp.float32),
                   jax.ShapeDtypeStruct((nb, 1, B * R), jnp.float32)),
        grid=(nb,),
        in_specs=[pl.BlockSpec((1, B * R, F2), lambda b: (b, 0, 0)),
                  pl.BlockSpec((1, B * R, B * R), lambda b: (b, 0, 0)),
                  pl.BlockSpec((1, B * R, 1), lambda b: (b, 0, 0)),
                  _const_spec(slab), _const_spec(avg_sel),
                  _const_spec(agent_bias), _const_spec(avg_agents)],
        out_specs=(pl.BlockSpec((1, B, PHI), lambda b: (b, 0, 0)),
                   pl.BlockSpec((1, 1, B * R), lambda b: (b, 0, 0))),
        compiler_params=pltpu.CompilerParams(
            dimension_semantics=("parallel",)),
    )(x, attn_bias, m_col, slab, avg_sel, agent_bias, avg_agents)

    mixing_w = w_out.reshape(bs, PHI)
    n_all = n_out.reshape(bs, R)                     # (batch, entity*time)
    mixing_n = n_all[:, :M].reshape(bs, n_agents, t) # keep ally trajectories
    return mixing_w, mixing_n


# ----------------------------------------------------------------------------
# deterministic parameter init
# ----------------------------------------------------------------------------
def init_params(key, nf_al, nf_en, E, A, PHI):
    keys = iter(jax.random.split(key, 80))

    def lin(i, o, scale=0.1):
        w = jax.random.normal(next(keys), (i, o), jnp.float32) * scale
        b = jax.random.normal(next(keys), (1, o), jnp.float32) * scale
        return w, b

    p = {}
    p['ally_w'], p['ally_b'] = lin(nf_al, E)
    p['enemy_w'], p['enemy_b'] = lin(nf_en, E)
    p['query_w'], p['query_b'] = lin(E, A)
    p['key_w'], p['key_b'] = lin(E, A)
    p['temp_query_w'], p['temp_query_b'] = lin(E, A)
    p['temp_key_w'], p['temp_key_b'] = lin(E, A)
    for pre in ('traj', 'agent'):
        p[f'{pre}_ff_w1'], p[f'{pre}_ff_b1'] = lin(E, 2 * E)
        p[f'{pre}_ff_w2'], p[f'{pre}_ff_b2'] = lin(2 * E, 2 * E)
        p[f'{pre}_ff_w3'], p[f'{pre}_ff_b3'] = lin(2 * E, 2 * E)
        p[f'{pre}_ff_w4'], p[f'{pre}_ff_b4'] = lin(2 * E, E)
        p[f'{pre}_ln1_g'] = jnp.ones((1, E), jnp.float32)
        p[f'{pre}_ln1_b'] = jnp.zeros((1, E), jnp.float32)
        p[f'{pre}_ln2_g'] = jnp.ones((1, E), jnp.float32)
        p[f'{pre}_ln2_b'] = jnp.zeros((1, E), jnp.float32)
    p['wproj_w'], p['wproj_b'] = lin(E, PHI)
    p['nproj_w1'], p['nproj_b1'] = lin(E, E)
    p['nproj_w2'], p['nproj_b2'] = lin(E, E)
    p['nproj_w3'], p['nproj_b3'] = lin(E, 1)
    return p


# ----------------------------------------------------------------------------
# pure-JAX reference (mirrors the PyTorch forward) for sanity checking
# ----------------------------------------------------------------------------
def _ln_ref(x, g, b, eps=1e-5):
    mu = jnp.mean(x, -1, keepdims=True)
    var = jnp.mean((x - mu) ** 2, -1, keepdims=True)
    return (x - mu) / jnp.sqrt(var + eps) * g + b


def _fcnet3_ref(x, p, pre):
    h = jnp.maximum(x @ p[f'{pre}_ff_w1'] + p[f'{pre}_ff_b1'], 0.0)
    h = jnp.maximum(h @ p[f'{pre}_ff_w2'] + p[f'{pre}_ff_b2'], 0.0)
    h = jnp.maximum(h @ p[f'{pre}_ff_w3'] + p[f'{pre}_ff_b3'], 0.0)
    return h @ p[f'{pre}_ff_w4'] + p[f'{pre}_ff_b4']


def reference_forward(state, state_mask, p, *, n_agents, n_enemies,
                      nf_al, nf_en, E, A, PHI):
    bs, t, _ = state.shape
    n_ent = n_agents + n_enemies
    ally = state[..., : n_agents * nf_al].reshape(bs, t, n_agents, nf_al)
    enemy = state[..., n_agents * nf_al:].reshape(bs, t, n_enemies, nf_en)
    ally_e = ally @ p['ally_w'] + p['ally_b']
    enemy_e = enemy @ p['enemy_w'] + p['enemy_b']
    ee = jnp.concatenate([ally_e, enemy_e], axis=2)
    ev = jnp.transpose(ee, (0, 2, 1, 3)).reshape(bs * n_ent, t, E)
    mask = jnp.broadcast_to(state_mask[:, None], (bs, n_ent, t, 1)).reshape(bs * n_ent, t, 1)

    q = ev @ p['temp_query_w'] + p['temp_query_b']
    k = ev @ p['temp_key_w'] + p['temp_key_b']
    energy = jnp.einsum('bqa,bka->bqk', q, k) / (A ** 0.5)
    am = 1.0 - jnp.einsum('bqi,bki->bqk', mask, mask)
    energy = energy - am * 1e6
    score = jax.nn.softmax(energy, -1)
    attn = jnp.einsum('bqk,bke->bqe', score, ev) * mask
    h1 = _ln_ref(attn + ev, p['traj_ln1_g'], p['traj_ln1_b'])
    h2 = _ln_ref(h1 + _fcnet3_ref(h1, p, 'traj'), p['traj_ln2_g'], p['traj_ln2_b'])
    ln2 = h2.reshape(bs, n_ent, t, E)
    eout = ln2.mean(axis=2)

    q2 = eout @ p['query_w'] + p['query_b']
    k2 = eout @ p['key_w'] + p['key_b']
    en2 = jnp.einsum('bqa,bka->bqk', q2, k2) / (A ** 0.5)
    sc2 = jax.nn.softmax(en2, -1)
    at2 = jnp.einsum('bqk,bke->bqe', sc2, eout)
    g1 = _ln_ref(at2 + eout, p['agent_ln1_g'], p['agent_ln1_b'])
    g2 = _ln_ref(g1 + _fcnet3_ref(g1, p, 'agent'), p['agent_ln2_g'], p['agent_ln2_b'])
    out = g2.mean(axis=1)
    mixing_w = jnp.abs(out @ p['wproj_w'] + p['wproj_b'])

    x = ln2[:, :n_agents]
    h = jnp.maximum(x @ p['nproj_w1'] + p['nproj_b1'], 0.0)
    h = jnp.maximum(h @ p['nproj_w2'] + p['nproj_b2'], 0.0)
    mixing_n = jnp.abs((h @ p['nproj_w3'] + p['nproj_b3'])[..., 0])
    return mixing_w, mixing_n


# ----------------------------------------------------------------------------
if __name__ == "__main__":
    bs, t = 8, 8
    n_agents, n_enemies = 3, 2
    nf_al, nf_en = 10, 6
    E, A, PHI = 32, 16, 8
    B = 4        # batch elements per grid step -> grid=(2,): keeps >=2 steps so
                 # v7x's two TensorCores both get work; one block = 160 rows.
    state_dim = n_agents * nf_al + n_enemies * nf_en  # 42

    key = jax.random.PRNGKey(0)
    k_state, k_params = jax.random.split(key)
    state = jax.random.normal(k_state, (bs, t, state_dim), jnp.float32)
    state_mask = jnp.ones((bs, t, 1), jnp.float32)
    state_mask = state_mask.at[1, -2:, 0].set(0.0)   # mask trailing timesteps
    state_mask = state_mask.at[5, -3:, 0].set(0.0)

    params = init_params(k_params, nf_al, nf_en, E, A, PHI)
    dims = dict(n_agents=n_agents, n_enemies=n_enemies, nf_al=nf_al,
                nf_en=nf_en, E=E, A=A, PHI=PHI)

    fwd = jax.jit(functools.partial(task_head_forward, **dims, batch_block=B))
    mixing_w, mixing_n = fwd(state, state_mask, params)
    mixing_w = jax.block_until_ready(mixing_w)
    mixing_n = jax.block_until_ready(mixing_n)

    ref_w, ref_n = reference_forward(state, state_mask, params, **dims)

    assert mixing_w.shape == (bs, PHI), mixing_w.shape
    assert mixing_n.shape == (bs, n_agents, t), mixing_n.shape
    # bf16 MXU operands + approx softmax reciprocal are intentional perf trades
    # (per review); compare against the f32 reference at a 5e-2 band.
    np.testing.assert_allclose(np.asarray(mixing_w), np.asarray(ref_w),
                               rtol=5e-2, atol=5e-2)
    np.testing.assert_allclose(np.asarray(mixing_n), np.asarray(ref_n),
                               rtol=5e-2, atol=5e-2)

    print("KERNEL_OK")
</pallas_src>

<mosaic_0001>
module attributes {stable_mosaic.version = 11 : i64} {
  func.func @task_head_kernel(%arg0: i32, %arg1: memref<1x160x18xf32, #tpu.memory_space<vmem>>, %arg2: memref<1x160x160xf32, #tpu.memory_space<vmem>>, %arg3: memref<1x160x1xf32, #tpu.memory_space<vmem>>, %arg4: memref<896x64xf32, #tpu.memory_space<vmem>>, %arg5: memref<20x160xf32, #tpu.memory_space<vmem>>, %arg6: memref<20x20xf32, #tpu.memory_space<vmem>>, %arg7: memref<4x20xf32, #tpu.memory_space<vmem>>, %arg8: memref<1x4x8xf32, #tpu.memory_space<vmem>>, %arg9: memref<1x1x160xf32, #tpu.memory_space<vmem>>) attributes {dimension_semantics = [#tpu.dimension_semantics<parallel>], iteration_bounds = array<i64: 2>, scalar_prefetch = 0 : i64, scratch_operands = 0 : i64, tpu.core_type = #tpu.core_type<tc>, window_params = [{transform_indices = @transform_0, window_bounds = array<i64: 1, 160, 18>}, {transform_indices = @transform_1, window_bounds = array<i64: 1, 160, 160>}, {transform_indices = @transform_2, window_bounds = array<i64: 1, 160, 1>}, {pipeline_mode = #tpu.pipeline_mode<synchronous>, transform_indices = @transform_3, window_bounds = array<i64: 896, 64>}, {pipeline_mode = #tpu.pipeline_mode<synchronous>, transform_indices = @transform_4, window_bounds = array<i64: 20, 160>}, {pipeline_mode = #tpu.pipeline_mode<synchronous>, transform_indices = @transform_5, window_bounds = array<i64: 20, 20>}, {pipeline_mode = #tpu.pipeline_mode<synchronous>, transform_indices = @transform_6, window_bounds = array<i64: 4, 20>}, {transform_indices = @transform_7, window_bounds = array<i64: 1, 4, 8>}, {transform_indices = @transform_8, window_bounds = array<i64: 1, 1, 160>}]} {
    %c0 = arith.constant 0 : index
    %c0_0 = arith.constant 0 : index
    %c0_1 = arith.constant 0 : index
    %0 = vector.load %arg1[%c0, %c0_0, %c0_1] : memref<1x160x18xf32, #tpu.memory_space<vmem>>, vector<1x160x18xf32>
    %1 = vector.shape_cast %0 : vector<1x160x18xf32> to vector<160x18xf32>
    %c0_2 = arith.constant 0 : index
    %c0_3 = arith.constant 0 : index
    %2 = vector.load %arg4[%c0_2, %c0_3] : memref<896x64xf32, #tpu.memory_space<vmem>>, vector<18x32xf32>
    %3 = arith.truncf %1 : vector<160x18xf32> to vector<160x18xbf16>
    %4 = arith.truncf %2 : vector<18x32xf32> to vector<18x32xbf16>
    %cst = arith.constant dense<0.000000e+00> : vector<160x32xf32>
    %5 = tpu.matmul %3, %4, %cst {dimension_numbers = #tpu.dot_dimension_numbers<[1], [0], [0], [1], [0, 0, 1, 1], [], []>} : vector<160x18xbf16>, vector<18x32xbf16>, vector<160x32xf32> -> vector<160x32xf32>
    %c24 = arith.constant 24 : index
    %c0_4 = arith.constant 0 : index
    %6 = vector.load %arg4[%c24, %c0_4] : memref<896x64xf32, #tpu.memory_space<vmem>>, vector<32x16xf32>
    %7 = arith.truncf %5 : vector<160x32xf32> to vector<160x32xbf16>
    %8 = arith.truncf %6 : vector<32x16xf32> to vector<32x16xbf16>
    %cst_5 = arith.constant dense<0.000000e+00> : vector<160x16xf32>
    %9 = tpu.matmul %7, %8, %cst_5 {dimension_numbers = #tpu.dot_dimension_numbers<[1], [0], [0], [1], [0, 0, 1, 1], [], []>} : vector<160x32xbf16>, vector<32x16xbf16>, vector<160x16xf32> -> vector<160x16xf32>
    %c56 = arith.constant 56 : index
    %c0_6 = arith.constant 0 : index
    %10 = vector.load %arg4[%c56, %c0_6] : memref<896x64xf32, #tpu.memory_space<vmem>>, vector<1x16xf32>
    %11 = vector.broadcast %10 : vector<1x16xf32> to vector<160x16xf32>
    %12 = arith.addf %9, %11 : vector<160x16xf32>
    %c64 = arith.constant 64 : index
    %c0_7 = arith.constant 0 : index
    %13 = vector.load %arg4[%c64, %c0_7] : memref<896x64xf32, #tpu.memory_space<vmem>>, vector<32x16xf32>
    %14 = arith.truncf %5 : vector<160x32xf32> to vector<160x32xbf16>
    %15 = arith.truncf %13 : vector<32x16xf32> to vector<32x16xbf16>
    %cst_8 = arith.constant dense<0.000000e+00> : vector<160x16xf32>
    %16 = tpu.matmul %14, %15, %cst_8 {dimension_numbers = #tpu.dot_dimension_numbers<[1], [0], [0], [1], [0, 0, 1, 1], [], []>} : vector<160x32xbf16>, vector<32x16xbf16>, vector<160x16xf32> -> vector<160x16xf32>
    %c96 = arith.constant 96 : index
    %c0_9 = arith.constant 0 : index
    %17 = vector.load %arg4[%c96, %c0_9] : memref<896x64xf32, #tpu.memory_space<vmem>>, vector<1x16xf32>
    %18 = vector.broadcast %17 : vector<1x16xf32> to vector<160x16xf32>
    %19 = arith.addf %16, %18 : vector<160x16xf32>
    %20 = arith.truncf %12 : vector<160x16xf32> to vector<160x16xbf16>
    %21 = arith.truncf %19 : vector<160x16xf32> to vector<160x16xbf16>
    %cst_10 = arith.constant dense<0.000000e+00> : vector<160x160xf32>
    %22 = tpu.matmul %20, %21, %cst_10 {dimension_numbers = #tpu.dot_dimension_numbers<[1], [1], [0], [0], [0, 0, 1, 0], [], []>} : vector<160x16xbf16>, vector<160x16xbf16>, vector<160x160xf32> -> vector<160x160xf32>
    %c0_11 = arith.constant 0 : index
    %c0_12 = arith.constant 0 : index
    %c0_13 = arith.constant 0 : index
    %23 = vector.load %arg2[%c0_11, %c0_12, %c0_13] : memref<1x160x160xf32, #tpu.memory_space<vmem>>, vector<1x160x160xf32>
    %24 = vector.shape_cast %23 : vector<1x160x160xf32> to vector<160x160xf32>
    %25 = arith.addf %22, %24 : vector<160x160xf32>
    %cst_14 = arith.constant dense<0xFF800000> : vector<160xf32>
    %26 = vector.multi_reduction <maximumf>, %25, %cst_14 [1] : vector<160x160xf32> to vector<160xf32>
    %27 = vector.shape_cast %26 : vector<160xf32> to vector<160x1xf32>
    %28 = vector.broadcast %27 : vector<160x1xf32> to vector<160x160xf32>
    %29 = arith.subf %25, %28 : vector<160x160xf32>
    %30 = math.exp %29 : vector<160x160xf32>
    %cst_15 = arith.constant dense<0.000000e+00> : vector<160xf32>
    %31 = vector.multi_reduction <add>, %30, %cst_15 [1] : vector<160x160xf32> to vector<160xf32>
    %32 = vector.shape_cast %31 : vector<160xf32> to vector<160x1xf32>
    %33 = tpu.reciprocal %32 {approx = true} : vector<160x1xf32> -> vector<160x1xf32>
    %34 = vector.broadcast %33 : vector<160x1xf32> to vector<160x160xf32>
    %35 = arith.mulf %30, %34 : vector<160x160xf32>
    %36 = arith.truncf %35 : vector<160x160xf32> to vector<160x160xbf16>
    %37 = arith.truncf %5 : vector<160x32xf32> to vector<160x32xbf16>
    %cst_16 = arith.constant dense<0.000000e+00> : vector<160x32xf32>
    %38 = tpu.matmul %36, %37, %cst_16 {dimension_numbers = #tpu.dot_dimension_numbers<[1], [0], [0], [1], [0, 0, 1, 1], [], []>} : vector<160x160xbf16>, vector<160x32xbf16>, vector<160x32xf32> -> vector<160x32xf32>
    %c0_17 = arith.constant 0 : index
    %c0_18 = arith.constant 0 : index
    %c0_19 = arith.constant 0 : index
    %39 = vector.load %arg3[%c0_17, %c0_18, %c0_19] : memref<1x160x1xf32, #tpu.memory_space<vmem>>, vector<1x160x1xf32>
    %40 = vector.shape_cast %39 : vector<1x160x1xf32> to vector<160x1xf32>
    %41 = vector.broadcast %40 : vector<160x1xf32> to vector<160x32xf32>
    %42 = arith.mulf %38, %41 : vector<160x32xf32>
    %43 = arith.addf %42, %5 : vector<160x32xf32>
    %c184 = arith.constant 184 : index
    %c0_20 = arith.constant 0 : index
    %44 = vector.load %arg4[%c184, %c0_20] : memref<896x64xf32, #tpu.memory_space<vmem>>, vector<1x32xf32>
    %c192 = arith.constant 192 : index
    %c0_21 = arith.constant 0 : index
    %45 = vector.load %arg4[%c192, %c0_21] : memref<896x64xf32, #tpu.memory_space<vmem>>, vector<1x32xf32>
    %cst_22 = arith.constant dense<0.000000e+00> : vector<160xf32>
    %46 = vector.multi_reduction <add>, %43, %cst_22 [1] : vector<160x32xf32> to vector<160xf32>
    %47 = vector.shape_cast %46 : vector<160xf32> to vector<160x1xf32>
    %cst_23 = arith.constant 3.200000e+01 : f32
    %48 = vector.broadcast %cst_23 : f32 to vector<160x1xf32>
    %49 = arith.divf %47, %48 : vector<160x1xf32>
    %50 = vector.broadcast %49 : vector<160x1xf32> to vector<160x32xf32>
    %51 = arith.subf %43, %50 : vector<160x32xf32>
    %52 = arith.mulf %51, %51 : vector<160x32xf32>
    %cst_24 = arith.constant dense<0.000000e+00> : vector<160xf32>
    %53 = vector.multi_reduction <add>, %52, %cst_24 [1] : vector<160x32xf32> to vector<160xf32>
    %54 = vector.shape_cast %53 : vector<160xf32> to vector<160x1xf32>
    %cst_25 = arith.constant 3.200000e+01 : f32
    %55 = vector.broadcast %cst_25 : f32 to vector<160x1xf32>
    %56 = arith.divf %54, %55 : vector<160x1xf32>
    %57 = vector.broadcast %49 : vector<160x1xf32> to vector<160x32xf32>
    %58 = arith.subf %43, %57 : vector<160x32xf32>
    %cst_26 = arith.constant 9.99999974E-6 : f32
    %59 = vector.broadcast %cst_26 : f32 to vector<160x1xf32>
    %60 = arith.addf %56, %59 : vector<160x1xf32>
    %61 = math.rsqrt %60 : vector<160x1xf32>
    %62 = vector.broadcast %61 : vector<160x1xf32> to vector<160x32xf32>
    %63 = arith.mulf %58, %62 : vector<160x32xf32>
    %64 = vector.broadcast %44 : vector<1x32xf32> to vector<160x32xf32>
    %65 = arith.mulf %63, %64 : vector<160x32xf32>
    %66 = vector.broadcast %45 : vector<1x32xf32> to vector<160x32xf32>
    %67 = arith.addf %65, %66 : vector<160x32xf32>
    %c200 = arith.constant 200 : index
    %c0_27 = arith.constant 0 : index
    %68 = vector.load %arg4[%c200, %c0_27] : memref<896x64xf32, #tpu.memory_space<vmem>>, vector<32x64xf32>
    %69 = arith.truncf %67 : vector<160x32xf32> to vector<160x32xbf16>
    %70 = arith.truncf %68 : vector<32x64xf32> to vector<32x64xbf16>
    %cst_28 = arith.constant dense<0.000000e+00> : vector<160x64xf32>
    %71 = tpu.matmul %69, %70, %cst_28 {dimension_numbers = #tpu.dot_dimension_numbers<[1], [0], [0], [1], [0, 0, 1, 1], [], []>} : vector<160x32xbf16>, vector<32x64xbf16>, vector<160x64xf32> -> vector<160x64xf32>
    %c232 = arith.constant 232 : index
    %c0_29 = arith.constant 0 : index
    %72 = vector.load %arg4[%c232, %c0_29] : memref<896x64xf32, #tpu.memory_space<vmem>>, vector<1x64xf32>
    %73 = vector.broadcast %72 : vector<1x64xf32> to vector<160x64xf32>
    %74 = arith.addf %71, %73 : vector<160x64xf32>
    %cst_30 = arith.constant 0.000000e+00 : f32
    %75 = vector.broadcast %cst_30 : f32 to vector<160x64xf32>
    %76 = arith.maximumf %74, %75 : vector<160x64xf32>
    %c240 = arith.constant 240 : index
    %c0_31 = arith.constant 0 : index
    %77 = vector.load %arg4[%c240, %c0_31] : memref<896x64xf32, #tpu.memory_space<vmem>>, vector<64x64xf32>
    %78 = arith.truncf %76 : vector<160x64xf32> to vector<160x64xbf16>
    %79 = arith.truncf %77 : vector<64x64xf32> to vector<64x64xbf16>
    %cst_32 = arith.constant dense<0.000000e+00> : vector<160x64xf32>
    %80 = tpu.matmul %78, %79, %cst_32 {dimension_numbers = #tpu.dot_dimension_numbers<[1], [0], [0], [1], [0, 0, 1, 1], [], []>} : vector<160x64xbf16>, vector<64x64xbf16>, vector<160x64xf32> -> vector<160x64xf32>
    %c304 = arith.constant 304 : index
    %c0_33 = arith.constant 0 : index
    %81 = vector.load %arg4[%c304, %c0_33] : memref<896x64xf32, #tpu.memory_space<vmem>>, vector<1x64xf32>
    %82 = vector.broadcast %81 : vector<1x64xf32> to vector<160x64xf32>
    %83 = arith.addf %80, %82 : vector<160x64xf32>
    %cst_34 = arith.constant 0.000000e+00 : f32
    %84 = vector.broadcast %cst_34 : f32 to vector<160x64xf32>
    %85 = arith.maximumf %83, %84 : vector<160x64xf32>
    %c312 = arith.constant 312 : index
    %c0_35 = arith.constant 0 : index
    %86 = vector.load %arg4[%c312, %c0_35] : memref<896x64xf32, #tpu.memory_space<vmem>>, vector<64x64xf32>
    %87 = arith.truncf %85 : vector<160x64xf32> to vector<160x64xbf16>
    %88 = arith.truncf %86 : vector<64x64xf32> to vector<64x64xbf16>
    %cst_36 = arith.constant dense<0.000000e+00> : vector<160x64xf32>
    %89 = tpu.matmul %87, %88, %cst_36 {dimension_numbers = #tpu.dot_dimension_numbers<[1], [0], [0], [1], [0, 0, 1, 1], [], []>} : vector<160x64xbf16>, vector<64x64xbf16>, vector<160x64xf32> -> vector<160x64xf32>
    %c376 = arith.constant 376 : index
    %c0_37 = arith.constant 0 : index
    %90 = vector.load %arg4[%c376, %c0_37] : memref<896x64xf32, #tpu.memory_space<vmem>>, vector<1x64xf32>
    %91 = vector.broadcast %90 : vector<1x64xf32> to vector<160x64xf32>
    %92 = arith.addf %89, %91 : vector<160x64xf32>
    %cst_38 = arith.constant 0.000000e+00 : f32
    %93 = vector.broadcast %cst_38 : f32 to vector<160x64xf32>
    %94 = arith.maximumf %92, %93 : vector<160x64xf32>
    %c384 = arith.constant 384 : index
    %c0_39 = arith.constant 0 : index
    %95 = vector.load %arg4[%c384, %c0_39] : memref<896x64xf32, #tpu.memory_space<vmem>>, vector<64x32xf32>
    %96 = arith.truncf %94 : vector<160x64xf32> to vector<160x64xbf16>
    %97 = arith.truncf %95 : vector<64x32xf32> to vector<64x32xbf16>
    %cst_40 = arith.constant dense<0.000000e+00> : vector<160x32xf32>
    %98 = tpu.matmul %96, %97, %cst_40 {dimension_numbers = #tpu.dot_dimension_numbers<[1], [0], [0], [1], [0, 0, 1, 1], [], []>} : vector<160x64xbf16>, vector<64x32xbf16>, vector<160x32xf32> -> vector<160x32xf32>
    %c448 = arith.constant 448 : index
    %c0_41 = arith.constant 0 : index
    %99 = vector.load %arg4[%c448, %c0_41] : memref<896x64xf32, #tpu.memory_space<vmem>>, vector<1x32xf32>
    %100 = vector.broadcast %99 : vector<1x32xf32> to vector<160x32xf32>
    %101 = arith.addf %98, %100 : vector<160x32xf32>
    %102 = arith.addf %67, %101 : vector<160x32xf32>
    %c456 = arith.constant 456 : index
    %c0_42 = arith.constant 0 : index
    %103 = vector.load %arg4[%c456, %c0_42] : memref<896x64xf32, #tpu.memory_space<vmem>>, vector<1x32xf32>
    %c464 = arith.constant 464 : index
    %c0_43 = arith.constant 0 : index
    %104 = vector.load %arg4[%c464, %c0_43] : memref<896x64xf32, #tpu.memory_space<vmem>>, vector<1x32xf32>
    %cst_44 = arith.constant dense<0.000000e+00> : vector<160xf32>
    %105 = vector.multi_reduction <add>, %102, %cst_44 [1] : vector<160x32xf32> to vector<160xf32>
    %106 = vector.shape_cast %105 : vector<160xf32> to vector<160x1xf32>
    %cst_45 = arith.constant 3.200000e+01 : f32
    %107 = vector.broadcast %cst_45 : f32 to vector<160x1xf32>
    %108 = arith.divf %106, %107 : vector<160x1xf32>
    %109 = vector.broadcast %108 : vector<160x1xf32> to vector<160x32xf32>
    %110 = arith.subf %102, %109 : vector<160x32xf32>
    %111 = arith.mulf %110, %110 : vector<160x32xf32>
    %cst_46 = arith.constant dense<0.000000e+00> : vector<160xf32>
    %112 = vector.multi_reduction <add>, %111, %cst_46 [1] : vector<160x32xf32> to vector<160xf32>
    %113 = vector.shape_cast %112 : vector<160xf32> to vector<160x1xf32>
    %cst_47 = arith.constant 3.200000e+01 : f32
    %114 = vector.broadcast %cst_47 : f32 to vector<160x1xf32>
    %115 = arith.divf %113, %114 : vector<160x1xf32>
    %116 = vector.broadcast %108 : vector<160x1xf32> to vector<160x32xf32>
    %117 = arith.subf %102, %116 : vector<160x32xf32>
    %cst_48 = arith.constant 9.99999974E-6 : f32
    %118 = vector.broadcast %cst_48 : f32 to vector<160x1xf32>
    %119 = arith.addf %115, %118 : vector<160x1xf32>
    %120 = math.rsqrt %119 : vector<160x1xf32>
    %121 = vector.broadcast %120 : vector<160x1xf32> to vector<160x32xf32>
    %122 = arith.mulf %117, %121 : vector<160x32xf32>
    %123 = vector.broadcast %103 : vector<1x32xf32> to vector<160x32xf32>
    %124 = arith.mulf %122, %123 : vector<160x32xf32>
    %125 = vector.broadcast %104 : vector<1x32xf32> to vector<160x32xf32>
    %126 = arith.addf %124, %125 : vector<160x32xf32>
    %c0_49 = arith.constant 0 : index
    %c0_50 = arith.constant 0 : index
    %127 = vector.load %arg5[%c0_49, %c0_50] : memref<20x160xf32, #tpu.memory_space<vmem>>, vector<20x160xf32>
    %cst_51 = arith.constant dense<0.000000e+00> : vector<20x32xf32>
    %128 = tpu.matmul %127, %126, %cst_51 {dimension_numbers = #tpu.dot_dimension_numbers<[1], [0], [0], [1], [0, 0, 1, 1], [], []>} : vector<20x160xf32>, vector<160x32xf32>, vector<20x32xf32> -> vector<20x32xf32>
    %c104 = arith.constant 104 : index
    %c0_52 = arith.constant 0 : index
    %129 = vector.load %arg4[%c104, %c0_52] : memref<896x64xf32, #tpu.memory_space<vmem>>, vector<32x16xf32>
    %130 = arith.truncf %128 : vector<20x32xf32> to vector<20x32xbf16>
    %131 = arith.truncf %129 : vector<32x16xf32> to vector<32x16xbf16>
    %cst_53 = arith.constant dense<0.000000e+00> : vector<20x16xf32>
    %132 = tpu.matmul %130, %131, %cst_53 {dimension_numbers = #tpu.dot_dimension_numbers<[1], [0], [0], [1], [0, 0, 1, 1], [], []>} : vector<20x32xbf16>, vector<32x16xbf16>, vector<20x16xf32> -> vector<20x16xf32>
    %c136 = arith.constant 136 : index
    %c0_54 = arith.constant 0 : index
    %133 = vector.load %arg4[%c136, %c0_54] : memref<896x64xf32, #tpu.memory_space<vmem>>, vector<1x16xf32>
    %134 = vector.broadcast %133 : vector<1x16xf32> to vector<20x16xf32>
    %135 = arith.addf %132, %134 : vector<20x16xf32>
    %c144 = arith.constant 144 : index
    %c0_55 = arith.constant 0 : index
    %136 = vector.load %arg4[%c144, %c0_55] : memref<896x64xf32, #tpu.memory_space<vmem>>, vector<32x16xf32>
    %137 = arith.truncf %128 : vector<20x32xf32> to vector<20x32xbf16>
    %138 = arith.truncf %136 : vector<32x16xf32> to vector<32x16xbf16>
    %cst_56 = arith.constant dense<0.000000e+00> : vector<20x16xf32>
    %139 = tpu.matmul %137, %138, %cst_56 {dimension_numbers = #tpu.dot_dimension_numbers<[1], [0], [0], [1], [0, 0, 1, 1], [], []>} : vector<20x32xbf16>, vector<32x16xbf16>, vector<20x16xf32> -> vector<20x16xf32>
    %c176 = arith.constant 176 : index
    %c0_57 = arith.constant 0 : index
    %140 = vector.load %arg4[%c176, %c0_57] : memref<896x64xf32, #tpu.memory_space<vmem>>, vector<1x16xf32>
    %141 = vector.broadcast %140 : vector<1x16xf32> to vector<20x16xf32>
    %142 = arith.addf %139, %141 : vector<20x16xf32>
    %143 = arith.truncf %135 : vector<20x16xf32> to vector<20x16xbf16>
    %144 = arith.truncf %142 : vector<20x16xf32> to vector<20x16xbf16>
    %cst_58 = arith.constant dense<0.000000e+00> : vector<20x20xf32>
    %145 = tpu.matmul %143, %144, %cst_58 {dimension_numbers = #tpu.dot_dimension_numbers<[1], [1], [0], [0], [0, 0, 1, 0], [], []>} : vector<20x16xbf16>, vector<20x16xbf16>, vector<20x20xf32> -> vector<20x20xf32>
    %c0_59 = arith.constant 0 : index
    %c0_60 = arith.constant 0 : index
    %146 = vector.load %arg6[%c0_59, %c0_60] : memref<20x20xf32, #tpu.memory_space<vmem>>, vector<20x20xf32>
    %147 = arith.addf %145, %146 : vector<20x20xf32>
    %cst_61 = arith.constant dense<0xFF800000> : vector<20xf32>
    %148 = vector.multi_reduction <maximumf>, %147, %cst_61 [1] : vector<20x20xf32> to vector<20xf32>
    %149 = vector.shape_cast %148 : vector<20xf32> to vector<20x1xf32>
    %150 = vector.broadcast %149 : vector<20x1xf32> to vector<20x20xf32>
    %151 = arith.subf %147, %150 : vector<20x20xf32>
    %152 = math.exp %151 : vector<20x20xf32>
    %cst_62 = arith.constant dense<0.000000e+00> : vector<20xf32>
    %153 = vector.multi_reduction <add>, %152, %cst_62 [1] : vector<20x20xf32> to vector<20xf32>
    %154 = vector.shape_cast %153 : vector<20xf32> to vector<20x1xf32>
    %155 = tpu.reciprocal %154 {approx = true} : vector<20x1xf32> -> vector<20x1xf32>
    %156 = vector.broadcast %155 : vector<20x1xf32> to vector<20x20xf32>
    %157 = arith.mulf %152, %156 : vector<20x20xf32>
    %158 = arith.truncf %157 : vector<20x20xf32> to vector<20x20xbf16>
    %159 = arith.truncf %128 : vector<20x32xf32> to vector<20x32xbf16>
    %cst_63 = arith.constant dense<0.000000e+00> : vector<20x32xf32>
    %160 = tpu.matmul %158, %159, %cst_63 {dimension_numbers = #tpu.dot_dimension_numbers<[1], [0], [0], [1], [0, 0, 1, 1], [], []>} : vector<20x20xbf16>, vector<20x32xbf16>, vector<20x32xf32> -> vector<20x32xf32>
    %161 = arith.addf %160, %128 : vector<20x32xf32>
    %c472 = arith.constant 472 : index
    %c0_64 = arith.constant 0 : index
    %162 = vector.load %arg4[%c472, %c0_64] : memref<896x64xf32, #tpu.memory_space<vmem>>, vector<1x32xf32>
    %c480 = arith.constant 480 : index
    %c0_65 = arith.constant 0 : index
    %163 = vector.load %arg4[%c480, %c0_65] : memref<896x64xf32, #tpu.memory_space<vmem>>, vector<1x32xf32>
    %cst_66 = arith.constant dense<0.000000e+00> : vector<20xf32>
    %164 = vector.multi_reduction <add>, %161, %cst_66 [1] : vector<20x32xf32> to vector<20xf32>
    %165 = vector.shape_cast %164 : vector<20xf32> to vector<20x1xf32>
    %cst_67 = arith.constant 3.200000e+01 : f32
    %166 = vector.broadcast %cst_67 : f32 to vector<20x1xf32>
    %167 = arith.divf %165, %166 : vector<20x1xf32>
    %168 = vector.broadcast %167 : vector<20x1xf32> to vector<20x32xf32>
    %169 = arith.subf %161, %168 : vector<20x32xf32>
    %170 = arith.mulf %169, %169 : vector<20x32xf32>
    %cst_68 = arith.constant dense<0.000000e+00> : vector<20xf32>
    %171 = vector.multi_reduction <add>, %170, %cst_68 [1] : vector<20x32xf32> to vector<20xf32>
    %172 = vector.shape_cast %171 : vector<20xf32> to vector<20x1xf32>
    %cst_69 = arith.constant 3.200000e+01 : f32
    %173 = vector.broadcast %cst_69 : f32 to vector<20x1xf32>
    %174 = arith.divf %172, %173 : vector<20x1xf32>
    %175 = vector.broadcast %167 : vector<20x1xf32> to vector<20x32xf32>
    %176 = arith.subf %161, %175 : vector<20x32xf32>
    %cst_70 = arith.constant 9.99999974E-6 : f32
    %177 = vector.broadcast %cst_70 : f32 to vector<20x1xf32>
    %178 = arith.addf %174, %177 : vector<20x1xf32>
    %179 = math.rsqrt %178 : vector<20x1xf32>
    %180 = vector.broadcast %179 : vector<20x1xf32> to vector<20x32xf32>
    %181 = arith.mulf %176, %180 : vector<20x32xf32>
    %182 = vector.broadcast %162 : vector<1x32xf32> to vector<20x32xf32>
    %183 = arith.mulf %181, %182 : vector<20x32xf32>
    %184 = vector.broadcast %163 : vector<1x32xf32> to vector<20x32xf32>
    %185 = arith.addf %183, %184 : vector<20x32xf32>
    %c488 = arith.constant 488 : index
    %c0_71 = arith.constant 0 : index
    %186 = vector.load %arg4[%c488, %c0_71] : memref<896x64xf32, #tpu.memory_space<vmem>>, vector<32x64xf32>
    %187 = arith.truncf %185 : vector<20x32xf32> to vector<20x32xbf16>
    %188 = arith.truncf %186 : vector<32x64xf32> to vector<32x64xbf16>
    %cst_72 = arith.constant dense<0.000000e+00> : vector<20x64xf32>
    %189 = tpu.matmul %187, %188, %cst_72 {dimension_numbers = #tpu.dot_dimension_numbers<[1], [0], [0], [1], [0, 0, 1, 1], [], []>} : vector<20x32xbf16>, vector<32x64xbf16>, vector<20x64xf32> -> vector<20x64xf32>
    %c520 = arith.constant 520 : index
    %c0_73 = arith.constant 0 : index
    %190 = vector.load %arg4[%c520, %c0_73] : memref<896x64xf32, #tpu.memory_space<vmem>>, vector<1x64xf32>
    %191 = vector.broadcast %190 : vector<1x64xf32> to vector<20x64xf32>
    %192 = arith.addf %189, %191 : vector<20x64xf32>
    %cst_74 = arith.constant 0.000000e+00 : f32
    %193 = vector.broadcast %cst_74 : f32 to vector<20x64xf32>
    %194 = arith.maximumf %192, %193 : vector<20x64xf32>
    %c528 = arith.constant 528 : index
    %c0_75 = arith.constant 0 : index
    %195 = vector.load %arg4[%c528, %c0_75] : memref<896x64xf32, #tpu.memory_space<vmem>>, vector<64x64xf32>
    %196 = arith.truncf %194 : vector<20x64xf32> to vector<20x64xbf16>
    %197 = arith.truncf %195 : vector<64x64xf32> to vector<64x64xbf16>
    %cst_76 = arith.constant dense<0.000000e+00> : vector<20x64xf32>
    %198 = tpu.matmul %196, %197, %cst_76 {dimension_numbers = #tpu.dot_dimension_numbers<[1], [0], [0], [1], [0, 0, 1, 1], [], []>} : vector<20x64xbf16>, vector<64x64xbf16>, vector<20x64xf32> -> vector<20x64xf32>
    %c592 = arith.constant 592 : index
    %c0_77 = arith.constant 0 : index
    %199 = vector.load %arg4[%c592, %c0_77] : memref<896x64xf32, #tpu.memory_space<vmem>>, vector<1x64xf32>
    %200 = vector.broadcast %199 : vector<1x64xf32> to vector<20x64xf32>
    %201 = arith.addf %198, %200 : vector<20x64xf32>
    %cst_78 = arith.constant 0.000000e+00 : f32
    %202 = vector.broadcast %cst_78 : f32 to vector<20x64xf32>
    %203 = arith.maximumf %201, %202 : vector<20x64xf32>
    %c600 = arith.constant 600 : index
    %c0_79 = arith.constant 0 : index
    %204 = vector.load %arg4[%c600, %c0_79] : memref<896x64xf32, #tpu.memory_space<vmem>>, vector<64x64xf32>
    %205 = arith.truncf %203 : vector<20x64xf32> to vector<20x64xbf16>
    %206 = arith.truncf %204 : vector<64x64xf32> to vector<64x64xbf16>
    %cst_80 = arith.constant dense<0.000000e+00> : vector<20x64xf32>
    %207 = tpu.matmul %205, %206, %cst_80 {dimension_numbers = #tpu.dot_dimension_numbers<[1], [0], [0], [1], [0, 0, 1, 1], [], []>} : vector<20x64xbf16>, vector<64x64xbf16>, vector<20x64xf32> -> vector<20x64xf32>
    %c664 = arith.constant 664 : index
    %c0_81 = arith.constant 0 : index
    %208 = vector.load %arg4[%c664, %c0_81] : memref<896x64xf32, #tpu.memory_space<vmem>>, vector<1x64xf32>
    %209 = vector.broadcast %208 : vector<1x64xf32> to vector<20x64xf32>
    %210 = arith.addf %207, %209 : vector<20x64xf32>
    %cst_82 = arith.constant 0.000000e+00 : f32
    %211 = vector.broadcast %cst_82 : f32 to vector<20x64xf32>
    %212 = arith.maximumf %210, %211 : vector<20x64xf32>
    %c672 = arith.constant 672 : index
    %c0_83 = arith.constant 0 : index
    %213 = vector.load %arg4[%c672, %c0_83] : memref<896x64xf32, #tpu.memory_space<vmem>>, vector<64x32xf32>
    %214 = arith.truncf %212 : vector<20x64xf32> to vector<20x64xbf16>
    %215 = arith.truncf %213 : vector<64x32xf32> to vector<64x32xbf16>
    %cst_84 = arith.constant dense<0.000000e+00> : vector<20x32xf32>
    %216 = tpu.matmul %214, %215, %cst_84 {dimension_numbers = #tpu.dot_dimension_numbers<[1], [0], [0], [1], [0, 0, 1, 1], [], []>} : vector<20x64xbf16>, vector<64x32xbf16>, vector<20x32xf32> -> vector<20x32xf32>
    %c736 = arith.constant 736 : index
    %c0_85 = arith.constant 0 : index
    %217 = vector.load %arg4[%c736, %c0_85] : memref<896x64xf32, #tpu.memory_space<vmem>>, vector<1x32xf32>
    %218 = vector.broadcast %217 : vector<1x32xf32> to vector<20x32xf32>
    %219 = arith.addf %216, %218 : vector<20x32xf32>
    %220 = arith.addf %185, %219 : vector<20x32xf32>
    %c744 = arith.constant 744 : index
    %c0_86 = arith.constant 0 : index
    %221 = vector.load %arg4[%c744, %c0_86] : memref<896x64xf32, #tpu.memory_space<vmem>>, vector<1x32xf32>
    %c752 = arith.constant 752 : index
    %c0_87 = arith.constant 0 : index
    %222 = vector.load %arg4[%c752, %c0_87] : memref<896x64xf32, #tpu.memory_space<vmem>>, vector<1x32xf32>
    %cst_88 = arith.constant dense<0.000000e+00> : vector<20xf32>
    %223 = vector.multi_reduction <add>, %220, %cst_88 [1] : vector<20x32xf32> to vector<20xf32>
    %224 = vector.shape_cast %223 : vector<20xf32> to vector<20x1xf32>
    %cst_89 = arith.constant 3.200000e+01 : f32
    %225 = vector.broadcast %cst_89 : f32 to vector<20x1xf32>
    %226 = arith.divf %224, %225 : vector<20x1xf32>
    %227 = vector.broadcast %226 : vector<20x1xf32> to vector<20x32xf32>
    %228 = arith.subf %220, %227 : vector<20x32xf32>
    %229 = arith.mulf %228, %228 : vector<20x32xf32>
    %cst_90 = arith.constant dense<0.000000e+00> : vector<20xf32>
    %230 = vector.multi_reduction <add>, %229, %cst_90 [1] : vector<20x32xf32> to vector<20xf32>
    %231 = vector.shape_cast %230 : vector<20xf32> to vector<20x1xf32>
    %cst_91 = arith.constant 3.200000e+01 : f32
    %232 = vector.broadcast %cst_91 : f32 to vector<20x1xf32>
    %233 = arith.divf %231, %232 : vector<20x1xf32>
    %234 = vector.broadcast %226 : vector<20x1xf32> to vector<20x32xf32>
    %235 = arith.subf %220, %234 : vector<20x32xf32>
    %cst_92 = arith.constant 9.99999974E-6 : f32
    %236 = vector.broadcast %cst_92 : f32 to vector<20x1xf32>
    %237 = arith.addf %233, %236 : vector<20x1xf32>
    %238 = math.rsqrt %237 : vector<20x1xf32>
    %239 = vector.broadcast %238 : vector<20x1xf32> to vector<20x32xf32>
    %240 = arith.mulf %235, %239 : vector<20x32xf32>
    %241 = vector.broadcast %221 : vector<1x32xf32> to vector<20x32xf32>
    %242 = arith.mulf %240, %241 : vector<20x32xf32>
    %243 = vector.broadcast %222 : vector<1x32xf32> to vector<20x32xf32>
    %244 = arith.addf %242, %243 : vector<20x32xf32>
    %c0_93 = arith.constant 0 : index
    %c0_94 = arith.constant 0 : index
    %245 = vector.load %arg7[%c0_93, %c0_94] : memref<4x20xf32, #tpu.memory_space<vmem>>, vector<4x20xf32>
    %cst_95 = arith.constant dense<0.000000e+00> : vector<4x32xf32>
    %246 = tpu.matmul %245, %244, %cst_95 {dimension_numbers = #tpu.dot_dimension_numbers<[1], [0], [0], [1], [0, 0, 1, 1], [], []>} : vector<4x20xf32>, vector<20x32xf32>, vector<4x32xf32> -> vector<4x32xf32>
    %c760 = arith.constant 760 : index
    %c0_96 = arith.constant 0 : index
    %247 = vector.load %arg4[%c760, %c0_96] : memref<896x64xf32, #tpu.memory_space<vmem>>, vector<32x8xf32>
    %248 = arith.truncf %246 : vector<4x32xf32> to vector<4x32xbf16>
    %249 = arith.truncf %247 : vector<32x8xf32> to vector<32x8xbf16>
    %cst_97 = arith.constant dense<0.000000e+00> : vector<4x8xf32>
    %250 = tpu.matmul %248, %249, %cst_97 {dimension_numbers = #tpu.dot_dimension_numbers<[1], [0], [0], [1], [0, 0, 1, 1], [], []>} : vector<4x32xbf16>, vector<32x8xbf16>, vector<4x8xf32> -> vector<4x8xf32>
    %c792 = arith.constant 792 : index
    %c0_98 = arith.constant 0 : index
    %251 = vector.load %arg4[%c792, %c0_98] : memref<896x64xf32, #tpu.memory_space<vmem>>, vector<1x8xf32>
    %252 = vector.broadcast %251 : vector<1x8xf32> to vector<4x8xf32>
    %253 = arith.addf %250, %252 : vector<4x8xf32>
    %254 = math.absf %253 : vector<4x8xf32>
    %c0_99 = arith.constant 0 : index
    %c0_100 = arith.constant 0 : index
    %c0_101 = arith.constant 0 : index
    %255 = vector.load %arg8[%c0_99, %c0_100, %c0_101] : memref<1x4x8xf32, #tpu.memory_space<vmem>>, vector<1x4x8xf32>
    %256 = vector.shape_cast %255 : vector<1x4x8xf32> to vector<4x8xf32>
    %257 = vector.shape_cast %254 : vector<4x8xf32> to vector<1x4x8xf32>
    tpu.vector_store %arg8[%c0_99, %c0_100, %c0_101], %257 {strides = array<i32>} : memref<1x4x8xf32, #tpu.memory_space<vmem>>, vector<1x4x8xf32>,
    %c800 = arith.constant 800 : index
    %c0_102 = arith.constant 0 : index
    %258 = vector.load %arg4[%c800, %c0_102] : memref<896x64xf32, #tpu.memory_space<vmem>>, vector<32x32xf32>
    %259 = arith.truncf %126 : vector<160x32xf32> to vector<160x32xbf16>
    %260 = arith.truncf %258 : vector<32x32xf32> to vector<32x32xbf16>
    %cst_103 = arith.constant dense<0.000000e+00> : vector<160x32xf32>
    %261 = tpu.matmul %259, %260, %cst_103 {dimension_numbers = #tpu.dot_dimension_numbers<[1], [0], [0], [1], [0, 0, 1, 1], [], []>} : vector<160x32xbf16>, vector<32x32xbf16>, vector<160x32xf32> -> vector<160x32xf32>
    %c832 = arith.constant 832 : index
    %c0_104 = arith.constant 0 : index
    %262 = vector.load %arg4[%c832, %c0_104] : memref<896x64xf32, #tpu.memory_space<vmem>>, vector<1x32xf32>
    %263 = vector.broadcast %262 : vector<1x32xf32> to vector<160x32xf32>
    %264 = arith.addf %261, %263 : vector<160x32xf32>
    %cst_105 = arith.constant 0.000000e+00 : f32
    %265 = vector.broadcast %cst_105 : f32 to vector<160x32xf32>
    %266 = arith.maximumf %264, %265 : vector<160x32xf32>
    %c840 = arith.constant 840 : index
    %c0_106 = arith.constant 0 : index
    %267 = vector.load %arg4[%c840, %c0_106] : memref<896x64xf32, #tpu.memory_space<vmem>>, vector<32x32xf32>
    %268 = arith.truncf %266 : vector<160x32xf32> to vector<160x32xbf16>
    %269 = arith.truncf %267 : vector<32x32xf32> to vector<32x32xbf16>
    %cst_107 = arith.constant dense<0.000000e+00> : vector<160x32xf32>
    %270 = tpu.matmul %268, %269, %cst_107 {dimension_numbers = #tpu.dot_dimension_numbers<[1], [0], [0], [1], [0, 0, 1, 1], [], []>} : vector<160x32xbf16>, vector<32x32xbf16>, vector<160x32xf32> -> vector<160x32xf32>
    %c872 = arith.constant 872 : index
    %c0_108 = arith.constant 0 : index
    %271 = vector.load %arg4[%c872, %c0_108] : memref<896x64xf32, #tpu.memory_space<vmem>>, vector<1x32xf32>
    %272 = vector.broadcast %271 : vector<1x32xf32> to vector<160x32xf32>
    %273 = arith.addf %270, %272 : vector<160x32xf32>
    %cst_109 = arith.constant 0.000000e+00 : f32
    %274 = vector.broadcast %cst_109 : f32 to vector<160x32xf32>
    %275 = arith.maximumf %273, %274 : vector<160x32xf32>
    %c880 = arith.constant 880 : index
    %c0_110 = arith.constant 0 : index
    %276 = vector.load %arg4[%c880, %c0_110] : memref<896x64xf32, #tpu.memory_space<vmem>>, vector<1x32xf32>
    %277 = arith.truncf %276 : vector<1x32xf32> to vector<1x32xbf16>
    %278 = arith.truncf %275 : vector<160x32xf32> to vector<160x32xbf16>
    %cst_111 = arith.constant dense<0.000000e+00> : vector<1x160xf32>
    %279 = tpu.matmul %277, %278, %cst_111 {dimension_numbers = #tpu.dot_dimension_numbers<[1], [1], [0], [0], [0, 0, 1, 0], [], []>} : vector<1x32xbf16>, vector<160x32xbf16>, vector<1x160xf32> -> vector<1x160xf32>
    %c888 = arith.constant 888 : index
    %c0_112 = arith.constant 0 : index
    %280 = vector.load %arg4[%c888, %c0_112] : memref<896x64xf32, #tpu.memory_space<vmem>>, vector<1x1xf32>
    %281 = vector.broadcast %280 : vector<1x1xf32> to vector<1x160xf32>
    %282 = arith.addf %279, %281 : vector<1x160xf32>
    %283 = math.absf %282 : vector<1x160xf32>
    %c0_113 = arith.constant 0 : index
    %c0_114 = arith.constant 0 : index
    %c0_115 = arith.constant 0 : index
    %284 = vector.load %arg9[%c0_113, %c0_114, %c0_115] : memref<1x1x160xf32, #tpu.memory_space<vmem>>, vector<1x1x160xf32>
    %285 = vector.shape_cast %284 : vector<1x1x160xf32> to vector<1x160xf32>
    %286 = vector.shape_cast %283 : vector<1x160xf32> to vector<1x1x160xf32>
    tpu.vector_store %arg9[%c0_113, %c0_114, %c0_115], %286 {strides = array<i32>} : memref<1x1x160xf32, #tpu.memory_space<vmem>>, vector<1x1x160xf32>,
    return
  }
  func.func @transform_0(%arg0: i32) -> (i32, i32, i32) {
    %c0_i32 = arith.constant 0 : i32
    %c0_i32_0 = arith.constant 0 : i32
    %c0_i32_1 = arith.constant 0 : i32
    return %arg0, %c0_i32, %c0_i32_0 : i32, i32, i32
  }
  func.func @transform_1(%arg0: i32) -> (i32, i32, i32) {
    %c0_i32 = arith.constant 0 : i32
    %c0_i32_0 = arith.constant 0 : i32
    %c0_i32_1 = arith.constant 0 : i32
    return %arg0, %c0_i32, %c0_i32_0 : i32, i32, i32
  }
  func.func @transform_2(%arg0: i32) -> (i32, i32, i32) {
    %c0_i32 = arith.constant 0 : i32
    %c0_i32_0 = arith.constant 0 : i32
    %c0_i32_1 = arith.constant 0 : i32
    return %arg0, %c0_i32, %c0_i32_0 : i32, i32, i32
  }
  func.func @transform_3(%arg0: i32) -> (i32, i32) {
    %c0_i32 = arith.constant 0 : i32
    %c0_i32_0 = arith.constant 0 : i32
    %c0_i32_1 = arith.constant 0 : i32
    return %c0_i32, %c0_i32_0 : i32, i32
  }
  func.func @transform_4(%arg0: i32) -> (i32, i32) {
    %c0_i32 = arith.constant 0 : i32
    %c0_i32_0 = arith.constant 0 : i32
    %c0_i32_1 = arith.constant 0 : i32
    return %c0_i32, %c0_i32_0 : i32, i32
  }
  func.func @transform_5(%arg0: i32) -> (i32, i32) {
    %c0_i32 = arith.constant 0 : i32
    %c0_i32_0 = arith.constant 0 : i32
    %c0_i32_1 = arith.constant 0 : i32
    return %c0_i32, %c0_i32_0 : i32, i32
  }
  func.func @transform_6(%arg0: i32) -> (i32, i32) {
    %c0_i32 = arith.constant 0 : i32
    %c0_i32_0 = arith.constant 0 : i32
    %c0_i32_1 = arith.constant 0 : i32
    return %c0_i32, %c0_i32_0 : i32, i32
  }
  func.func @transform_7(%arg0: i32) -> (i32, i32, i32) {
    %c0_i32 = arith.constant 0 : i32
    %c0_i32_0 = arith.constant 0 : i32
    %c0_i32_1 = arith.constant 0 : i32
    return %arg0, %c0_i32, %c0_i32_0 : i32, i32, i32
  }
  func.func @transform_8(%arg0: i32) -> (i32, i32, i32) {
    %c0_i32 = arith.constant 0 : i32
    %c0_i32_0 = arith.constant 0 : i32
    %c0_i32_1 = arith.constant 0 : i32
    return %arg0, %c0_i32, %c0_i32_0 : i32, i32, i32
  }
}

</mosaic_0001>

<llo_original>
// kernel: task_head_forward.1
$region0: #{task_head_forward.1}
  #allocation0 [shape = 'u32[]', space=smem, size = 0x4, offset = 0x4, fixed_abs, tag = 'smem constant byte address 0x4 - core index']
  #allocation1 [shape = 'u32[144,128]{1,0:T(1,128)}', space=vmem, size = 0x12000, scoped, tag = 'internal scratch']
  %s0 = inlined_call_operand.vmem [shape: f32[2,160,18], index: 0, kind: input, shape index: {}]
  %s1 = inlined_call_operand.vmem [shape: f32[2,160,160], index: 1, kind: input, shape index: {}]
  %s2 = inlined_call_operand.vmem [shape: f32[2,160,1], index: 2, kind: input, shape index: {}]
  %s3 = inlined_call_operand.vmem [shape: f32[896,64], index: 3, kind: input, shape index: {}]
  %s4 = inlined_call_operand.vmem [shape: f32[20,160], index: 4, kind: input, shape index: {}]
  %s5 = inlined_call_operand.vmem [shape: f32[20,20], index: 5, kind: input, shape index: {}]
  %s6 = inlined_call_operand.vmem [shape: f32[4,20], index: 6, kind: input, shape index: {}]
  %s7 = inlined_call_operand.hbm [shape: f32[2,4,8], index: 7, kind: output, shape index: {0}]
  %s8 = inlined_call_operand.vmem [shape: f32[2,1,160], index: 8, kind: output, shape index: {1}]
  %9 = xla_tuple %s7, %s8
  %s10 = sld [smem:[#allocation0]]
  $region69: #{task_head_forward.1} parent=0
    _
  %s12 = ssub.s32 1, %s10
  %s13 = scalar_select 0, %s12, %s10
  $region1: #{task_head_forward.1} parent=0
    #allocation2 [shape = 'u8[4096]{0}', space=vmem, size = 0x1000, scoped, tag = 'output window, operand 0']
    #allocation3 [shape = 's32[2]{0}', space=sflag, size = 0x8, scoped, tag = 'scoped memory for task_head_forward.1']
    %14 = vsyncpa [#allocation3], 0
    %s15 = scalar_lea.sflag [#allocation3], 1
    %16 = vsyncpa %s15, 0
    loop: start=0, step=1, limit=4
    $region2: #{task_head_forward.1} parent=1 // loop_pre_header
      _
    $region3: #{task_head_forward.1} parent=1 // loop_header
      %s18 = sphi 0, %s22
      %p19 = scmp.ge.s32.totalorder %s18, 4
      %s28 = sphi 0, %s30
      %s31 = sphi 0, %s28
      %s32 = sphi 0, %s31
      %s48 = sphi 0, %s32
      %s54 = sphi 0, %s56
      %s57 = sphi 0, %s54
      %s58 = sphi 0, %s57
      %s74 = sphi 0, %s58
      %s80 = sphi 0, %s82
      %s83 = sphi 0, %s80
      %s84 = sphi 0, %s83
      %s100 = sphi 0, %s84
      %s104 = sphi 0, %s104
      %s106 = sphi 0, %s104
      %s107 = sphi 0, %s106
      %s121 = sphi 0, %s107
      %s125 = sphi 0, %s125
      %s127 = sphi 0, %s125
      %s128 = sphi 0, %s127
      %s142 = sphi 0, %s128
      %s146 = sphi 0, %s146
      %s148 = sphi 0, %s146
      %s149 = sphi 0, %s148
      %s163 = sphi 0, %s149
      %s167 = sphi 0, %s167
      %s169 = sphi 0, %s167
      %s170 = sphi 0, %s169
      %s184 = sphi 0, %s170
      %s190 = sphi 0, %s192
      %s193 = sphi 0, %s190
      %s194 = sphi 0, %s193
      %s210 = sphi 0, %s194
      %s216 = sphi 0, %s218
      %s219 = sphi 0, %s216
      %s220 = sphi 0, %s219
      %s236 = sphi 0, %s220
    $region4: #{task_head_forward.1} parent=1 // loop_header_branch
      %21 = sbr.rel (%p19) target = $region8
    $region5: #{task_head_forward.1} parent=1 // loop_body
      %s23 = ssub.s32 %s18, 1
      %s24 = ssub.s32 %s18, 2
      %s25 = sadd.s32 %s18, 1
      %s26 = ssub.s32 %s18, %s25
      %p27 = scmp.eq.s32.totalorder %s26, 0
      %s29 = sadd.s32 %s28, 1
      %s30 = scalar_select %p27, %s28, %s29
      %p33 = pneg %p27
      %p34 = scmp.eq.s32.totalorder %s18, 1
      %p35 = por %p33, %p34
      %p36 = scmp.ne.s32.totalorder %s28, %s31
      %p37 = scmp.eq.s32.totalorder %s18, 0
      %p38 = por %p36, %p37
      %p39 = scmp.ne.s32.totalorder %s28, %s31
      %p40 = scmp.eq.s32.totalorder %s23, 1
      %p41 = por %p39, %p40
      %p42 = scmp.ne.s32.totalorder %s31, %s32
      %p43 = scmp.eq.s32.totalorder %s23, 0
      %p44 = por %p42, %p43
      %p45 = scmp.ne.s32.totalorder %s31, %s32
      %p46 = scmp.eq.s32.totalorder %s24, 1
      %p47 = por %p45, %p46
      %p49 = scmp.ne.s32.totalorder %s32, %s48
      %p50 = scmp.eq.s32.totalorder %s24, 0
      %p51 = por %p49, %p50
      %s52 = ssub.s32 %s18, %s25
      %p53 = scmp.eq.s32.totalorder %s52, 0
      %s55 = sadd.s32 %s54, 1
      %s56 = scalar_select %p53, %s54, %s55
      %p59 = pneg %p53
      %p60 = scmp.eq.s32.totalorder %s18, 1
      %p61 = por %p59, %p60
      %p62 = scmp.ne.s32.totalorder %s54, %s57
      %p63 = scmp.eq.s32.totalorder %s18, 0
      %p64 = por %p62, %p63
      %p65 = scmp.ne.s32.totalorder %s54, %s57
      %p66 = scmp.eq.s32.totalorder %s23, 1
      %p67 = por %p65, %p66
      %p68 = scmp.ne.s32.totalorder %s57, %s58
      %p69 = scmp.eq.s32.totalorder %s23, 0
      %p70 = por %p68, %p69
      %p71 = scmp.ne.s32.totalorder %s57, %s58
      %p72 = scmp.eq.s32.totalorder %s24, 1
      %p73 = por %p71, %p72
      %p75 = scmp.ne.s32.totalorder %s58, %s74
      %p76 = scmp.eq.s32.totalorder %s24, 0
      %p77 = por %p75, %p76
      %s78 = ssub.s32 %s18, %s25
      %p79 = scmp.eq.s32.totalorder %s78, 0
      %s81 = sadd.s32 %s80, 1
      %s82 = scalar_select %p79, %s80, %s81
      %p85 = pneg %p79
      %p86 = scmp.eq.s32.totalorder %s18, 1
      %p87 = por %p85, %p86
      %p88 = scmp.ne.s32.totalorder %s80, %s83
      %p89 = scmp.eq.s32.totalorder %s18, 0
      %p90 = por %p88, %p89
      %p91 = scmp.ne.s32.totalorder %s80, %s83
      %p92 = scmp.eq.s32.totalorder %s23, 1
      %p93 = por %p91, %p92
      %p94 = scmp.ne.s32.totalorder %s83, %s84
      %p95 = scmp.eq.s32.totalorder %s23, 0
      %p96 = por %p94, %p95
      %p97 = scmp.ne.s32.totalorder %s83, %s84
      %p98 = scmp.eq.s32.totalorder %s24, 1
      %p99 = por %p97, %p98
      %p101 = scmp.ne.s32.totalorder %s84, %s100
      %p102 = scmp.eq.s32.totalorder %s24, 0
      %p103 = por %p101, %p102
      %s105 = sadd.s32 %s104, 1
      %p108 = scmp.eq.s32.totalorder %s18, 1
      %p109 = scmp.ne.s32.totalorder %s104, %s106
      %p110 = scmp.eq.s32.totalorder %s18, 0
      %p111 = por %p109, %p110
      %p112 = scmp.ne.s32.totalorder %s104, %s106
      %p113 = scmp.eq.s32.totalorder %s23, 1
      %p114 = por %p112, %p113
      %p115 = scmp.ne.s32.totalorder %s106, %s107
      %p116 = scmp.eq.s32.totalorder %s23, 0
      %p117 = por %p115, %p116
      %p118 = scmp.ne.s32.totalorder %s106, %s107
      %p119 = scmp.eq.s32.totalorder %s24, 1
      %p120 = por %p118, %p119
      %p122 = scmp.ne.s32.totalorder %s107, %s121
      %p123 = scmp.eq.s32.totalorder %s24, 0
      %p124 = por %p122, %p123
      %s126 = sadd.s32 %s125, 1
      %p129 = scmp.eq.s32.totalorder %s18, 1
      %p130 = scmp.ne.s32.totalorder %s125, %s127
      %p131 = scmp.eq.s32.totalorder %s18, 0
      %p132 = por %p130, %p131
      %p133 = scmp.ne.s32.totalorder %s125, %s127
      %p134 = scmp.eq.s32.totalorder %s23, 1
      %p135 = por %p133, %p134
      %p136 = scmp.ne.s32.totalorder %s127, %s128
      %p137 = scmp.eq.s32.totalorder %s23, 0
      %p138 = por %p136, %p137
      %p139 = scmp.ne.s32.totalorder %s127, %s128
      %p140 = scmp.eq.s32.totalorder %s24, 1
      %p141 = por %p139, %p140
      %p143 = scmp.ne.s32.totalorder %s128, %s142
      %p144 = scmp.eq.s32.totalorder %s24, 0
      %p145 = por %p143, %p144
      %s147 = sadd.s32 %s146, 1
      %p150 = scmp.eq.s32.totalorder %s18, 1
      %p151 = scmp.ne.s32.totalorder %s146, %s148
      %p152 = scmp.eq.s32.totalorder %s18, 0
      %p153 = por %p151, %p152
      %p154 = scmp.ne.s32.totalorder %s146, %s148
      %p155 = scmp.eq.s32.totalorder %s23, 1
      %p156 = por %p154, %p155
      %p157 = scmp.ne.s32.totalorder %s148, %s149
      %p158 = scmp.eq.s32.totalorder %s23, 0
      %p159 = por %p157, %p158
      %p160 = scmp.ne.s32.totalorder %s148, %s149
      %p161 = scmp.eq.s32.totalorder %s24, 1
      %p162 = por %p160, %p161
      %p164 = scmp.ne.s32.totalorder %s149, %s163
      %p165 = scmp.eq.s32.totalorder %s24, 0
      %p166 = por %p164, %p165
      %s168 = sadd.s32 %s167, 1
      %p171 = scmp.eq.s32.totalorder %s18, 1
      %p172 = scmp.ne.s32.totalorder %s167, %s169
      %p173 = scmp.eq.s32.totalorder %s18, 0
      %p174 = por %p172, %p173
      %p175 = scmp.ne.s32.totalorder %s167, %s169
      %p176 = scmp.eq.s32.totalorder %s23, 1
      %p177 = por %p175, %p176
      %p178 = scmp.ne.s32.totalorder %s169, %s170
      %p179 = scmp.eq.s32.totalorder %s23, 0
      %p180 = por %p178, %p179
      %p181 = scmp.ne.s32.totalorder %s169, %s170
      %p182 = scmp.eq.s32.totalorder %s24, 1
      %p183 = por %p181, %p182
      %p185 = scmp.ne.s32.totalorder %s170, %s184
      %p186 = scmp.eq.s32.totalorder %s24, 0
      %p187 = por %p185, %p186
      %s188 = ssub.s32 %s18, %s25
      %p189 = scmp.eq.s32.totalorder %s188, 0
      %s191 = sadd.s32 %s190, 1
      %s192 = scalar_select %p189, %s190, %s191
      %p195 = pneg %p189
      %p196 = scmp.eq.s32.totalorder %s18, 1
      %p197 = por %p195, %p196
      %p198 = scmp.ne.s32.totalorder %s190, %s193
      %p199 = scmp.eq.s32.totalorder %s18, 0
      %p200 = por %p198, %p199
      %p201 = scmp.ne.s32.totalorder %s190, %s193
      %p202 = scmp.eq.s32.totalorder %s23, 1
      %p203 = por %p201, %p202
      %p204 = scmp.ne.s32.totalorder %s193, %s194
      %p205 = scmp.eq.s32.totalorder %s23, 0
      %p206 = por %p204, %p205
      %p207 = scmp.ne.s32.totalorder %s193, %s194
      %p208 = scmp.eq.s32.totalorder %s24, 1
      %p209 = por %p207, %p208
      %p211 = scmp.ne.s32.totalorder %s194, %s210
      %p212 = scmp.eq.s32.totalorder %s24, 0
      %p213 = por %p211, %p212
      %s214 = ssub.s32 %s18, %s25
      %p215 = scmp.eq.s32.totalorder %s214, 0
      %s217 = sadd.s32 %s216, 1
      %s218 = scalar_select %p215, %s216, %s217
      %p221 = pneg %p215
      %p222 = scmp.eq.s32.totalorder %s18, 1
      %p223 = por %p221, %p222
      %p224 = scmp.ne.s32.totalorder %s216, %s219
      %p225 = scmp.eq.s32.totalorder %s18, 0
      %p226 = por %p224, %p225
      %p227 = scmp.ne.s32.totalorder %s216, %s219
      %p228 = scmp.eq.s32.totalorder %s23, 1
      %p229 = por %p227, %p228
      %p230 = scmp.ne.s32.totalorder %s219, %s220
      %p231 = scmp.eq.s32.totalorder %s23, 0
      %p232 = por %p230, %p231
      %p233 = scmp.ne.s32.totalorder %s219, %s220
      %p234 = scmp.eq.s32.totalorder %s24, 1
      %p235 = por %p233, %p234
      %p237 = scmp.ne.s32.totalorder %s220, %s236
      %p238 = scmp.eq.s32.totalorder %s24, 0
      %p239 = por %p237, %p238
      %p240 = scmp.le.s32.totalorder 1, %s18
      %p241 = scmp.lt.s32.totalorder %s18, 3
      %p242 = pnand %p240, %p241
      %p243 = pneg %p242
      // Predicated region
      $region9: #{task_head_forward.1} parent=5 // pred_check
        _
      $region10: #{task_head_forward.1} parent=5 // pred_check_branch
        %245 = sbr.rel (%p242) target = $region12
      $region11: #{task_head_forward.1} parent=5 // pred_region
        %s246 = ssub.s32 %s18, 1
        // Predicated region
        $region13: #{task_head_forward.1} parent=11 // pred_check
          %p247 = pneg %p117
        $region14: #{task_head_forward.1} parent=11 // pred_check_branch
          %249 = sbr.rel (%p247) target = $region16
        $region15: #{task_head_forward.1} parent=11 // pred_region
          _
        $region16: #{task_head_forward.1} parent=11 // pred_fallthru
          _
        // Predicated region
        $region17: #{task_head_forward.1} parent=11 // pred_check
          %p250 = pneg %p138
        $region18: #{task_head_forward.1} parent=11 // pred_check_branch
          %252 = sbr.rel (%p250) target = $region20
        $region19: #{task_head_forward.1} parent=11 // pred_region
          _
        $region20: #{task_head_forward.1} parent=11 // pred_fallthru
          _
        // Predicated region
        $region21: #{task_head_forward.1} parent=11 // pred_check
          %p253 = pneg %p159
        $region22: #{task_head_forward.1} parent=11 // pred_check_branch
          %255 = sbr.rel (%p253) target = $region24
        $region23: #{task_head_forward.1} parent=11 // pred_region
          _
        $region24: #{task_head_forward.1} parent=11 // pred_fallthru
          _
        // Predicated region
        $region25: #{task_head_forward.1} parent=11 // pred_check
          %p256 = pneg %p180
        $region26: #{task_head_forward.1} parent=11 // pred_check_branch
          %258 = sbr.rel (%p256) target = $region28
        $region27: #{task_head_forward.1} parent=11 // pred_region
          _
        $region28: #{task_head_forward.1} parent=11 // pred_fallthru
          _
      $region12: #{task_head_forward.1} parent=5 // pred_fallthru
        _
      %p259 = scmp.lt.s32.totalorder %s18, 2
      // Predicated region
      $region29: #{task_head_forward.1} parent=5 // pred_check
        %p260 = pneg %p259
      $region30: #{task_head_forward.1} parent=5 // pred_check_branch
        %262 = sbr.rel (%p260) target = $region32
      $region31: #{task_head_forward.1} parent=5 // pred_region
        // Predicated region
        $region33: #{task_head_forward.1} parent=31 // pred_check
          %p263 = pneg %p38
        $region34: #{task_head_forward.1} parent=31 // pred_check_branch
          %265 = sbr.rel (%p263) target = $region36
        $region35: #{task_head_forward.1} parent=31 // pred_region
          %p266 = scmp.lt.s32.totalorder %s18, 1
          %s267 = scalar_select %p266, %s18, 1
          %s268 = smul.addr %s267, 20
          %s269 = smul.addr %s268, 8
          %s270 = scalar_lea.vmem %s0, %s269
        $region36: #{task_head_forward.1} parent=31 // pred_fallthru
          _
        // Predicated region
        $region37: #{task_head_forward.1} parent=31 // pred_check
          %p271 = pneg %p64
        $region38: #{task_head_forward.1} parent=31 // pred_check_branch
          %273 = sbr.rel (%p271) target = $region40
        $region39: #{task_head_forward.1} parent=31 // pred_region
          %p274 = scmp.lt.s32.totalorder %s18, 1
          %s275 = scalar_select %p274, %s18, 1
          %s276 = smul.addr %s275, 40
          %s277 = smul.addr %s276, 8
          %s278 = scalar_lea.vmem %s1, %s277
        $region40: #{task_head_forward.1} parent=31 // pred_fallthru
          _
        // Predicated region
        $region41: #{task_head_forward.1} parent=31 // pred_check
          %p279 = pneg %p90
        $region42: #{task_head_forward.1} parent=31 // pred_check_branch
          %281 = sbr.rel (%p279) target = $region44
        $region43: #{task_head_forward.1} parent=31 // pred_region
          %p282 = scmp.lt.s32.totalorder %s18, 1
          %s283 = scalar_select %p282, %s18, 1
          %s284 = smul.addr %s283, 20
          %s285 = smul.addr %s284, 8
          %s286 = scalar_lea.vmem %s2, %s285
        $region44: #{task_head_forward.1} parent=31 // pred_fallthru
          _
      $region32: #{task_head_forward.1} parent=5 // pred_fallthru
        _
      %p287 = scmp.le.s32.totalorder 1, %s18
      %p288 = scmp.lt.s32.totalorder %s18, 3
      %p289 = pnand %p287, %p288
      %p290 = pneg %p289
      // Predicated region
      $region45: #{task_head_forward.1} parent=5 // pred_check
        _
      $region46: #{task_head_forward.1} parent=5 // pred_check_branch
        %292 = sbr.rel (%p289) target = $region48
      $region47: #{task_head_forward.1} parent=5 // pred_region
        %s293 = ssub.s32 %s18, 1
        %p294 = scmp.lt.s32.totalorder %s23, 1
        %s295 = scalar_select %p294, %s23, 1
        %s296 = smul.addr %s295, 20
        %s297 = smul.addr %s296, 8
        %s298 = scalar_lea.vmem %s0, %s297
        %p299 = pneg %p44
        %p300 = pneg %p41
        %p301 = scmp.lt.s32.totalorder %s23, 1
        %s302 = scalar_select %p301, %s23, 1
        %s303 = smul.addr %s302, 40
        %s304 = smul.addr %s303, 8
        %s305 = scalar_lea.vmem %s1, %s304
        %p306 = pneg %p70
        %p307 = pneg %p67
        %p308 = scmp.lt.s32.totalorder %s23, 1
        %s309 = scalar_select %p308, %s23, 1
        %s310 = smul.addr %s309, 20
        %s311 = smul.addr %s310, 8
        %s312 = scalar_lea.vmem %s2, %s311
        %p313 = pneg %p96
        %p314 = pneg %p93
        %p315 = pneg %p117
        %p316 = pneg %p114
        %p317 = pneg %p138
        %p318 = pneg %p135
        %p319 = pneg %p159
        %p320 = pneg %p156
        %p321 = pneg %p180
        %p322 = pneg %p177
        %p323 = pneg %p206
        %p324 = pneg %p203
        %s325 = sand.u32 %s193, 1
        %s326 = scalar_lea.sflag [#allocation3], %s325
        %s327 = sand.u32 %s193, 1
        %s328 = smul.addr %s327, 4
        %s329 = scalar_lea.vmem [#allocation2], %s328
        %p330 = pneg %p232
        %p331 = pneg %p229
        %p332 = scmp.lt.s32.totalorder %s23, 1
        %s333 = scalar_select %p332, %s23, 1
        %s334 = smul.addr %s333, 2
        %s335 = scalar_lea.vmem %s8, %s334
        %p336 = scmp.lt.s32.totalorder %s23, 1
        %s337 = scalar_select %p336, %s23, 1
        %s338 = smul.addr %s337, 20
        %s339 = smul.addr %s338, 8
        %s340 = scalar_lea.vmem %s0, %s339
        %p341 = scmp.lt.s32.totalorder %s23, 1
        %s342 = scalar_select %p341, %s23, 1
        %s343 = smul.addr %s342, 40
        %s344 = smul.addr %s343, 8
        %s345 = scalar_lea.vmem %s1, %s344
        %p346 = scmp.lt.s32.totalorder %s23, 1
        %s347 = scalar_select %p346, %s23, 1
        %s348 = smul.addr %s347, 20
        %s349 = smul.addr %s348, 8
        %s350 = scalar_lea.vmem %s2, %s349
        %p351 = scmp.lt.s32.totalorder %s23, 1
        %s352 = scalar_select %p351, %s23, 1
        %s353 = smul.addr %s352, 2
        %s354 = scalar_lea.vmem %s8, %s353
        %v356 = vld [vmem:[%s340] sm:$0xff]
        %v357 = vld [vmem:[%s340 + $0x8] sm:$0xff]
        %v358 = vld [vmem:[%s340 + $0x10] sm:$0xff]
        %v359 = vld [vmem:[%s340 + $0x18] sm:$0xff]
        %v360 = vld [vmem:[%s340 + $0x20] sm:$0xff]
        %v361 = vld [vmem:[%s340 + $0x28] sm:$0xff]
        %v362 = vld [vmem:[%s340 + $0x30] sm:$0xff]
        %v363 = vld [vmem:[%s340 + $0x38] sm:$0xff]
        %v364 = vld [vmem:[%s340 + $0x40] sm:$0xff]
        %v365 = vld [vmem:[%s340 + $0x48] sm:$0xff]
        %v366 = vld [vmem:[%s340 + $0x50] sm:$0xff]
        %v367 = vld [vmem:[%s340 + $0x58] sm:$0xff]
        %v368 = vld [vmem:[%s340 + $0x60] sm:$0xff]
        %v369 = vld [vmem:[%s340 + $0x68] sm:$0xff]
        %v370 = vld [vmem:[%s340 + $0x70] sm:$0xff]
        %v371 = vld [vmem:[%s340 + $0x78] sm:$0xff]
        %v372 = vld [vmem:[%s340 + $0x80] sm:$0xff]
        %v373 = vld [vmem:[%s340 + $0x88] sm:$0xff]
        %v374 = vld [vmem:[%s340 + $0x90] sm:$0xff]
        %v375 = vld [vmem:[%s340 + $0x98] sm:$0xff]
        %v376 = vld [vmem:[%s3] sm:$0xff]
        %v377 = vld [vmem:[%s3 + $0x8] sm:$0xff]
        %v378 = vld [vmem:[%s3 + $0x10] sm:$0x3]
        %v379 = vpack.c.bf16 %v357, %v356
        %v380 = vpack.c.bf16 %v359, %v358
        %v381 = vpack.c.bf16 %v361, %v360
        %v382 = vpack.c.bf16 %v363, %v362
        %v383 = vpack.c.bf16 %v365, %v364
        %v384 = vpack.c.bf16 %v367, %v366
        %v385 = vpack.c.bf16 %v369, %v368
        %v386 = vpack.c.bf16 %v371, %v370
        %v387 = vpack.c.bf16 %v373, %v372
        %v388 = vpack.c.bf16 %v375, %v374
        %v389 = vpack.c.bf16 %v377, %v376
        %v390 = vpack.c.bf16 %v378, %v378
        %vm391 = vcmask 146432
        %v393 = vsel %vm391, %v379, 0
        %v396 = vsel %vm391, %v380, 0
        %v399 = vsel %vm391, %v381, 0
        %v402 = vsel %vm391, %v382, 0
        %v405 = vsel %vm391, %v383, 0
        %v408 = vsel %vm391, %v384, 0
        %v411 = vsel %vm391, %v385, 0
        %v414 = vsel %vm391, %v386, 0
        %v417 = vsel %vm391, %v387, 0
        %v420 = vsel %vm391, %v388, 0
        %vm422 = vcmask 1040384
        %v424 = vsel %vm422, %v390, 0
        %426 = vmatprep.subr.bf16.mxu0 0
        %427 = vmatpush1.bf16.msra.mxu0 %v389
        %428 = vmatprep.subr.bf16.mxu0 0
        %429 = vmatpush1.bf16.msra.mxu0 %v424
        %430 = vmatprep.subr.bf16.mxu0 0
        %431 = vmatpush1.bf16.msra.mxu0 0
        %432 = vmatprep.subr.bf16.mxu0 0
        %433 = vmatpush1.bf16.msra.mxu0 0
        %434 = vmatprep.subr.bf16.mxu0 0
        %435 = vmatpush1.bf16.msra.mxu0 0
        %436 = vmatprep.subr.bf16.mxu0 0
        %437 = vmatpush1.bf16.msra.mxu0 0
        %438 = vmatprep.subr.bf16.mxu0 0
        %439 = vmatpush1.bf16.msra.mxu0 0
        %440 = vmatprep.subr.bf16.mxu0 0
        %441 = vmatpush1.bf16.msra.mxu0 0
        %442 = vmatprep.subr.bf16.mxu0 0
        %443 = vmatpush1.bf16.msra.mxu0 0
        %444 = vmatprep.subr.bf16.mxu0 0
        %445 = vmatpush1.bf16.msra.mxu0 0
        %446 = vmatprep.subr.bf16.mxu0 0
        %447 = vmatpush1.bf16.msra.mxu0 0
        %448 = vmatprep.subr.bf16.mxu0 0
        %449 = vmatpush1.bf16.msra.mxu0 0
        %450 = vmatprep.subr.bf16.mxu0 0
        %451 = vmatpush1.bf16.msra.mxu0 0
        %452 = vmatprep.subr.bf16.mxu0 0
        %453 = vmatpush1.bf16.msra.mxu0 0
        %454 = vmatprep.subr.bf16.mxu0 0
        %455 = vmatpush1.bf16.msra.mxu0 0
        %456 = vmatprep.subr.bf16.mxu0 0
        %457 = vmatpush1.bf16.msra.mxu0 0
        %458 = vmatprep.mubr.bf16.mxu0 0
        %459 = vmatmul.mubr.bf16.gmra.mrb[0].mxu0 %v393
        %v460 = vpop.f32.mrb[0].mxu0
        %v461 = vadd.f32 0.0, %v460
        %v462 = vpop.f32.mrb[0].mxu0
        %v463 = vpop.f32.mrb[0].mxu0
        %v464 = vadd.f32 0.0, %v463
        %v465 = vpop.f32.mrb[0].mxu0
        %466 = vmatprep.mubr.bf16.mxu0 0
        %467 = vmatmul.mubr.bf16.gmra.mrb[0].mxu0 %v396
        %v468 = vpop.f32.mrb[0].mxu0
        %v469 = vadd.f32 0.0, %v468
        %v470 = vpop.f32.mrb[0].mxu0
        %v471 = vpop.f32.mrb[0].mxu0
        %v472 = vadd.f32 0.0, %v471
        %v473 = vpop.f32.mrb[0].mxu0
        %474 = vmatprep.mubr.bf16.mxu0 0
        %475 = vmatmul.mubr.bf16.gmra.mrb[0].mxu0 %v399
        %v476 = vpop.f32.mrb[0].mxu0
        %v477 = vadd.f32 0.0, %v476
        %v478 = vpop.f32.mrb[0].mxu0
        %v479 = vpop.f32.mrb[0].mxu0
        %v480 = vadd.f32 0.0, %v479
        %v481 = vpop.f32.mrb[0].mxu0
        %482 = vmatprep.mubr.bf16.mxu0 0
        %483 = vmatmul.mubr.bf16.gmra.mrb[0].mxu0 %v402
        %v484 = vpop.f32.mrb[0].mxu0
        %v485 = vadd.f32 0.0, %v484
        %v486 = vpop.f32.mrb[0].mxu0
        %v487 = vpop.f32.mrb[0].mxu0
        %v488 = vadd.f32 0.0, %v487
        %v489 = vpop.f32.mrb[0].mxu0
        %490 = vmatprep.mubr.bf16.mxu0 0
        %491 = vmatmul.mubr.bf16.gmra.mrb[0].mxu0 %v405
        %v492 = vpop.f32.mrb[0].mxu0
        %v493 = vadd.f32 0.0, %v492
        %v494 = vpop.f32.mrb[0].mxu0
        %v495 = vpop.f32.mrb[0].mxu0
        %v496 = vadd.f32 0.0, %v495
        %v497 = vpop.f32.mrb[0].mxu0
        %498 = vmatprep.mubr.bf16.mxu0 0
        %499 = vmatmul.mubr.bf16.gmra.mrb[0].mxu0 %v408
        %v500 = vpop.f32.mrb[0].mxu0
        %v501 = vadd.f32 0.0, %v500
        %v502 = vpop.f32.mrb[0].mxu0
        %v503 = vpop.f32.mrb[0].mxu0
        %v504 = vadd.f32 0.0, %v503
        %v505 = vpop.f32.mrb[0].mxu0
        %506 = vmatprep.mubr.bf16.mxu0 0
        %507 = vmatmul.mubr.bf16.gmra.mrb[0].mxu0 %v411
        %v508 = vpop.f32.mrb[0].mxu0
        %v509 = vadd.f32 0.0, %v508
        %v510 = vpop.f32.mrb[0].mxu0
        %v511 = vpop.f32.mrb[0].mxu0
        %v512 = vadd.f32 0.0, %v511
        %v513 = vpop.f32.mrb[0].mxu0
        %514 = vmatprep.mubr.bf16.mxu0 0
        %515 = vmatmul.mubr.bf16.gmra.mrb[0].mxu0 %v414
        %v516 = vpop.f32.mrb[0].mxu0
        %v517 = vadd.f32 0.0, %v516
        %v518 = vpop.f32.mrb[0].mxu0
        %v519 = vpop.f32.mrb[0].mxu0
        %v520 = vadd.f32 0.0, %v519
        %v521 = vpop.f32.mrb[0].mxu0
        %522 = vmatprep.mubr.bf16.mxu0 0
        %523 = vmatmul.mubr.bf16.gmra.mrb[0].mxu0 %v417
        %v524 = vpop.f32.mrb[0].mxu0
        %v525 = vadd.f32 0.0, %v524
        %v526 = vpop.f32.mrb[0].mxu0
        %v527 = vpop.f32.mrb[0].mxu0
        %v528 = vadd.f32 0.0, %v527
        %v529 = vpop.f32.mrb[0].mxu0
        %530 = vmatprep.mubr.bf16.mxu0 0
        %531 = vmatmul.mubr.bf16.gmra.mrb[0].mxu0 %v420
        %v532 = vpop.f32.mrb[0].mxu0
        %v533 = vadd.f32 0.0, %v532
        %v534 = vpop.f32.mrb[0].mxu0
        %v535 = vpop.f32.mrb[0].mxu0
        %v536 = vadd.f32 0.0, %v535
        %v537 = vpop.f32.mrb[0].mxu0
        %538 = vdwg.mxu0
        %v539 = vld [vmem:[%s3 + $0x18] sm:$0xff]
        %v540 = vld [vmem:[%s3 + $0x20] sm:$0xff]
        %v541 = vld [vmem:[%s3 + $0x28] sm:$0xff]
        %v542 = vld [vmem:[%s3 + $0x30] sm:$0xff]
        %v543 = vpack.c.bf16 %v464, %v461
        %v544 = vpack.c.bf16 %v472, %v469
        %v545 = vpack.c.bf16 %v480, %v477
        %v546 = vpack.c.bf16 %v488, %v485
        %v547 = vpack.c.bf16 %v496, %v493
        %v548 = vpack.c.bf16 %v504, %v501
        %v549 = vpack.c.bf16 %v512, %v509
        %v550 = vpack.c.bf16 %v520, %v517
        %v551 = vpack.c.bf16 %v528, %v525
        %v552 = vpack.c.bf16 %v536, %v533
        %v553 = vpack.c.bf16 %v540, %v539
        %v554 = vpack.c.bf16 %v542, %v541
        %v555 = vld [vmem:[%s3 + $0x38] sm:$0x1]
        %v556 = vlaneseq
        %v557 = vshrl.u32 %v556, 7
        %v558 = vsub.s32 0, %v557
        %v559 = vrot.slane %v555, %v558
        %vm560 = vcmask 261120
        %v562 = vsel %vm560, %v543, 0
        %v565 = vsel %vm560, %v544, 0
        %v568 = vsel %vm560, %v545, 0
        %v571 = vsel %vm560, %v546, 0
        %v574 = vsel %vm560, %v547, 0
        %v577 = vsel %vm560, %v548, 0
        %v580 = vsel %vm560, %v549, 0
        %v583 = vsel %vm560, %v550, 0
        %v586 = vsel %vm560, %v551, 0
        %v589 = vsel %vm560, %v552, 0
        %591 = vmatprep.subr.bf16.mxu0 0
        %592 = vmatpush1.bf16.msra.mxu0 %v553
        %593 = vmatprep.subr.bf16.mxu0 0
        %594 = vmatpush1.bf16.msra.mxu0 %v554
        %595 = vmatprep.subr.bf16.mxu0 0
        %596 = vmatpush1.bf16.msra.mxu0 0
        %597 = vmatprep.subr.bf16.mxu0 0
        %598 = vmatpush1.bf16.msra.mxu0 0
        %599 = vmatprep.subr.bf16.mxu0 0
        %600 = vmatpush1.bf16.msra.mxu0 0
        %601 = vmatprep.subr.bf16.mxu0 0
        %602 = vmatpush1.bf16.msra.mxu0 0
        %603 = vmatprep.subr.bf16.mxu0 0
        %604 = vmatpush1.bf16.msra.mxu0 0
        %605 = vmatprep.subr.bf16.mxu0 0
        %606 = vmatpush1.bf16.msra.mxu0 0
        %607 = vmatprep.subr.bf16.mxu0 0
        %608 = vmatpush1.bf16.msra.mxu0 0
        %609 = vmatprep.subr.bf16.mxu0 0
        %610 = vmatpush1.bf16.msra.mxu0 0
        %611 = vmatprep.subr.bf16.mxu0 0
        %612 = vmatpush1.bf16.msra.mxu0 0
        %613 = vmatprep.subr.bf16.mxu0 0
        %614 = vmatpush1.bf16.msra.mxu0 0
        %615 = vmatprep.subr.bf16.mxu0 0
        %616 = vmatpush1.bf16.msra.mxu0 0
        %617 = vmatprep.subr.bf16.mxu0 0
        %618 = vmatpush1.bf16.msra.mxu0 0
        %619 = vmatprep.subr.bf16.mxu0 0
        %620 = vmatpush1.bf16.msra.mxu0 0
        %621 = vmatprep.subr.bf16.mxu0 0
        %622 = vmatpush1.bf16.msra.mxu0 0
        %623 = vmatprep.mubr.bf16.mxu0 0
        %624 = vmatmul.mubr.bf16.gmra.mrb[0].mxu0 %v562
        %v625 = vpop.f32.mrb[0].mxu0
        %v626 = vadd.f32 %v559, %v625
        %v627 = vpop.f32.mrb[0].mxu0
        %v628 = vpop.f32.mrb[0].mxu0
        %v629 = vadd.f32 %v559, %v628
        %v630 = vpop.f32.mrb[0].mxu0
        %631 = vmatprep.mubr.bf16.mxu0 0
        %632 = vmatmul.mubr.bf16.gmra.mrb[0].mxu0 %v565
        %v633 = vpop.f32.mrb[0].mxu0
        %v634 = vadd.f32 %v559, %v633
        %v635 = vpop.f32.mrb[0].mxu0
        %v636 = vpop.f32.mrb[0].mxu0
        %v637 = vadd.f32 %v559, %v636
        %v638 = vpop.f32.mrb[0].mxu0
        %639 = vmatprep.mubr.bf16.mxu0 0
        %640 = vmatmul.mubr.bf16.gmra.mrb[0].mxu0 %v568
        %v641 = vpop.f32.mrb[0].mxu0
        %v642 = vadd.f32 %v559, %v641
        %v643 = vpop.f32.mrb[0].mxu0
        %v644 = vpop.f32.mrb[0].mxu0
        %v645 = vadd.f32 %v559, %v644
        %v646 = vpop.f32.mrb[0].mxu0
        %647 = vmatprep.mubr.bf16.mxu0 0
        %648 = vmatmul.mubr.bf16.gmra.mrb[0].mxu0 %v571
        %v649 = vpop.f32.mrb[0].mxu0
        %v650 = vadd.f32 %v559, %v649
        %v651 = vpop.f32.mrb[0].mxu0
        %v652 = vpop.f32.mrb[0].mxu0
        %v653 = vadd.f32 %v559, %v652
        %v654 = vpop.f32.mrb[0].mxu0
        %655 = vmatprep.mubr.bf16.mxu0 0
        %656 = vmatmul.mubr.bf16.gmra.mrb[0].mxu0 %v574
        %v657 = vpop.f32.mrb[0].mxu0
        %v658 = vadd.f32 %v559, %v657
        %v659 = vpop.f32.mrb[0].mxu0
        %v660 = vpop.f32.mrb[0].mxu0
        %v661 = vadd.f32 %v559, %v660
        %v662 = vpop.f32.mrb[0].mxu0
        %663 = vmatprep.mubr.bf16.mxu0 0
        %664 = vmatmul.mubr.bf16.gmra.mrb[0].mxu0 %v577
        %v665 = vpop.f32.mrb[0].mxu0
        %v666 = vadd.f32 %v559, %v665
        %v667 = vpop.f32.mrb[0].mxu0
        %v668 = vpop.f32.mrb[0].mxu0
        %v669 = vadd.f32 %v559, %v668
        %v670 = vpop.f32.mrb[0].mxu0
        %671 = vmatprep.mubr.bf16.mxu0 0
        %672 = vmatmul.mubr.bf16.gmra.mrb[0].mxu0 %v580
        %v673 = vpop.f32.mrb[0].mxu0
        %v674 = vadd.f32 %v559, %v673
        %v675 = vpop.f32.mrb[0].mxu0
        %v676 = vpop.f32.mrb[0].mxu0
        %v677 = vadd.f32 %v559, %v676
        %v678 = vpop.f32.mrb[0].mxu0
        %679 = vmatprep.mubr.bf16.mxu0 0
        %680 = vmatmul.mubr.bf16.gmra.mrb[0].mxu0 %v583
        %v681 = vpop.f32.mrb[0].mxu0
        %v682 = vadd.f32 %v559, %v681
        %v683 = vpop.f32.mrb[0].mxu0
        %v684 = vpop.f32.mrb[0].mxu0
        %v685 = vadd.f32 %v559, %v684
        %v686 = vpop.f32.mrb[0].mxu0
        %687 = vmatprep.mubr.bf16.mxu0 0
        %688 = vmatmul.mubr.bf16.gmra.mrb[0].mxu0 %v586
        %v689 = vpop.f32.mrb[0].mxu0
        %v690 = vadd.f32 %v559, %v689
        %v691 = vpop.f32.mrb[0].mxu0
        %v692 = vpop.f32.mrb[0].mxu0
        %v693 = vadd.f32 %v559, %v692
        %v694 = vpop.f32.mrb[0].mxu0
        %695 = vmatprep.mubr.bf16.mxu0 0
        %696 = vmatmul.mubr.bf16.gmra.mrb[0].mxu0 %v589
        %v697 = vpop.f32.mrb[0].mxu0
        %v698 = vadd.f32 %v559, %v697
        %v699 = vpop.f32.mrb[0].mxu0
        %v700 = vpop.f32.mrb[0].mxu0
        %v701 = vadd.f32 %v559, %v700
        %v702 = vpop.f32.mrb[0].mxu0
        %703 = vdwg.mxu0
        %v704 = vld [vmem:[%s3 + $0x40] sm:$0xff]
        %v705 = vld [vmem:[%s3 + $0x48] sm:$0xff]
        %v706 = vld [vmem:[%s3 + $0x50] sm:$0xff]
        %v707 = vld [vmem:[%s3 + $0x58] sm:$0xff]
        %v708 = vpack.c.bf16 %v705, %v704
        %v709 = vpack.c.bf16 %v707, %v706
        %v710 = vld [vmem:[%s3 + $0x60] sm:$0x1]
        %v711 = vlaneseq
        %v712 = vshrl.u32 %v711, 7
        %v713 = vsub.s32 0, %v712
        %v714 = vrot.slane %v710, %v713
        %715 = vmatprep.subr.bf16.mxu0 0
        %716 = vmatpush1.bf16.msra.mxu0 %v708
        %717 = vmatprep.subr.bf16.mxu0 0
        %718 = vmatpush1.bf16.msra.mxu0 %v709
        %719 = vmatprep.subr.bf16.mxu0 0
        %720 = vmatpush1.bf16.msra.mxu0 0
        %721 = vmatprep.subr.bf16.mxu0 0
        %722 = vmatpush1.bf16.msra.mxu0 0
        %723 = vmatprep.subr.bf16.mxu0 0
        %724 = vmatpush1.bf16.msra.mxu0 0
        %725 = vmatprep.subr.bf16.mxu0 0
        %726 = vmatpush1.bf16.msra.mxu0 0
        %727 = vmatprep.subr.bf16.mxu0 0
        %728 = vmatpush1.bf16.msra.mxu0 0
        %729 = vmatprep.subr.bf16.mxu0 0
        %730 = vmatpush1.bf16.msra.mxu0 0
        %731 = vmatprep.subr.bf16.mxu0 0
        %732 = vmatpush1.bf16.msra.mxu0 0
        %733 = vmatprep.subr.bf16.mxu0 0
        %734 = vmatpush1.bf16.msra.mxu0 0
        %735 = vmatprep.subr.bf16.mxu0 0
        %736 = vmatpush1.bf16.msra.mxu0 0
        %737 = vmatprep.subr.bf16.mxu0 0
        %738 = vmatpush1.bf16.msra.mxu0 0
        %739 = vmatprep.subr.bf16.mxu0 0
        %740 = vmatpush1.bf16.msra.mxu0 0
        %741 = vmatprep.subr.bf16.mxu0 0
        %742 = vmatpush1.bf16.msra.mxu0 0
        %743 = vmatprep.subr.bf16.mxu0 0
        %744 = vmatpush1.bf16.msra.mxu0 0
        %745 = vmatprep.subr.bf16.mxu0 0
        %746 = vmatpush1.bf16.msra.mxu0 0
        %747 = vmatprep.mubr.bf16.mxu0 0
        %748 = vmatmul.mubr.bf16.gmra.mrb[0].mxu0 %v562
        %v749 = vpop.f32.mrb[0].mxu0
        %v750 = vadd.f32 %v714, %v749
        %v751 = vpop.f32.mrb[0].mxu0
        %v752 = vpop.f32.mrb[0].mxu0
        %v753 = vadd.f32 %v714, %v752
        %v754 = vpop.f32.mrb[0].mxu0
        %755 = vmatprep.mubr.bf16.mxu0 0
        %756 = vmatmul.mubr.bf16.gmra.mrb[0].mxu0 %v565
        %v757 = vpop.f32.mrb[0].mxu0
        %v758 = vadd.f32 %v714, %v757
        %v759 = vpop.f32.mrb[0].mxu0
        %v760 = vpop.f32.mrb[0].mxu0
        %v761 = vadd.f32 %v714, %v760
        %v762 = vpop.f32.mrb[0].mxu0
        %763 = vmatprep.mubr.bf16.mxu0 0
        %764 = vmatmul.mubr.bf16.gmra.mrb[0].mxu0 %v568
        %v765 = vpop.f32.mrb[0].mxu0
        %v766 = vadd.f32 %v714, %v765
        %v767 = vpop.f32.mrb[0].mxu0
        %v768 = vpop.f32.mrb[0].mxu0
        %v769 = vadd.f32 %v714, %v768
        %v770 = vpop.f32.mrb[0].mxu0
        %771 = vmatprep.mubr.bf16.mxu0 0
        %772 = vmatmul.mubr.bf16.gmra.mrb[0].mxu0 %v571
        %v773 = vpop.f32.mrb[0].mxu0
        %v774 = vadd.f32 %v714, %v773
        %v775 = vpop.f32.mrb[0].mxu0
        %v776 = vpop.f32.mrb[0].mxu0
        %v777 = vadd.f32 %v714, %v776
        %v778 = vpop.f32.mrb[0].mxu0
        %779 = vmatprep.mubr.bf16.mxu0 0
        %780 = vmatmul.mubr.bf16.gmra.mrb[0].mxu0 %v574
        %v781 = vpop.f32.mrb[0].mxu0
        %v782 = vadd.f32 %v714, %v781
        %v783 = vpop.f32.mrb[0].mxu0
        %v784 = vpop.f32.mrb[0].mxu0
        %v785 = vadd.f32 %v714, %v784
        %v786 = vpop.f32.mrb[0].mxu0
        %787 = vmatprep.mubr.bf16.mxu0 0
        %788 = vmatmul.mubr.bf16.gmra.mrb[0].mxu0 %v577
        %v789 = vpop.f32.mrb[0].mxu0
        %v790 = vadd.f32 %v714, %v789
        %v791 = vpop.f32.mrb[0].mxu0
        %v792 = vpop.f32.mrb[0].mxu0
        %v793 = vadd.f32 %v714, %v792
        %v794 = vpop.f32.mrb[0].mxu0
        %795 = vmatprep.mubr.bf16.mxu0 0
        %796 = vmatmul.mubr.bf16.gmra.mrb[0].mxu0 %v580
        %v797 = vpop.f32.mrb[0].mxu0
        %v798 = vadd.f32 %v714, %v797
        %v799 = vpop.f32.mrb[0].mxu0
        %v800 = vpop.f32.mrb[0].mxu0
        %v801 = vadd.f32 %v714, %v800
        %v802 = vpop.f32.mrb[0].mxu0
        %803 = vmatprep.mubr.bf16.mxu0 0
        %804 = vmatmul.mubr.bf16.gmra.mrb[0].mxu0 %v583
        %v805 = vpop.f32.mrb[0].mxu0
        %v806 = vadd.f32 %v714, %v805
        %v807 = vpop.f32.mrb[0].mxu0
        %v808 = vpop.f32.mrb[0].mxu0
        %v809 = vadd.f32 %v714, %v808
        %v810 = vpop.f32.mrb[0].mxu0
        %811 = vmatprep.mubr.bf16.mxu0 0
        %812 = vmatmul.mubr.bf16.gmra.mrb[0].mxu0 %v586
        %v813 = vpop.f32.mrb[0].mxu0
        %v814 = vadd.f32 %v714, %v813
        %v815 = vpop.f32.mrb[0].mxu0
        %v816 = vpop.f32.mrb[0].mxu0
        %v817 = vadd.f32 %v714, %v816
        %v818 = vpop.f32.mrb[0].mxu0
        %819 = vmatprep.mubr.bf16.mxu0 0
        %820 = vmatmul.mubr.bf16.gmra.mrb[0].mxu0 %v589
        %v821 = vpop.f32.mrb[0].mxu0
        %v822 = vadd.f32 %v714, %v821
        %v823 = vpop.f32.mrb[0].mxu0
        %v824 = vpop.f32.mrb[0].mxu0
        %v825 = vadd.f32 %v714, %v824
        %v826 = vpop.f32.mrb[0].mxu0
        %827 = vdwg.mxu0
        %v828 = vpack.c.bf16 %v629, %v626
        %v829 = vpack.c.bf16 %v637, %v634
        %v830 = vpack.c.bf16 %v645, %v642
        %v831 = vpack.c.bf16 %v653, %v650
        %v832 = vpack.c.bf16 %v661, %v658
        %v833 = vpack.c.bf16 %v669, %v666
        %v834 = vpack.c.bf16 %v677, %v674
        %v835 = vpack.c.bf16 %v685, %v682
        %v836 = vpack.c.bf16 %v693, %v690
        %v837 = vpack.c.bf16 %v701, %v698
        %v838 = vpack.c.bf16 %v753, %v750
        %v839 = vpack.c.bf16 %v761, %v758
        %v840 = vpack.c.bf16 %v769, %v766
        %v841 = vpack.c.bf16 %v777, %v774
        %v842 = vpack.c.bf16 %v785, %v782
        %v843 = vpack.c.bf16 %v793, %v790
        %v844 = vpack.c.bf16 %v801, %v798
        %v845 = vpack.c.bf16 %v809, %v806
        %v846 = vpack.c.bf16 %v817, %v814
        %v847 = vpack.c.bf16 %v825, %v822
        %v848 = vld [vmem:[%s345] sm:$0xff]
        %v849 = vld [vmem:[%s345 + $0x8] sm:$0xff]
        %v850 = vld [vmem:[%s345 + $0x10] sm:$0xff]
        %v851 = vld [vmem:[%s345 + $0x18] sm:$0xff]
        %v852 = vld [vmem:[%s345 + $0x20] sm:$0xff]
        %v853 = vld [vmem:[%s345 + $0x28] sm:$0xff]
        %v854 = vld [vmem:[%s345 + $0x30] sm:$0xff]
        %v855 = vld [vmem:[%s345 + $0x38] sm:$0xff]
        %v856 = vld [vmem:[%s345 + $0x40] sm:$0xff]
        %v857 = vld [vmem:[%s345 + $0x48] sm:$0xff]
        %v858 = vld [vmem:[%s345 + $0x50] sm:$0xff]
        %v859 = vld [vmem:[%s345 + $0x58] sm:$0xff]
        %v860 = vld [vmem:[%s345 + $0x60] sm:$0xff]
        %v861 = vld [vmem:[%s345 + $0x68] sm:$0xff]
        %v862 = vld [vmem:[%s345 + $0x70] sm:$0xff]
        %v863 = vld [vmem:[%s345 + $0x78] sm:$0xff]
        %v864 = vld [vmem:[%s345 + $0x80] sm:$0xff]
        %v865 = vld [vmem:[%s345 + $0x88] sm:$0xff]
        %v866 = vld [vmem:[%s345 + $0x90] sm:$0xff]
        %v867 = vld [vmem:[%s345 + $0x98] sm:$0xff]
        %v868 = vld [vmem:[%s345 + $0xa0] sm:$0xff]
        %v869 = vld [vmem:[%s345 + $0xa8] sm:$0xff]
        %v870 = vld [vmem:[%s345 + $0xb0] sm:$0xff]
        %v871 = vld [vmem:[%s345 + $0xb8] sm:$0xff]
        %v872 = vld [vmem:[%s345 + $0xc0] sm:$0xff]
        %v873 = vld [vmem:[%s345 + $0xc8] sm:$0xff]
        %v874 = vld [vmem:[%s345 + $0xd0] sm:$0xff]
        %v875 = vld [vmem:[%s345 + $0xd8] sm:$0xff]
        %v876 = vld [vmem:[%s345 + $0xe0] sm:$0xff]
        %v877 = vld [vmem:[%s345 + $0xe8] sm:$0xff]
        %v878 = vld [vmem:[%s345 + $0xf0] sm:$0xff]
        %v879 = vld [vmem:[%s345 + $0xf8] sm:$0xff]
        %v880 = vld [vmem:[%s345 + $0x100] sm:$0xff]
        %v881 = vld [vmem:[%s345 + $0x108] sm:$0xff]
        %v882 = vld [vmem:[%s345 + $0x110] sm:$0xff]
        %v883 = vld [vmem:[%s345 + $0x118] sm:$0xff]
        %v884 = vld [vmem:[%s345 + $0x120] sm:$0xff]
        %v885 = vld [vmem:[%s345 + $0x128] sm:$0xff]
        %v886 = vld [vmem:[%s345 + $0x130] sm:$0xff]
        %v887 = vld [vmem:[%s345 + $0x138] sm:$0xff]
        %vm888 = vcmask 130048
        %v890 = vsel %vm888, %v828, 0
        %v893 = vsel %vm888, %v829, 0
        %v896 = vsel %vm888, %v830, 0
        %v899 = vsel %vm888, %v831, 0
        %v902 = vsel %vm888, %v832, 0
        %v905 = vsel %vm888, %v833, 0
        %v908 = vsel %vm888, %v834, 0
        %v911 = vsel %vm888, %v835, 0
        %v914 = vsel %vm888, %v836, 0
        %v917 = vsel %vm888, %v837, 0
        %v920 = vsel %vm888, %v838, 0
        %v923 = vsel %vm888, %v839, 0
        %v926 = vsel %vm888, %v840, 0
        %v929 = vsel %vm888, %v841, 0
        %v932 = vsel %vm888, %v842, 0
        %v935 = vsel %vm888, %v843, 0
        %v938 = vsel %vm888, %v844, 0
        %v941 = vsel %vm888, %v845, 0
        %v944 = vsel %vm888, %v846, 0
        %v947 = vsel %vm888, %v847, 0
        %949 = vmatprep.subr.bf16.mxu0 0
        %950 = vmatpush1.bf16.xpose.msra.mxu0 %v920
        %951 = vmatprep.subr.bf16.mxu0 0
        %952 = vmatpush1.bf16.xpose.msra.mxu0 %v923
        %953 = vmatprep.subr.bf16.mxu0 0
        %954 = vmatpush1.bf16.xpose.msra.mxu0 %v926
        %955 = vmatprep.subr.bf16.mxu0 0
        %956 = vmatpush1.bf16.xpose.msra.mxu0 %v929
        %957 = vmatprep.subr.bf16.mxu0 0
        %958 = vmatpush1.bf16.xpose.msra.mxu0 %v932
        %959 = vmatprep.subr.bf16.mxu0 0
        %960 = vmatpush1.bf16.xpose.msra.mxu0 %v935
        %961 = vmatprep.subr.bf16.mxu0 0
        %962 = vmatpush1.bf16.xpose.msra.mxu0 %v938
        %963 = vmatprep.subr.bf16.mxu0 0
        %964 = vmatpush1.bf16.xpose.msra.mxu0 %v941
        %965 = vmatprep.subr.bf16.mxu0 0
        %966 = vmatpush1.bf16.xpose.msra.mxu0 %v944
        %967 = vmatprep.subr.bf16.mxu0 0
        %968 = vmatpush1.bf16.xpose.msra.mxu0 %v947
        %969 = vmatprep.subr.bf16.mxu0 0
        %970 = vmatpush1.bf16.xpose.msra.mxu0 0
        %971 = vmatprep.subr.bf16.mxu0 0
        %972 = vmatpush1.bf16.xpose.msra.mxu0 0
        %973 = vmatprep.subr.bf16.mxu0 0
        %974 = vmatpush1.bf16.xpose.msra.mxu0 0
        %975 = vmatprep.subr.bf16.mxu0 0
        %976 = vmatpush1.bf16.xpose.msra.mxu0 0
        %977 = vmatprep.subr.bf16.mxu0 0
        %978 = vmatpush1.bf16.xpose.msra.mxu0 0
        %979 = vmatprep.subr.bf16.mxu0 0
        %980 = vmatpush1.bf16.xpose.msra.mxu0 0
        %981 = vmatprep.mubr.bf16.mxu0 0
        %982 = vmatmul.mubr.bf16.gmra.mrb[0].mxu0 %v890
        %v983 = vpop.f32.mrb[0].mxu0
        %v984 = vadd.f32 %v848, %v983
        %v985 = vpop.f32.mrb[0].mxu0
        %v986 = vadd.f32 %v849, %v985
        %v987 = vpop.f32.mrb[0].mxu0
        %v988 = vadd.f32 %v850, %v987
        %v989 = vpop.f32.mrb[0].mxu0
        %v990 = vadd.f32 %v851, %v989
        %991 = vmatprep.mubr.bf16.mxu0 0
        %992 = vmatmul.mubr.bf16.gmra.mrb[0].mxu0 %v893
        %v993 = vpop.f32.mrb[0].mxu0
        %v994 = vadd.f32 %v852, %v993
        %v995 = vpop.f32.mrb[0].mxu0
        %v996 = vadd.f32 %v853, %v995
        %v997 = vpop.f32.mrb[0].mxu0
        %v998 = vadd.f32 %v854, %v997
        %v999 = vpop.f32.mrb[0].mxu0
        %v1000 = vadd.f32 %v855, %v999
        %1001 = vmatprep.mubr.bf16.mxu0 0
        %1002 = vmatmul.mubr.bf16.gmra.mrb[0].mxu0 %v896
        %v1003 = vpop.f32.mrb[0].mxu0
        %v1004 = vadd.f32 %v856, %v1003
        %v1005 = vpop.f32.mrb[0].mxu0
        %v1006 = vadd.f32 %v857, %v1005
        %v1007 = vpop.f32.mrb[0].mxu0
        %v1008 = vadd.f32 %v858, %v1007
        %v1009 = vpop.f32.mrb[0].mxu0
        %v1010 = vadd.f32 %v859, %v1009
        %1011 = vmatprep.mubr.bf16.mxu0 0
        %1012 = vmatmul.mubr.bf16.gmra.mrb[0].mxu0 %v899
        %v1013 = vpop.f32.mrb[0].mxu0
        %v1014 = vadd.f32 %v860, %v1013
        %v1015 = vpop.f32.mrb[0].mxu0
        %v1016 = vadd.f32 %v861, %v1015
        %v1017 = vpop.f32.mrb[0].mxu0
        %v1018 = vadd.f32 %v862, %v1017
        %v1019 = vpop.f32.mrb[0].mxu0
        %v1020 = vadd.f32 %v863, %v1019
        %1021 = vmatprep.mubr.bf16.mxu0 0
        %1022 = vmatmul.mubr.bf16.gmra.mrb[0].mxu0 %v902
        %v1023 = vpop.f32.mrb[0].mxu0
        %v1024 = vadd.f32 %v864, %v1023
        %v1025 = vpop.f32.mrb[0].mxu0
        %v1026 = vadd.f32 %v865, %v1025
        %v1027 = vpop.f32.mrb[0].mxu0
        %v1028 = vadd.f32 %v866, %v1027
        %v1029 = vpop.f32.mrb[0].mxu0
        %v1030 = vadd.f32 %v867, %v1029
        %1031 = vmatprep.mubr.bf16.mxu0 0
        %1032 = vmatmul.mubr.bf16.gmra.mrb[0].mxu0 %v905
        %v1033 = vpop.f32.mrb[0].mxu0
        %v1034 = vadd.f32 %v868, %v1033
        %v1035 = vpop.f32.mrb[0].mxu0
        %v1036 = vadd.f32 %v869, %v1035
        %v1037 = vpop.f32.mrb[0].mxu0
        %v1038 = vadd.f32 %v870, %v1037
        %v1039 = vpop.f32.mrb[0].mxu0
        %v1040 = vadd.f32 %v871, %v1039
        %1041 = vmatprep.mubr.bf16.mxu0 0
        %1042 = vmatmul.mubr.bf16.gmra.mrb[0].mxu0 %v908
        %v1043 = vpop.f32.mrb[0].mxu0
        %v1044 = vadd.f32 %v872, %v1043
        %v1045 = vpop.f32.mrb[0].mxu0
        %v1046 = vadd.f32 %v873, %v1045
        %v1047 = vpop.f32.mrb[0].mxu0
        %v1048 = vadd.f32 %v874, %v1047
        %v1049 = vpop.f32.mrb[0].mxu0
        %v1050 = vadd.f32 %v875, %v1049
        %1051 = vmatprep.mubr.bf16.mxu0 0
        %1052 = vmatmul.mubr.bf16.gmra.mrb[0].mxu0 %v911
        %v1053 = vpop.f32.mrb[0].mxu0
        %v1054 = vadd.f32 %v876, %v1053
        %v1055 = vpop.f32.mrb[0].mxu0
        %v1056 = vadd.f32 %v877, %v1055
        %v1057 = vpop.f32.mrb[0].mxu0
        %v1058 = vadd.f32 %v878, %v1057
        %v1059 = vpop.f32.mrb[0].mxu0
        %v1060 = vadd.f32 %v879, %v1059
        %1061 = vmatprep.mubr.bf16.mxu0 0
        %1062 = vmatmul.mubr.bf16.gmra.mrb[0].mxu0 %v914
        %v1063 = vpop.f32.mrb[0].mxu0
        %v1064 = vadd.f32 %v880, %v1063
        %v1065 = vpop.f32.mrb[0].mxu0
        %v1066 = vadd.f32 %v881, %v1065
        %v1067 = vpop.f32.mrb[0].mxu0
        %v1068 = vadd.f32 %v882, %v1067
        %v1069 = vpop.f32.mrb[0].mxu0
        %v1070 = vadd.f32 %v883, %v1069
        %1071 = vmatprep.mubr.bf16.mxu0 0
        %1072 = vmatmul.mubr.bf16.gmra.mrb[0].mxu0 %v917
        %v1073 = vpop.f32.mrb[0].mxu0
        %v1074 = vadd.f32 %v884, %v1073
        %v1075 = vpop.f32.mrb[0].mxu0
        %v1076 = vadd.f32 %v885, %v1075
        %v1077 = vpop.f32.mrb[0].mxu0
        %v1078 = vadd.f32 %v886, %v1077
        %v1079 = vpop.f32.mrb[0].mxu0
        %v1080 = vadd.f32 %v887, %v1079
        %1081 = vdwg.mxu0
        %v1082 = vsel %vm560, %v986, -inf
        %v1083 = vmax.f32 %v984, %v1082
        %1084 = vmax.xlane.f32.xlu0 %v1083
        %v1085 = vpop.xlane.xlu0 %1084
        %v1086 = vsel %vm560, %v990, -inf
        %v1087 = vmax.f32 %v988, %v1086
        %1088 = vmax.xlane.f32.xlu0 %v1087
        %v1089 = vpop.xlane.xlu0 %1088
        %v1090 = vsel %vm560, %v996, -inf
        %v1091 = vmax.f32 %v994, %v1090
        %1092 = vmax.xlane.f32.xlu0 %v1091
        %v1093 = vpop.xlane.xlu0 %1092
        %v1094 = vsel %vm560, %v1000, -inf
        %v1095 = vmax.f32 %v998, %v1094
        %1096 = vmax.xlane.f32.xlu0 %v1095
        %v1097 = vpop.xlane.xlu0 %1096
        %v1098 = vsel %vm560, %v1006, -inf
        %v1099 = vmax.f32 %v1004, %v1098
        %1100 = vmax.xlane.f32.xlu0 %v1099
        %v1101 = vpop.xlane.xlu0 %1100
        %v1102 = vsel %vm560, %v1010, -inf
        %v1103 = vmax.f32 %v1008, %v1102
        %1104 = vmax.xlane.f32.xlu0 %v1103
        %v1105 = vpop.xlane.xlu0 %1104
        %v1106 = vsel %vm560, %v1016, -inf
        %v1107 = vmax.f32 %v1014, %v1106
        %1108 = vmax.xlane.f32.xlu0 %v1107
        %v1109 = vpop.xlane.xlu0 %1108
        %v1110 = vsel %vm560, %v1020, -inf
        %v1111 = vmax.f32 %v1018, %v1110
        %1112 = vmax.xlane.f32.xlu0 %v1111
        %v1113 = vpop.xlane.xlu0 %1112
        %v1114 = vsel %vm560, %v1026, -inf
        %v1115 = vmax.f32 %v1024, %v1114
        %1116 = vmax.xlane.f32.xlu0 %v1115
        %v1117 = vpop.xlane.xlu0 %1116
        %v1118 = vsel %vm560, %v1030, -inf
        %v1119 = vmax.f32 %v1028, %v1118
        %1120 = vmax.xlane.f32.xlu0 %v1119
        %v1121 = vpop.xlane.xlu0 %1120
        %v1122 = vsel %vm560, %v1036, -inf
        %v1123 = vmax.f32 %v1034, %v1122
        %1124 = vmax.xlane.f32.xlu0 %v1123
        %v1125 = vpop.xlane.xlu0 %1124
        %v1126 = vsel %vm560, %v1040, -inf
        %v1127 = vmax.f32 %v1038, %v1126
        %1128 = vmax.xlane.f32.xlu0 %v1127
        %v1129 = vpop.xlane.xlu0 %1128
        %v1130 = vsel %vm560, %v1046, -inf
        %v1131 = vmax.f32 %v1044, %v1130
        %1132 = vmax.xlane.f32.xlu0 %v1131
        %v1133 = vpop.xlane.xlu0 %1132
        %v1134 = vsel %vm560, %v1050, -inf
        %v1135 = vmax.f32 %v1048, %v1134
        %1136 = vmax.xlane.f32.xlu0 %v1135
        %v1137 = vpop.xlane.xlu0 %1136
        %v1138 = vsel %vm560, %v1056, -inf
        %v1139 = vmax.f32 %v1054, %v1138
        %1140 = vmax.xlane.f32.xlu0 %v1139
        %v1141 = vpop.xlane.xlu0 %1140
        %v1142 = vsel %vm560, %v1060, -inf
        %v1143 = vmax.f32 %v1058, %v1142
        %1144 = vmax.xlane.f32.xlu0 %v1143
        %v1145 = vpop.xlane.xlu0 %1144
        %v1146 = vsel %vm560, %v1066, -inf
        %v1147 = vmax.f32 %v1064, %v1146
        %1148 = vmax.xlane.f32.xlu0 %v1147
        %v1149 = vpop.xlane.xlu0 %1148
        %v1150 = vsel %vm560, %v1070, -inf
        %v1151 = vmax.f32 %v1068, %v1150
        %1152 = vmax.xlane.f32.xlu0 %v1151
        %v1153 = vpop.xlane.xlu0 %1152
        %v1154 = vsel %vm560, %v1076, -inf
        %v1155 = vmax.f32 %v1074, %v1154
        %1156 = vmax.xlane.f32.xlu0 %v1155
        %v1157 = vpop.xlane.xlu0 %1156
        %v1158 = vsel %vm560, %v1080, -inf
        %v1159 = vmax.f32 %v1078, %v1158
        %1160 = vmax.xlane.f32.xlu0 %v1159
        %v1161 = vpop.xlane.xlu0 %1160
        %v1162 = vsub.f32 %v984, %v1085
        %v1163 = vsub.f32 %v986, %v1085
        %v1164 = vsub.f32 %v988, %v1089
        %v1165 = vsub.f32 %v990, %v1089
        %v1166 = vsub.f32 %v994, %v1093
        %v1167 = vsub.f32 %v996, %v1093
        %v1168 = vsub.f32 %v998, %v1097
        %v1169 = vsub.f32 %v1000, %v1097
        %v1170 = vsub.f32 %v1004, %v1101
        %v1171 = vsub.f32 %v1006, %v1101
        %v1172 = vsub.f32 %v1008, %v1105
        %v1173 = vsub.f32 %v1010, %v1105
        %v1174 = vsub.f32 %v1014, %v1109
        %v1175 = vsub.f32 %v1016, %v1109
        %v1176 = vsub.f32 %v1018, %v1113
        %v1177 = vsub.f32 %v1020, %v1113
        %v1178 = vsub.f32 %v1024, %v1117
        %v1179 = vsub.f32 %v1026, %v1117
        %v1180 = vsub.f32 %v1028, %v1121
        %v1181 = vsub.f32 %v1030, %v1121
        %v1182 = vsub.f32 %v1034, %v1125
        %v1183 = vsub.f32 %v1036, %v1125
        %v1184 = vsub.f32 %v1038, %v1129
        %v1185 = vsub.f32 %v1040, %v1129
        %v1186 = vsub.f32 %v1044, %v1133
        %v1187 = vsub.f32 %v1046, %v1133
        %v1188 = vsub.f32 %v1048, %v1137
        %v1189 = vsub.f32 %v1050, %v1137
        %v1190 = vsub.f32 %v1054, %v1141
        %v1191 = vsub.f32 %v1056, %v1141
        %v1192 = vsub.f32 %v1058, %v1145
        %v1193 = vsub.f32 %v1060, %v1145
        %v1194 = vsub.f32 %v1064, %v1149
        %v1195 = vsub.f32 %v1066, %v1149
        %v1196 = vsub.f32 %v1068, %v1153
        %v1197 = vsub.f32 %v1070, %v1153
        %v1198 = vsub.f32 %v1074, %v1157
        %v1199 = vsub.f32 %v1076, %v1157
        %v1200 = vsub.f32 %v1078, %v1161
        %v1201 = vsub.f32 %v1080, %v1161
        %v1202 = vmul.f32 %v1162, 1.442695
        %v1203 = vpow.pop %v1202
        %v1204 = vmul.f32 %v1163, 1.442695
        %v1205 = vpow.pop %v1204
        %v1206 = vmul.f32 %v1164, 1.442695
        %v1207 = vpow.pop %v1206
        %v1208 = vmul.f32 %v1165, 1.442695
        %v1209 = vpow.pop %v1208
        %v1210 = vmul.f32 %v1166, 1.442695
        %v1211 = vpow.pop %v1210
        %v1212 = vmul.f32 %v1167, 1.442695
        %v1213 = vpow.pop %v1212
        %v1214 = vmul.f32 %v1168, 1.442695
        %v1215 = vpow.pop %v1214
        %v1216 = vmul.f32 %v1169, 1.442695
        %v1217 = vpow.pop %v1216
        %v1218 = vmul.f32 %v1170, 1.442695
        %v1219 = vpow.pop %v1218
        %v1220 = vmul.f32 %v1171, 1.442695
        %v1221 = vpow.pop %v1220
        %v1222 = vmul.f32 %v1172, 1.442695
        %v1223 = vpow.pop %v1222
        %v1224 = vmul.f32 %v1173, 1.442695
        %v1225 = vpow.pop %v1224
        %v1226 = vmul.f32 %v1174, 1.442695
        %v1227 = vpow.pop %v1226
        %v1228 = vmul.f32 %v1175, 1.442695
        %v1229 = vpow.pop %v1228
        %v1230 = vmul.f32 %v1176, 1.442695
        %v1231 = vpow.pop %v1230
        %v1232 = vmul.f32 %v1177, 1.442695
        %v1233 = vpow.pop %v1232
        %v1234 = vmul.f32 %v1178, 1.442695
        %v1235 = vpow.pop %v1234
        %v1236 = vmul.f32 %v1179, 1.442695
        %v1237 = vpow.pop %v1236
        %v1238 = vmul.f32 %v1180, 1.442695
        %v1239 = vpow.pop %v1238
        %v1240 = vmul.f32 %v1181, 1.442695
        %v1241 = vpow.pop %v1240
        %v1242 = vmul.f32 %v1182, 1.442695
        %v1243 = vpow.pop %v1242
        %v1244 = vmul.f32 %v1183, 1.442695
        %v1245 = vpow.pop %v1244
        %v1246 = vmul.f32 %v1184, 1.442695
        %v1247 = vpow.pop %v1246
        %v1248 = vmul.f32 %v1185, 1.442695
        %v1249 = vpow.pop %v1248
        %v1250 = vmul.f32 %v1186, 1.442695
        %v1251 = vpow.pop %v1250
        %v1252 = vmul.f32 %v1187, 1.442695
        %v1253 = vpow.pop %v1252
        %v1254 = vmul.f32 %v1188, 1.442695
        %v1255 = vpow.pop %v1254
        %v1256 = vmul.f32 %v1189, 1.442695
        %v1257 = vpow.pop %v1256
        %v1258 = vmul.f32 %v1190, 1.442695
        %v1259 = vpow.pop %v1258
        %v1260 = vmul.f32 %v1191, 1.442695
        %v1261 = vpow.pop %v1260
        %v1262 = vmul.f32 %v1192, 1.442695
        %v1263 = vpow.pop %v1262
        %v1264 = vmul.f32 %v1193, 1.442695
        %v1265 = vpow.pop %v1264
        %v1266 = vmul.f32 %v1194, 1.442695
        %v1267 = vpow.pop %v1266
        %v1268 = vmul.f32 %v1195, 1.442695
        %v1269 = vpow.pop %v1268
        %v1270 = vmul.f32 %v1196, 1.442695
        %v1271 = vpow.pop %v1270
        %v1272 = vmul.f32 %v1197, 1.442695
        %v1273 = vpow.pop %v1272
        %v1274 = vmul.f32 %v1198, 1.442695
        %v1275 = vpow.pop %v1274
        %v1276 = vmul.f32 %v1199, 1.442695
        %v1277 = vpow.pop %v1276
        %v1278 = vmul.f32 %v1200, 1.442695
        %v1279 = vpow.pop %v1278
        %v1280 = vmul.f32 %v1201, 1.442695
        %v1281 = vpow.pop %v1280
        %v1282 = vsel %vm560, %v1205, 0.0
        %v1283 = vadd.f32 %v1203, %v1282
        %1284 = vadd.xlane.f32.xlu0 %v1283
        %v1285 = vpop.xlane.xlu0 %1284
        %v1286 = vsel %vm560, %v1209, 0.0
        %v1287 = vadd.f32 %v1207, %v1286
        %1288 = vadd.xlane.f32.xlu0 %v1287
        %v1289 = vpop.xlane.xlu0 %1288
        %v1290 = vsel %vm560, %v1213, 0.0
        %v1291 = vadd.f32 %v1211, %v1290
        %1292 = vadd.xlane.f32.xlu0 %v1291
        %v1293 = vpop.xlane.xlu0 %1292
        %v1294 = vsel %vm560, %v1217, 0.0
        %v1295 = vadd.f32 %v1215, %v1294
        %1296 = vadd.xlane.f32.xlu0 %v1295
        %v1297 = vpop.xlane.xlu0 %1296
        %v1298 = vsel %vm560, %v1221, 0.0
        %v1299 = vadd.f32 %v1219, %v1298
        %1300 = vadd.xlane.f32.xlu0 %v1299
        %v1301 = vpop.xlane.xlu0 %1300
        %v1302 = vsel %vm560, %v1225, 0.0
        %v1303 = vadd.f32 %v1223, %v1302
        %1304 = vadd.xlane.f32.xlu0 %v1303
        %v1305 = vpop.xlane.xlu0 %1304
        %v1306 = vsel %vm560, %v1229, 0.0
        %v1307 = vadd.f32 %v1227, %v1306
        %1308 = vadd.xlane.f32.xlu0 %v1307
        %v1309 = vpop.xlane.xlu0 %1308
        %v1310 = vsel %vm560, %v1233, 0.0
        %v1311 = vadd.f32 %v1231, %v1310
        %1312 = vadd.xlane.f32.xlu0 %v1311
        %v1313 = vpop.xlane.xlu0 %1312
        %v1314 = vsel %vm560, %v1237, 0.0
        %v1315 = vadd.f32 %v1235, %v1314
        %1316 = vadd.xlane.f32.xlu0 %v1315
        %v1317 = vpop.xlane.xlu0 %1316
        %v1318 = vsel %vm560, %v1241, 0.0
        %v1319 = vadd.f32 %v1239, %v1318
        %1320 = vadd.xlane.f32.xlu0 %v1319
        %v1321 = vpop.xlane.xlu0 %1320
        %v1322 = vsel %vm560, %v1245, 0.0
        %v1323 = vadd.f32 %v1243, %v1322
        %1324 = vadd.xlane.f32.xlu0 %v1323
        %v1325 = vpop.xlane.xlu0 %1324
        %v1326 = vsel %vm560, %v1249, 0.0
        %v1327 = vadd.f32 %v1247, %v1326
        %1328 = vadd.xlane.f32.xlu0 %v1327
        %v1329 = vpop.xlane.xlu0 %1328
        %v1330 = vsel %vm560, %v1253, 0.0
        %v1331 = vadd.f32 %v1251, %v1330
        %1332 = vadd.xlane.f32.xlu0 %v1331
        %v1333 = vpop.xlane.xlu0 %1332
        %v1334 = vsel %vm560, %v1257, 0.0
        %v1335 = vadd.f32 %v1255, %v1334
        %1336 = vadd.xlane.f32.xlu0 %v1335
        %v1337 = vpop.xlane.xlu0 %1336
        %v1338 = vsel %vm560, %v1261, 0.0
        %v1339 = vadd.f32 %v1259, %v1338
        %1340 = vadd.xlane.f32.xlu0 %v1339
        %v1341 = vpop.xlane.xlu0 %1340
        %v1342 = vsel %vm560, %v1265, 0.0
        %v1343 = vadd.f32 %v1263, %v1342
        %1344 = vadd.xlane.f32.xlu0 %v1343
        %v1345 = vpop.xlane.xlu0 %1344
        %v1346 = vsel %vm560, %v1269, 0.0
        %v1347 = vadd.f32 %v1267, %v1346
        %1348 = vadd.xlane.f32.xlu0 %v1347
        %v1349 = vpop.xlane.xlu0 %1348
        %v1350 = vsel %vm560, %v1273, 0.0
        %v1351 = vadd.f32 %v1271, %v1350
        %1352 = vadd.xlane.f32.xlu0 %v1351
        %v1353 = vpop.xlane.xlu0 %1352
        %v1354 = vsel %vm560, %v1277, 0.0
        %v1355 = vadd.f32 %v1275, %v1354
        %1356 = vadd.xlane.f32.xlu0 %v1355
        %v1357 = vpop.xlane.xlu0 %1356
        %v1358 = vsel %vm560, %v1281, 0.0
        %v1359 = vadd.f32 %v1279, %v1358
        %1360 = vadd.xlane.f32.xlu0 %v1359
        %v1361 = vpop.xlane.xlu0 %1360
        %v1362 = vrcp.pop %v1285
        %v1363 = vrcp.pop %v1289
        %v1364 = vrcp.pop %v1293
        %v1365 = vrcp.pop %v1297
        %v1366 = vrcp.pop %v1301
        %v1367 = vrcp.pop %v1305
        %v1368 = vrcp.pop %v1309
        %v1369 = vrcp.pop %v1313
        %v1370 = vrcp.pop %v1317
        %v1371 = vrcp.pop %v1321
        %v1372 = vrcp.pop %v1325
        %v1373 = vrcp.pop %v1329
        %v1374 = vrcp.pop %v1333
        %v1375 = vrcp.pop %v1337
        %v1376 = vrcp.pop %v1341
        %v1377 = vrcp.pop %v1345
        %v1378 = vrcp.pop %v1349
        %v1379 = vrcp.pop %v1353
        %v1380 = vrcp.pop %v1357
        %v1381 = vrcp.pop %v1361
        %v1382 = vmul.f32 %v1203, %v1362
        %v1383 = vmul.f32 %v1205, %v1362
        %v1384 = vmul.f32 %v1207, %v1363
        %v1385 = vmul.f32 %v1209, %v1363
        %v1386 = vmul.f32 %v1211, %v1364
        %v1387 = vmul.f32 %v1213, %v1364
        %v1388 = vmul.f32 %v1215, %v1365
        %v1389 = vmul.f32 %v1217, %v1365
        %v1390 = vmul.f32 %v1219, %v1366
        %v1391 = vmul.f32 %v1221, %v1366
        %v1392 = vmul.f32 %v1223, %v1367
        %v1393 = vmul.f32 %v1225, %v1367
        %v1394 = vmul.f32 %v1227, %v1368
        %v1395 = vmul.f32 %v1229, %v1368
        %v1396 = vmul.f32 %v1231, %v1369
        %v1397 = vmul.f32 %v1233, %v1369
        %v1398 = vmul.f32 %v1235, %v1370
        %v1399 = vmul.f32 %v1237, %v1370
        %v1400 = vmul.f32 %v1239, %v1371
        %v1401 = vmul.f32 %v1241, %v1371
        %v1402 = vmul.f32 %v1243, %v1372
        %v1403 = vmul.f32 %v1245, %v1372
        %v1404 = vmul.f32 %v1247, %v1373
        %v1405 = vmul.f32 %v1249, %v1373
        %v1406 = vmul.f32 %v1251, %v1374
        %v1407 = vmul.f32 %v1253, %v1374
        %v1408 = vmul.f32 %v1255, %v1375
        %v1409 = vmul.f32 %v1257, %v1375
        %v1410 = vmul.f32 %v1259, %v1376
        %v1411 = vmul.f32 %v1261, %v1376
        %v1412 = vmul.f32 %v1263, %v1377
        %v1413 = vmul.f32 %v1265, %v1377
        %v1414 = vmul.f32 %v1267, %v1378
        %v1415 = vmul.f32 %v1269, %v1378
        %v1416 = vmul.f32 %v1271, %v1379
        %v1417 = vmul.f32 %v1273, %v1379
        %v1418 = vmul.f32 %v1275, %v1380
        %v1419 = vmul.f32 %v1277, %v1380
        %v1420 = vmul.f32 %v1279, %v1381
        %v1421 = vmul.f32 %v1281, %v1381
        %v1422 = vpack.c.bf16 %v1384, %v1382
        %v1423 = vpack.c.bf16 %v1385, %v1383
        %v1424 = vpack.c.bf16 %v1388, %v1386
        %v1425 = vpack.c.bf16 %v1389, %v1387
        %v1426 = vpack.c.bf16 %v1392, %v1390
        %v1427 = vpack.c.bf16 %v1393, %v1391
        %v1428 = vpack.c.bf16 %v1396, %v1394
        %v1429 = vpack.c.bf16 %v1397, %v1395
        %v1430 = vpack.c.bf16 %v1400, %v1398
        %v1431 = vpack.c.bf16 %v1401, %v1399
        %v1432 = vpack.c.bf16 %v1404, %v1402
        %v1433 = vpack.c.bf16 %v1405, %v1403
        %v1434 = vpack.c.bf16 %v1408, %v1406
        %v1435 = vpack.c.bf16 %v1409, %v1407
        %v1436 = vpack.c.bf16 %v1412, %v1410
        %v1437 = vpack.c.bf16 %v1413, %v1411
        %v1438 = vpack.c.bf16 %v1416, %v1414
        %v1439 = vpack.c.bf16 %v1417, %v1415
        %v1440 = vpack.c.bf16 %v1420, %v1418
        %v1441 = vpack.c.bf16 %v1421, %v1419
        %v1443 = vsel %vm560, %v1423, 0
        %v1446 = vsel %vm560, %v1425, 0
        %v1449 = vsel %vm560, %v1427, 0
        %v1452 = vsel %vm560, %v1429, 0
        %v1455 = vsel %vm560, %v1431, 0
        %v1458 = vsel %vm560, %v1433, 0
        %v1461 = vsel %vm560, %v1435, 0
        %v1464 = vsel %vm560, %v1437, 0
        %v1467 = vsel %vm560, %v1439, 0
        %v1470 = vsel %vm560, %v1441, 0
        %1472 = vmatprep.subr.bf16.mxu0 0
        %1473 = vmatpush1.bf16.msra.mxu0 %v543
        %1474 = vmatprep.subr.bf16.mxu0 0
        %1475 = vmatpush1.bf16.msra.mxu0 %v544
        %1476 = vmatprep.subr.bf16.mxu0 0
        %1477 = vmatpush1.bf16.msra.mxu0 %v545
        %1478 = vmatprep.subr.bf16.mxu0 0
        %1479 = vmatpush1.bf16.msra.mxu0 %v546
        %1480 = vmatprep.subr.bf16.mxu0 0
        %1481 = vmatpush1.bf16.msra.mxu0 %v547
        %1482 = vmatprep.subr.bf16.mxu0 0
        %1483 = vmatpush1.bf16.msra.mxu0 %v548
        %1484 = vmatprep.subr.bf16.mxu0 0
        %1485 = vmatpush1.bf16.msra.mxu0 %v549
        %1486 = vmatprep.subr.bf16.mxu0 0
        %1487 = vmatpush1.bf16.msra.mxu0 %v550
        %1488 = vmatprep.subr.bf16.mxu0 0
        %1489 = vmatpush1.bf16.msra.mxu0 %v551
        %1490 = vmatprep.subr.bf16.mxu0 0
        %1491 = vmatpush1.bf16.msra.mxu0 %v552
        %1492 = vmatprep.subr.bf16.mxu0 0
        %1493 = vmatpush1.bf16.msra.mxu0 0
        %1494 = vmatprep.subr.bf16.mxu0 0
        %1495 = vmatpush1.bf16.msra.mxu0 0
        %1496 = vmatprep.subr.bf16.mxu0 0
        %1497 = vmatpush1.bf16.msra.mxu0 0
        %1498 = vmatprep.subr.bf16.mxu0 0
        %1499 = vmatpush1.bf16.msra.mxu0 0
        %1500 = vmatprep.subr.bf16.mxu0 0
        %1501 = vmatpush1.bf16.msra.mxu0 0
        %1502 = vmatprep.subr.bf16.mxu0 0
        %1503 = vmatpush1.bf16.msra.mxu0 0
        %1504 = vmatprep.mubr.bf16.mxu0 %v1443
        %1505 = vmatmul.mubr.bf16.gmra.mrb[0].mxu0 %v1422
        %v1506 = vpop.f32.mrb[0].mxu0
        %v1507 = vadd.f32 0.0, %v1506
        %v1508 = vpop.f32.mrb[0].mxu0
        %v1509 = vpop.f32.mrb[0].mxu0
        %v1510 = vadd.f32 0.0, %v1509
        %v1511 = vpop.f32.mrb[0].mxu0
        %1512 = vmatprep.mubr.bf16.mxu0 %v1446
        %1513 = vmatmul.mubr.bf16.gmra.mrb[0].mxu0 %v1424
        %v1514 = vpop.f32.mrb[0].mxu0
        %v1515 = vadd.f32 0.0, %v1514
        %v1516 = vpop.f32.mrb[0].mxu0
        %v1517 = vpop.f32.mrb[0].mxu0
        %v1518 = vadd.f32 0.0, %v1517
        %v1519 = vpop.f32.mrb[0].mxu0
        %1520 = vmatprep.mubr.bf16.mxu0 %v1449
        %1521 = vmatmul.mubr.bf16.gmra.mrb[0].mxu0 %v1426
        %v1522 = vpop.f32.mrb[0].mxu0
        %v1523 = vadd.f32 0.0, %v1522
        %v1524 = vpop.f32.mrb[0].mxu0
        %v1525 = vpop.f32.mrb[0].mxu0
        %v1526 = vadd.f32 0.0, %v1525
        %v1527 = vpop.f32.mrb[0].mxu0
        %1528 = vmatprep.mubr.bf16.mxu0 %v1452
        %1529 = vmatmul.mubr.bf16.gmra.mrb[0].mxu0 %v1428
        %v1530 = vpop.f32.mrb[0].mxu0
        %v1531 = vadd.f32 0.0, %v1530
        %v1532 = vpop.f32.mrb[0].mxu0
        %v1533 = vpop.f32.mrb[0].mxu0
        %v1534 = vadd.f32 0.0, %v1533
        %v1535 = vpop.f32.mrb[0].mxu0
        %1536 = vmatprep.mubr.bf16.mxu0 %v1455
        %1537 = vmatmul.mubr.bf16.gmra.mrb[0].mxu0 %v1430
        %v1538 = vpop.f32.mrb[0].mxu0
        %v1539 = vadd.f32 0.0, %v1538
        %v1540 = vpop.f32.mrb[0].mxu0
        %v1541 = vpop.f32.mrb[0].mxu0
        %v1542 = vadd.f32 0.0, %v1541
        %v1543 = vpop.f32.mrb[0].mxu0
        %1544 = vmatprep.mubr.bf16.mxu0 %v1458
        %1545 = vmatmul.mubr.bf16.gmra.mrb[0].mxu0 %v1432
        %v1546 = vpop.f32.mrb[0].mxu0
        %v1547 = vadd.f32 0.0, %v1546
        %v1548 = vpop.f32.mrb[0].mxu0
        %v1549 = vpop.f32.mrb[0].mxu0
        %v1550 = vadd.f32 0.0, %v1549
        %v1551 = vpop.f32.mrb[0].mxu0
        %1552 = vmatprep.mubr.bf16.mxu0 %v1461
        %1553 = vmatmul.mubr.bf16.gmra.mrb[0].mxu0 %v1434
        %v1554 = vpop.f32.mrb[0].mxu0
        %v1555 = vadd.f32 0.0, %v1554
        %v1556 = vpop.f32.mrb[0].mxu0
        %v1557 = vpop.f32.mrb[0].mxu0
        %v1558 = vadd.f32 0.0, %v1557
        %v1559 = vpop.f32.mrb[0].mxu0
        %1560 = vmatprep.mubr.bf16.mxu0 %v1464
        %1561 = vmatmul.mubr.bf16.gmra.mrb[0].mxu0 %v1436
        %v1562 = vpop.f32.mrb[0].mxu0
        %v1563 = vadd.f32 0.0, %v1562
        %v1564 = vpop.f32.mrb[0].mxu0
        %v1565 = vpop.f32.mrb[0].mxu0
        %v1566 = vadd.f32 0.0, %v1565
        %v1567 = vpop.f32.mrb[0].mxu0
        %1568 = vmatprep.mubr.bf16.mxu0 %v1467
        %1569 = vmatmul.mubr.bf16.gmra.mrb[0].mxu0 %v1438
        %v1570 = vpop.f32.mrb[0].mxu0
        %v1571 = vadd.f32 0.0, %v1570
        %v1572 = vpop.f32.mrb[0].mxu0
        %v1573 = vpop.f32.mrb[0].mxu0
        %v1574 = vadd.f32 0.0, %v1573
        %v1575 = vpop.f32.mrb[0].mxu0
        %1576 = vmatprep.mubr.bf16.mxu0 %v1470
        %1577 = vmatmul.mubr.bf16.gmra.mrb[0].mxu0 %v1440
        %v1578 = vpop.f32.mrb[0].mxu0
        %v1579 = vadd.f32 0.0, %v1578
        %v1580 = vpop.f32.mrb[0].mxu0
        %v1581 = vpop.f32.mrb[0].mxu0
        %v1582 = vadd.f32 0.0, %v1581
        %v1583 = vpop.f32.mrb[0].mxu0
        %1584 = vdwg.mxu0
        %v1585 = vld [vmem:[%s350] sm:$0xff]
        %v1586 = vld [vmem:[%s350 + $0x8] sm:$0xff]
        %v1587 = vld [vmem:[%s350 + $0x10] sm:$0xff]
        %v1588 = vld [vmem:[%s350 + $0x18] sm:$0xff]
        %v1589 = vld [vmem:[%s350 + $0x20] sm:$0xff]
        %v1590 = vld [vmem:[%s350 + $0x28] sm:$0xff]
        %v1591 = vld [vmem:[%s350 + $0x30] sm:$0xff]
        %v1592 = vld [vmem:[%s350 + $0x38] sm:$0xff]
        %v1593 = vld [vmem:[%s350 + $0x40] sm:$0xff]
        %v1594 = vld [vmem:[%s350 + $0x48] sm:$0xff]
        %v1595 = vld [vmem:[%s350 + $0x50] sm:$0xff]
        %v1596 = vld [vmem:[%s350 + $0x58] sm:$0xff]
        %v1597 = vld [vmem:[%s350 + $0x60] sm:$0xff]
        %v1598 = vld [vmem:[%s350 + $0x68] sm:$0xff]
        %v1599 = vld [vmem:[%s350 + $0x70] sm:$0xff]
        %v1600 = vld [vmem:[%s350 + $0x78] sm:$0xff]
        %v1601 = vld [vmem:[%s350 + $0x80] sm:$0xff]
        %v1602 = vld [vmem:[%s350 + $0x88] sm:$0xff]
        %v1603 = vld [vmem:[%s350 + $0x90] sm:$0xff]
        %v1604 = vld [vmem:[%s350 + $0x98] sm:$0xff]
        %1606 = vset.pattern.permute.xlu0 0
        %1607 = vperm.xlu0 %1606, %v1585
        %v1608 = vpop.permute.xlu0 %1607
        %1611 = vset.pattern.permute.xlu0 0
        %1612 = vperm.xlu0 %1611, %v1586
        %v1613 = vpop.permute.xlu0 %1612
        %1616 = vset.pattern.permute.xlu0 0
        %1617 = vperm.xlu0 %1616, %v1587
        %v1618 = vpop.permute.xlu0 %1617
        %1621 = vset.pattern.permute.xlu0 0
        %1622 = vperm.xlu0 %1621, %v1588
        %v1623 = vpop.permute.xlu0 %1622
        %1626 = vset.pattern.permute.xlu0 0
        %1627 = vperm.xlu0 %1626, %v1589
        %v1628 = vpop.permute.xlu0 %1627
        %1631 = vset.pattern.permute.xlu0 0
        %1632 = vperm.xlu0 %1631, %v1590
        %v1633 = vpop.permute.xlu0 %1632
        %1636 = vset.pattern.permute.xlu0 0
        %1637 = vperm.xlu0 %1636, %v1591
        %v1638 = vpop.permute.xlu0 %1637
        %1641 = vset.pattern.permute.xlu0 0
        %1642 = vperm.xlu0 %1641, %v1592
        %v1643 = vpop.permute.xlu0 %1642
        %1646 = vset.pattern.permute.xlu0 0
        %1647 = vperm.xlu0 %1646, %v1593
        %v1648 = vpop.permute.xlu0 %1647
        %1651 = vset.pattern.permute.xlu0 0
        %1652 = vperm.xlu0 %1651, %v1594
        %v1653 = vpop.permute.xlu0 %1652
        %1656 = vset.pattern.permute.xlu0 0
        %1657 = vperm.xlu0 %1656, %v1595
        %v1658 = vpop.permute.xlu0 %1657
        %1661 = vset.pattern.permute.xlu0 0
        %1662 = vperm.xlu0 %1661, %v1596
        %v1663 = vpop.permute.xlu0 %1662
        %1666 = vset.pattern.permute.xlu0 0
        %1667 = vperm.xlu0 %1666, %v1597
        %v1668 = vpop.permute.xlu0 %1667
        %1671 = vset.pattern.permute.xlu0 0
        %1672 = vperm.xlu0 %1671, %v1598
        %v1673 = vpop.permute.xlu0 %1672
        %1676 = vset.pattern.permute.xlu0 0
        %1677 = vperm.xlu0 %1676, %v1599
        %v1678 = vpop.permute.xlu0 %1677
        %1681 = vset.pattern.permute.xlu0 0
        %1682 = vperm.xlu0 %1681, %v1600
        %v1683 = vpop.permute.xlu0 %1682
        %1686 = vset.pattern.permute.xlu0 0
        %1687 = vperm.xlu0 %1686, %v1601
        %v1688 = vpop.permute.xlu0 %1687
        %1691 = vset.pattern.permute.xlu0 0
        %1692 = vperm.xlu0 %1691, %v1602
        %v1693 = vpop.permute.xlu0 %1692
        %1696 = vset.pattern.permute.xlu0 0
        %1697 = vperm.xlu0 %1696, %v1603
        %v1698 = vpop.permute.xlu0 %1697
        %1701 = vset.pattern.permute.xlu0 0
        %1702 = vperm.xlu0 %1701, %v1604
        %v1703 = vpop.permute.xlu0 %1702
        %v1705 = vmul.f32 %v1507, %v1608
        %v1706 = vmul.f32 %v1510, %v1613
        %v1707 = vmul.f32 %v1515, %v1618
        %v1708 = vmul.f32 %v1518, %v1623
        %v1709 = vmul.f32 %v1523, %v1628
        %v1710 = vmul.f32 %v1526, %v1633
        %v1711 = vmul.f32 %v1531, %v1638
        %v1712 = vmul.f32 %v1534, %v1643
        %v1713 = vmul.f32 %v1539, %v1648
        %v1714 = vmul.f32 %v1542, %v1653
        %v1715 = vmul.f32 %v1547, %v1658
        %v1716 = vmul.f32 %v1550, %v1663
        %v1717 = vmul.f32 %v1555, %v1668
        %v1718 = vmul.f32 %v1558, %v1673
        %v1719 = vmul.f32 %v1563, %v1678
        %v1720 = vmul.f32 %v1566, %v1683
        %v1721 = vmul.f32 %v1571, %v1688
        %v1722 = vmul.f32 %v1574, %v1693
        %v1723 = vmul.f32 %v1579, %v1698
        %v1724 = vmul.f32 %v1582, %v1703
        %v1725 = vadd.f32 %v1705, %v461
        %v1726 = vadd.f32 %v1706, %v464
        %v1727 = vadd.f32 %v1707, %v469
        %v1728 = vadd.f32 %v1708, %v472
        %v1729 = vadd.f32 %v1709, %v477
        %v1730 = vadd.f32 %v1710, %v480
        %v1731 = vadd.f32 %v1711, %v485
        %v1732 = vadd.f32 %v1712, %v488
        %v1733 = vadd.f32 %v1713, %v493
        %v1734 = vadd.f32 %v1714, %v496
        %v1735 = vadd.f32 %v1715, %v501
        %v1736 = vadd.f32 %v1716, %v504
        %v1737 = vadd.f32 %v1717, %v509
        %v1738 = vadd.f32 %v1718, %v512
        %v1739 = vadd.f32 %v1719, %v517
        %v1740 = vadd.f32 %v1720, %v520
        %v1741 = vadd.f32 %v1721, %v525
        %v1742 = vadd.f32 %v1722, %v528
        %v1743 = vadd.f32 %v1723, %v533
        %v1744 = vadd.f32 %v1724, %v536
        %v1745 = vld [vmem:[%s3 + $0xb8] sm:$0x1]
        %v1746 = vld [vmem:[%s3 + $0xc0] sm:$0x1]
        %v1747 = vsel %vm560, %v1725, 0.0
        %1748 = vadd.xlane.f32.xlu0 %v1747
        %v1749 = vpop.xlane.xlu0 %1748
        %v1750 = vsel %vm560, %v1726, 0.0
        %1751 = vadd.xlane.f32.xlu0 %v1750
        %v1752 = vpop.xlane.xlu0 %1751
        %v1753 = vsel %vm560, %v1727, 0.0
        %1754 = vadd.xlane.f32.xlu0 %v1753
        %v1755 = vpop.xlane.xlu0 %1754
        %v1756 = vsel %vm560, %v1728, 0.0
        %1757 = vadd.xlane.f32.xlu0 %v1756
        %v1758 = vpop.xlane.xlu0 %1757
        %v1759 = vsel %vm560, %v1729, 0.0
        %1760 = vadd.xlane.f32.xlu0 %v1759
        %v1761 = vpop.xlane.xlu0 %1760
        %v1762 = vsel %vm560, %v1730, 0.0
        %1763 = vadd.xlane.f32.xlu0 %v1762
        %v1764 = vpop.xlane.xlu0 %1763
        %v1765 = vsel %vm560, %v1731, 0.0
        %1766 = vadd.xlane.f32.xlu0 %v1765
        %v1767 = vpop.xlane.xlu0 %1766
        %v1768 = vsel %vm560, %v1732, 0.0
        %1769 = vadd.xlane.f32.xlu0 %v1768
        %v1770 = vpop.xlane.xlu0 %1769
        %v1771 = vsel %vm560, %v1733, 0.0
        %1772 = vadd.xlane.f32.xlu0 %v1771
        %v1773 = vpop.xlane.xlu0 %1772
        %v1774 = vsel %vm560, %v1734, 0.0
        %1775 = vadd.xlane.f32.xlu0 %v1774
        %v1776 = vpop.xlane.xlu0 %1775
        %v1777 = vsel %vm560, %v1735, 0.0
        %1778 = vadd.xlane.f32.xlu0 %v1777
        %v1779 = vpop.xlane.xlu0 %1778
        %v1780 = vsel %vm560, %v1736, 0.0
        %1781 = vadd.xlane.f32.xlu0 %v1780
        %v1782 = vpop.xlane.xlu0 %1781
        %v1783 = vsel %vm560, %v1737, 0.0
        %1784 = vadd.xlane.f32.xlu0 %v1783
        %v1785 = vpop.xlane.xlu0 %1784
        %v1786 = vsel %vm560, %v1738, 0.0
        %1787 = vadd.xlane.f32.xlu0 %v1786
        %v1788 = vpop.xlane.xlu0 %1787
        %v1789 = vsel %vm560, %v1739, 0.0
        %1790 = vadd.xlane.f32.xlu0 %v1789
        %v1791 = vpop.xlane.xlu0 %1790
        %v1792 = vsel %vm560, %v1740, 0.0
        %1793 = vadd.xlane.f32.xlu0 %v1792
        %v1794 = vpop.xlane.xlu0 %1793
        %v1795 = vsel %vm560, %v1741, 0.0
        %1796 = vadd.xlane.f32.xlu0 %v1795
        %v1797 = vpop.xlane.xlu0 %1796
        %v1798 = vsel %vm560, %v1742, 0.0
        %1799 = vadd.xlane.f32.xlu0 %v1798
        %v1800 = vpop.xlane.xlu0 %1799
        %v1801 = vsel %vm560, %v1743, 0.0
        %1802 = vadd.xlane.f32.xlu0 %v1801
        %v1803 = vpop.xlane.xlu0 %1802
        %v1804 = vsel %vm560, %v1744, 0.0
        %1805 = vadd.xlane.f32.xlu0 %v1804
        %v1806 = vpop.xlane.xlu0 %1805
        %v1807 = vrcp.pop 32.0
        %v1808 = vmul.f32 %v1749, %v1807
        %v1809 = vmul.f32 %v1752, %v1807
        %v1810 = vmul.f32 %v1755, %v1807
        %v1811 = vmul.f32 %v1758, %v1807
        %v1812 = vmul.f32 %v1761, %v1807
        %v1813 = vmul.f32 %v1764, %v1807
        %v1814 = vmul.f32 %v1767, %v1807
        %v1815 = vmul.f32 %v1770, %v1807
        %v1816 = vmul.f32 %v1773, %v1807
        %v1817 = vmul.f32 %v1776, %v1807
        %v1818 = vmul.f32 %v1779, %v1807
        %v1819 = vmul.f32 %v1782, %v1807
        %v1820 = vmul.f32 %v1785, %v1807
        %v1821 = vmul.f32 %v1788, %v1807
        %v1822 = vmul.f32 %v1791, %v1807
        %v1823 = vmul.f32 %v1794, %v1807
        %v1824 = vmul.f32 %v1797, %v1807
        %v1825 = vmul.f32 %v1800, %v1807
        %v1826 = vmul.f32 %v1803, %v1807
        %v1827 = vmul.f32 %v1806, %v1807
        %v1828 = vsub.f32 %v1725, %v1808
        %v1829 = vsub.f32 %v1726, %v1809
        %v1830 = vsub.f32 %v1727, %v1810
        %v1831 = vsub.f32 %v1728, %v1811
        %v1832 = vsub.f32 %v1729, %v1812
        %v1833 = vsub.f32 %v1730, %v1813
        %v1834 = vsub.f32 %v1731, %v1814
        %v1835 = vsub.f32 %v1732, %v1815
        %v1836 = vsub.f32 %v1733, %v1816
        %v1837 = vsub.f32 %v1734, %v1817
        %v1838 = vsub.f32 %v1735, %v1818
        %v1839 = vsub.f32 %v1736, %v1819
        %v1840 = vsub.f32 %v1737, %v1820
        %v1841 = vsub.f32 %v1738, %v1821
        %v1842 = vsub.f32 %v1739, %v1822
        %v1843 = vsub.f32 %v1740, %v1823
        %v1844 = vsub.f32 %v1741, %v1824
        %v1845 = vsub.f32 %v1742, %v1825
        %v1846 = vsub.f32 %v1743, %v1826
        %v1847 = vsub.f32 %v1744, %v1827
        %v1848 = vmul.f32 %v1828, %v1828
        %v1849 = vmul.f32 %v1829, %v1829
        %v1850 = vmul.f32 %v1830, %v1830
        %v1851 = vmul.f32 %v1831, %v1831
        %v1852 = vmul.f32 %v1832, %v1832
        %v1853 = vmul.f32 %v1833, %v1833
        %v1854 = vmul.f32 %v1834, %v1834
        %v1855 = vmul.f32 %v1835, %v1835
        %v1856 = vmul.f32 %v1836, %v1836
        %v1857 = vmul.f32 %v1837, %v1837
        %v1858 = vmul.f32 %v1838, %v1838
        %v1859 = vmul.f32 %v1839, %v1839
        %v1860 = vmul.f32 %v1840, %v1840
        %v1861 = vmul.f32 %v1841, %v1841
        %v1862 = vmul.f32 %v1842, %v1842
        %v1863 = vmul.f32 %v1843, %v1843
        %v1864 = vmul.f32 %v1844, %v1844
        %v1865 = vmul.f32 %v1845, %v1845
        %v1866 = vmul.f32 %v1846, %v1846
        %v1867 = vmul.f32 %v1847, %v1847
        %v1868 = vsel %vm560, %v1848, 0.0
        %1869 = vadd.xlane.f32.xlu0 %v1868
        %v1870 = vpop.xlane.xlu0 %1869
        %v1871 = vsel %vm560, %v1849, 0.0
        %1872 = vadd.xlane.f32.xlu0 %v1871
        %v1873 = vpop.xlane.xlu0 %1872
        %v1874 = vsel %vm560, %v1850, 0.0
        %1875 = vadd.xlane.f32.xlu0 %v1874
        %v1876 = vpop.xlane.xlu0 %1875
        %v1877 = vsel %vm560, %v1851, 0.0
        %1878 = vadd.xlane.f32.xlu0 %v1877
        %v1879 = vpop.xlane.xlu0 %1878
        %v1880 = vsel %vm560, %v1852, 0.0
        %1881 = vadd.xlane.f32.xlu0 %v1880
        %v1882 = vpop.xlane.xlu0 %1881
        %v1883 = vsel %vm560, %v1853, 0.0
        %1884 = vadd.xlane.f32.xlu0 %v1883
        %v1885 = vpop.xlane.xlu0 %1884
        %v1886 = vsel %vm560, %v1854, 0.0
        %1887 = vadd.xlane.f32.xlu0 %v1886
        %v1888 = vpop.xlane.xlu0 %1887
        %v1889 = vsel %vm560, %v1855, 0.0
        %1890 = vadd.xlane.f32.xlu0 %v1889
        %v1891 = vpop.xlane.xlu0 %1890
        %v1892 = vsel %vm560, %v1856, 0.0
        %1893 = vadd.xlane.f32.xlu0 %v1892
        %v1894 = vpop.xlane.xlu0 %1893
        %v1895 = vsel %vm560, %v1857, 0.0
        %1896 = vadd.xlane.f32.xlu0 %v1895
        %v1897 = vpop.xlane.xlu0 %1896
        %v1898 = vsel %vm560, %v1858, 0.0
        %1899 = vadd.xlane.f32.xlu0 %v1898
        %v1900 = vpop.xlane.xlu0 %1899
        %v1901 = vsel %vm560, %v1859, 0.0
        %1902 = vadd.xlane.f32.xlu0 %v1901
        %v1903 = vpop.xlane.xlu0 %1902
        %v1904 = vsel %vm560, %v1860, 0.0
        %1905 = vadd.xlane.f32.xlu0 %v1904
        %v1906 = vpop.xlane.xlu0 %1905
        %v1907 = vsel %vm560, %v1861, 0.0
        %1908 = vadd.xlane.f32.xlu0 %v1907
        %v1909 = vpop.xlane.xlu0 %1908
        %v1910 = vsel %vm560, %v1862, 0.0
        %1911 = vadd.xlane.f32.xlu0 %v1910
        %v1912 = vpop.xlane.xlu0 %1911
        %v1913 = vsel %vm560, %v1863, 0.0
        %1914 = vadd.xlane.f32.xlu0 %v1913
        %v1915 = vpop.xlane.xlu0 %1914
        %v1916 = vsel %vm560, %v1864, 0.0
        %1917 = vadd.xlane.f32.xlu0 %v1916
        %v1918 = vpop.xlane.xlu0 %1917
        %v1919 = vsel %vm560, %v1865, 0.0
        %1920 = vadd.xlane.f32.xlu0 %v1919
        %v1921 = vpop.xlane.xlu0 %1920
        %v1922 = vsel %vm560, %v1866, 0.0
        %1923 = vadd.xlane.f32.xlu0 %v1922
        %v1924 = vpop.xlane.xlu0 %1923
        %v1925 = vsel %vm560, %v1867, 0.0
        %1926 = vadd.xlane.f32.xlu0 %v1925
        %v1927 = vpop.xlane.xlu0 %1926
        %v1928 = vmul.f32 %v1870, %v1807
        %v1929 = vmul.f32 %v1873, %v1807
        %v1930 = vmul.f32 %v1876, %v1807
        %v1931 = vmul.f32 %v1879, %v1807
        %v1932 = vmul.f32 %v1882, %v1807
        %v1933 = vmul.f32 %v1885, %v1807
        %v1934 = vmul.f32 %v1888, %v1807
        %v1935 = vmul.f32 %v1891, %v1807
        %v1936 = vmul.f32 %v1894, %v1807
        %v1937 = vmul.f32 %v1897, %v1807
        %v1938 = vmul.f32 %v1900, %v1807
        %v1939 = vmul.f32 %v1903, %v1807
        %v1940 = vmul.f32 %v1906, %v1807
        %v1941 = vmul.f32 %v1909, %v1807
        %v1942 = vmul.f32 %v1912, %v1807
        %v1943 = vmul.f32 %v1915, %v1807
        %v1944 = vmul.f32 %v1918, %v1807
        %v1945 = vmul.f32 %v1921, %v1807
        %v1946 = vmul.f32 %v1924, %v1807
        %v1947 = vmul.f32 %v1927, %v1807
        %v1948 = vadd.f32 %v1928, 1e-05
        %v1949 = vadd.f32 %v1929, 1e-05
        %v1950 = vadd.f32 %v1930, 1e-05
        %v1951 = vadd.f32 %v1931, 1e-05
        %v1952 = vadd.f32 %v1932, 1e-05
        %v1953 = vadd.f32 %v1933, 1e-05
        %v1954 = vadd.f32 %v1934, 1e-05
        %v1955 = vadd.f32 %v1935, 1e-05
        %v1956 = vadd.f32 %v1936, 1e-05
        %v1957 = vadd.f32 %v1937, 1e-05
        %v1958 = vadd.f32 %v1938, 1e-05
        %v1959 = vadd.f32 %v1939, 1e-05
        %v1960 = vadd.f32 %v1940, 1e-05
        %v1961 = vadd.f32 %v1941, 1e-05
        %v1962 = vadd.f32 %v1942, 1e-05
        %v1963 = vadd.f32 %v1943, 1e-05
        %v1964 = vadd.f32 %v1944, 1e-05
        %v1965 = vadd.f32 %v1945, 1e-05
        %v1966 = vadd.f32 %v1946, 1e-05
        %v1967 = vadd.f32 %v1947, 1e-05
        %v1968 = vrsqrt.pop %v1948
        %v1969 = vrsqrt.pop %v1949
        %v1970 = vrsqrt.pop %v1950
        %v1971 = vrsqrt.pop %v1951
        %v1972 = vrsqrt.pop %v1952
        %v1973 = vrsqrt.pop %v1953
        %v1974 = vrsqrt.pop %v1954
        %v1975 = vrsqrt.pop %v1955
        %v1976 = vrsqrt.pop %v1956
        %v1977 = vrsqrt.pop %v1957
        %v1978 = vrsqrt.pop %v1958
        %v1979 = vrsqrt.pop %v1959
        %v1980 = vrsqrt.pop %v1960
        %v1981 = vrsqrt.pop %v1961
        %v1982 = vrsqrt.pop %v1962
        %v1983 = vrsqrt.pop %v1963
        %v1984 = vrsqrt.pop %v1964
        %v1985 = vrsqrt.pop %v1965
        %v1986 = vrsqrt.pop %v1966
        %v1987 = vrsqrt.pop %v1967
        %v1988 = vmul.f32 %v1828, %v1968
        %v1989 = vmul.f32 %v1829, %v1969
        %v1990 = vmul.f32 %v1830, %v1970
        %v1991 = vmul.f32 %v1831, %v1971
        %v1992 = vmul.f32 %v1832, %v1972
        %v1993 = vmul.f32 %v1833, %v1973
        %v1994 = vmul.f32 %v1834, %v1974
        %v1995 = vmul.f32 %v1835, %v1975
        %v1996 = vmul.f32 %v1836, %v1976
        %v1997 = vmul.f32 %v1837, %v1977
        %v1998 = vmul.f32 %v1838, %v1978
        %v1999 = vmul.f32 %v1839, %v1979
        %v2000 = vmul.f32 %v1840, %v1980
        %v2001 = vmul.f32 %v1841, %v1981
        %v2002 = vmul.f32 %v1842, %v1982
        %v2003 = vmul.f32 %v1843, %v1983
        %v2004 = vmul.f32 %v1844, %v1984
        %v2005 = vmul.f32 %v1845, %v1985
        %v2006 = vmul.f32 %v1846, %v1986
        %v2007 = vmul.f32 %v1847, %v1987
        %v2008 = vlaneseq
        %v2009 = vshrl.u32 %v2008, 7
        %v2010 = vsub.s32 0, %v2009
        %v2011 = vrot.slane %v1745, %v2010
        %v2012 = vmul.f32 %v1988, %v2011
        %v2013 = vmul.f32 %v1989, %v2011
        %v2014 = vmul.f32 %v1990, %v2011
        %v2015 = vmul.f32 %v1991, %v2011
        %v2016 = vmul.f32 %v1992, %v2011
        %v2017 = vmul.f32 %v1993, %v2011
        %v2018 = vmul.f32 %v1994, %v2011
        %v2019 = vmul.f32 %v1995, %v2011
        %v2020 = vmul.f32 %v1996, %v2011
        %v2021 = vmul.f32 %v1997, %v2011
        %v2022 = vmul.f32 %v1998, %v2011
        %v2023 = vmul.f32 %v1999, %v2011
        %v2024 = vmul.f32 %v2000, %v2011
        %v2025 = vmul.f32 %v2001, %v2011
        %v2026 = vmul.f32 %v2002, %v2011
        %v2027 = vmul.f32 %v2003, %v2011
        %v2028 = vmul.f32 %v2004, %v2011
        %v2029 = vmul.f32 %v2005, %v2011
        %v2030 = vmul.f32 %v2006, %v2011
        %v2031 = vmul.f32 %v2007, %v2011
        %v2032 = vlaneseq
        %v2033 = vshrl.u32 %v2032, 7
        %v2034 = vsub.s32 0, %v2033
        %v2035 = vrot.slane %v1746, %v2034
        %v2036 = vadd.f32 %v2012, %v2035
        %v2037 = vadd.f32 %v2013, %v2035
        %v2038 = vadd.f32 %v2014, %v2035
        %v2039 = vadd.f32 %v2015, %v2035
        %v2040 = vadd.f32 %v2016, %v2035
        %v2041 = vadd.f32 %v2017, %v2035
        %v2042 = vadd.f32 %v2018, %v2035
        %v2043 = vadd.f32 %v2019, %v2035
        %v2044 = vadd.f32 %v2020, %v2035
        %v2045 = vadd.f32 %v2021, %v2035
        %v2046 = vadd.f32 %v2022, %v2035
        %v2047 = vadd.f32 %v2023, %v2035
        %v2048 = vadd.f32 %v2024, %v2035
        %v2049 = vadd.f32 %v2025, %v2035
        %v2050 = vadd.f32 %v2026, %v2035
        %v2051 = vadd.f32 %v2027, %v2035
        %v2052 = vadd.f32 %v2028, %v2035
        %v2053 = vadd.f32 %v2029, %v2035
        %v2054 = vadd.f32 %v2030, %v2035
        %v2055 = vadd.f32 %v2031, %v2035
        %v2056 = vld [vmem:[%s3 + $0xc8] sm:$0xff]
        %v2057 = vld [vmem:[%s3 + $0xd0] sm:$0xff]
        %v2058 = vld [vmem:[%s3 + $0xd8] sm:$0xff]
        %v2059 = vld [vmem:[%s3 + $0xe0] sm:$0xff]
        %v2060 = vpack.c.bf16 %v2037, %v2036
        %v2061 = vpack.c.bf16 %v2039, %v2038
        %v2062 = vpack.c.bf16 %v2041, %v2040
        %v2063 = vpack.c.bf16 %v2043, %v2042
        %v2064 = vpack.c.bf16 %v2045, %v2044
        %v2065 = vpack.c.bf16 %v2047, %v2046
        %v2066 = vpack.c.bf16 %v2049, %v2048
        %v2067 = vpack.c.bf16 %v2051, %v2050
        %v2068 = vpack.c.bf16 %v2053, %v2052
        %v2069 = vpack.c.bf16 %v2055, %v2054
        %v2070 = vpack.c.bf16 %v2057, %v2056
        %v2071 = vpack.c.bf16 %v2059, %v2058
        %v2072 = vld [vmem:[%s3 + $0xe8] sm:$0x1]
        %v2073 = vlaneseq
        %v2074 = vshrl.u32 %v2073, 7
        %v2075 = vsub.s32 0, %v2074
        %v2076 = vrot.slane %v2072, %v2075
        %v2078 = vsel %vm560, %v2060, 0
        %v2081 = vsel %vm560, %v2061, 0
        %v2084 = vsel %vm560, %v2062, 0
        %v2087 = vsel %vm560, %v2063, 0
        %v2090 = vsel %vm560, %v2064, 0
        %v2093 = vsel %vm560, %v2065, 0
        %v2096 = vsel %vm560, %v2066, 0
        %v2099 = vsel %vm560, %v2067, 0
        %v2102 = vsel %vm560, %v2068, 0
        %v2105 = vsel %vm560, %v2069, 0
        %2107 = vmatprep.subr.bf16.mxu0 0
        %2108 = vmatpush1.bf16.msra.mxu0 %v2070
        %2109 = vmatprep.subr.bf16.mxu0 0
        %2110 = vmatpush1.bf16.msra.mxu0 %v2071
        %2111 = vmatprep.subr.bf16.mxu0 0
        %2112 = vmatpush1.bf16.msra.mxu0 0
        %2113 = vmatprep.subr.bf16.mxu0 0
        %2114 = vmatpush1.bf16.msra.mxu0 0
        %2115 = vmatprep.subr.bf16.mxu0 0
        %2116 = vmatpush1.bf16.msra.mxu0 0
        %2117 = vmatprep.subr.bf16.mxu0 0
        %2118 = vmatpush1.bf16.msra.mxu0 0
        %2119 = vmatprep.subr.bf16.mxu0 0
        %2120 = vmatpush1.bf16.msra.mxu0 0
        %2121 = vmatprep.subr.bf16.mxu0 0
        %2122 = vmatpush1.bf16.msra.mxu0 0
        %2123 = vmatprep.subr.bf16.mxu0 0
        %2124 = vmatpush1.bf16.msra.mxu0 0
        %2125 = vmatprep.subr.bf16.mxu0 0
        %2126 = vmatpush1.bf16.msra.mxu0 0
        %2127 = vmatprep.subr.bf16.mxu0 0
        %2128 = vmatpush1.bf16.msra.mxu0 0
        %2129 = vmatprep.subr.bf16.mxu0 0
        %2130 = vmatpush1.bf16.msra.mxu0 0
        %2131 = vmatprep.subr.bf16.mxu0 0
        %2132 = vmatpush1.bf16.msra.mxu0 0
        %2133 = vmatprep.subr.bf16.mxu0 0
        %2134 = vmatpush1.bf16.msra.mxu0 0
        %2135 = vmatprep.subr.bf16.mxu0 0
        %2136 = vmatpush1.bf16.msra.mxu0 0
        %2137 = vmatprep.subr.bf16.mxu0 0
        %2138 = vmatpush1.bf16.msra.mxu0 0
        %2139 = vmatprep.mubr.bf16.mxu0 0
        %2140 = vmatmul.mubr.bf16.gmra.mrb[0].mxu0 %v2078
        %v2141 = vpop.f32.mrb[0].mxu0
        %v2142 = vadd.f32 %v2076, %v2141
        %v2143 = vpop.f32.mrb[0].mxu0
        %v2144 = vpop.f32.mrb[0].mxu0
        %v2145 = vadd.f32 %v2076, %v2144
        %v2146 = vpop.f32.mrb[0].mxu0
        %2147 = vmatprep.mubr.bf16.mxu0 0
        %2148 = vmatmul.mubr.bf16.gmra.mrb[0].mxu0 %v2081
        %v2149 = vpop.f32.mrb[0].mxu0
        %v2150 = vadd.f32 %v2076, %v2149
        %v2151 = vpop.f32.mrb[0].mxu0
        %v2152 = vpop.f32.mrb[0].mxu0
        %v2153 = vadd.f32 %v2076, %v2152
        %v2154 = vpop.f32.mrb[0].mxu0
        %2155 = vmatprep.mubr.bf16.mxu0 0
        %2156 = vmatmul.mubr.bf16.gmra.mrb[0].mxu0 %v2084
        %v2157 = vpop.f32.mrb[0].mxu0
        %v2158 = vadd.f32 %v2076, %v2157
        %v2159 = vpop.f32.mrb[0].mxu0
        %v2160 = vpop.f32.mrb[0].mxu0
        %v2161 = vadd.f32 %v2076, %v2160
        %v2162 = vpop.f32.mrb[0].mxu0
        %2163 = vmatprep.mubr.bf16.mxu0 0
        %2164 = vmatmul.mubr.bf16.gmra.mrb[0].mxu0 %v2087
        %v2165 = vpop.f32.mrb[0].mxu0
        %v2166 = vadd.f32 %v2076, %v2165
        %v2167 = vpop.f32.mrb[0].mxu0
        %v2168 = vpop.f32.mrb[0].mxu0
        %v2169 = vadd.f32 %v2076, %v2168
        %v2170 = vpop.f32.mrb[0].mxu0
        %2171 = vmatprep.mubr.bf16.mxu0 0
        %2172 = vmatmul.mubr.bf16.gmra.mrb[0].mxu0 %v2090
        %v2173 = vpop.f32.mrb[0].mxu0
        %v2174 = vadd.f32 %v2076, %v2173
        %v2175 = vpop.f32.mrb[0].mxu0
        %v2176 = vpop.f32.mrb[0].mxu0
        %v2177 = vadd.f32 %v2076, %v2176
        %v2178 = vpop.f32.mrb[0].mxu0
        %2179 = vmatprep.mubr.bf16.mxu0 0
        %2180 = vmatmul.mubr.bf16.gmra.mrb[0].mxu0 %v2093
        %v2181 = vpop.f32.mrb[0].mxu0
        %v2182 = vadd.f32 %v2076, %v2181
        %v2183 = vpop.f32.mrb[0].mxu0
        %v2184 = vpop.f32.mrb[0].mxu0
        %v2185 = vadd.f32 %v2076, %v2184
        %v2186 = vpop.f32.mrb[0].mxu0
        %2187 = vmatprep.mubr.bf16.mxu0 0
        %2188 = vmatmul.mubr.bf16.gmra.mrb[0].mxu0 %v2096
        %v2189 = vpop.f32.mrb[0].mxu0
        %v2190 = vadd.f32 %v2076, %v2189
        %v2191 = vpop.f32.mrb[0].mxu0
        %v2192 = vpop.f32.mrb[0].mxu0
        %v2193 = vadd.f32 %v2076, %v2192
        %v2194 = vpop.f32.mrb[0].mxu0
        %2195 = vmatprep.mubr.bf16.mxu0 0
        %2196 = vmatmul.mubr.bf16.gmra.mrb[0].mxu0 %v2099
        %v2197 = vpop.f32.mrb[0].mxu0
        %v2198 = vadd.f32 %v2076, %v2197
        %v2199 = vpop.f32.mrb[0].mxu0
        %v2200 = vpop.f32.mrb[0].mxu0
        %v2201 = vadd.f32 %v2076, %v2200
        %v2202 = vpop.f32.mrb[0].mxu0
        %2203 = vmatprep.mubr.bf16.mxu0 0
        %2204 = vmatmul.mubr.bf16.gmra.mrb[0].mxu0 %v2102
        %v2205 = vpop.f32.mrb[0].mxu0
        %v2206 = vadd.f32 %v2076, %v2205
        %v2207 = vpop.f32.mrb[0].mxu0
        %v2208 = vpop.f32.mrb[0].mxu0
        %v2209 = vadd.f32 %v2076, %v2208
        %v2210 = vpop.f32.mrb[0].mxu0
        %2211 = vmatprep.mubr.bf16.mxu0 0
        %2212 = vmatmul.mubr.bf16.gmra.mrb[0].mxu0 %v2105
        %v2213 = vpop.f32.mrb[0].mxu0
        %v2214 = vadd.f32 %v2076, %v2213
        %v2215 = vpop.f32.mrb[0].mxu0
        %v2216 = vpop.f32.mrb[0].mxu0
        %v2217 = vadd.f32 %v2076, %v2216
        %v2218 = vpop.f32.mrb[0].mxu0
        %2219 = vdwg.mxu0
        %v2220 = vmax.f32 %v2142, 0.0
        %v2221 = vmax.f32 %v2145, 0.0
        %v2222 = vmax.f32 %v2150, 0.0
        %v2223 = vmax.f32 %v2153, 0.0
        %v2224 = vmax.f32 %v2158, 0.0
        %v2225 = vmax.f32 %v2161, 0.0
        %v2226 = vmax.f32 %v2166, 0.0
        %v2227 = vmax.f32 %v2169, 0.0
        %v2228 = vmax.f32 %v2174, 0.0
        %v2229 = vmax.f32 %v2177, 0.0
        %v2230 = vmax.f32 %v2182, 0.0
        %v2231 = vmax.f32 %v2185, 0.0
        %v2232 = vmax.f32 %v2190, 0.0
        %v2233 = vmax.f32 %v2193, 0.0
        %v2234 = vmax.f32 %v2198, 0.0
        %v2235 = vmax.f32 %v2201, 0.0
        %v2236 = vmax.f32 %v2206, 0.0
        %v2237 = vmax.f32 %v2209, 0.0
        %v2238 = vmax.f32 %v2214, 0.0
        %v2239 = vmax.f32 %v2217, 0.0
        %v2240 = vld [vmem:[%s3 + $0xf0] sm:$0xff]
        %v2241 = vld [vmem:[%s3 + $0xf8] sm:$0xff]
        %v2242 = vld [vmem:[%s3 + $0x100] sm:$0xff]
        %v2243 = vld [vmem:[%s3 + $0x108] sm:$0xff]
        %v2244 = vld [vmem:[%s3 + $0x110] sm:$0xff]
        %v2245 = vld [vmem:[%s3 + $0x118] sm:$0xff]
        %v2246 = vld [vmem:[%s3 + $0x120] sm:$0xff]
        %v2247 = vld [vmem:[%s3 + $0x128] sm:$0xff]
        %v2248 = vpack.c.bf16 %v2221, %v2220
        %v2249 = vpack.c.bf16 %v2223, %v2222
        %v2250 = vpack.c.bf16 %v2225, %v2224
        %v2251 = vpack.c.bf16 %v2227, %v2226
        %v2252 = vpack.c.bf16 %v2229, %v2228
        %v2253 = vpack.c.bf16 %v2231, %v2230
        %v2254 = vpack.c.bf16 %v2233, %v2232
        %v2255 = vpack.c.bf16 %v2235, %v2234
        %v2256 = vpack.c.bf16 %v2237, %v2236
        %v2257 = vpack.c.bf16 %v2239, %v2238
        %v2258 = vpack.c.bf16 %v2241, %v2240
        %v2259 = vpack.c.bf16 %v2243, %v2242
        %v2260 = vpack.c.bf16 %v2245, %v2244
        %v2261 = vpack.c.bf16 %v2247, %v2246
        %v2262 = vld [vmem:[%s3 + $0x130] sm:$0x1]
        %v2263 = vlaneseq
        %v2264 = vshrl.u32 %v2263, 7
        %v2265 = vsub.s32 0, %v2264
        %v2266 = vrot.slane %v2262, %v2265
        %vm2267 = vcmask 523264
        %v2269 = vsel %vm2267, %v2248, 0
        %v2272 = vsel %vm2267, %v2249, 0
        %v2275 = vsel %vm2267, %v2250, 0
        %v2278 = vsel %vm2267, %v2251, 0
        %v2281 = vsel %vm2267, %v2252, 0
        %v2284 = vsel %vm2267, %v2253, 0
        %v2287 = vsel %vm2267, %v2254, 0
        %v2290 = vsel %vm2267, %v2255, 0
        %v2293 = vsel %vm2267, %v2256, 0
        %v2296 = vsel %vm2267, %v2257, 0
        %2298 = vmatprep.subr.bf16.mxu0 0
        %2299 = vmatpush1.bf16.msra.mxu0 %v2258
        %2300 = vmatprep.subr.bf16.mxu0 0
        %2301 = vmatpush1.bf16.msra.mxu0 %v2259
        %2302 = vmatprep.subr.bf16.mxu0 0
        %2303 = vmatpush1.bf16.msra.mxu0 %v2260
        %2304 = vmatprep.subr.bf16.mxu0 0
        %2305 = vmatpush1.bf16.msra.mxu0 %v2261
        %2306 = vmatprep.subr.bf16.mxu0 0
        %2307 = vmatpush1.bf16.msra.mxu0 0
        %2308 = vmatprep.subr.bf16.mxu0 0
        %2309 = vmatpush1.bf16.msra.mxu0 0
        %2310 = vmatprep.subr.bf16.mxu0 0
        %2311 = vmatpush1.bf16.msra.mxu0 0
        %2312 = vmatprep.subr.bf16.mxu0 0
        %2313 = vmatpush1.bf16.msra.mxu0 0
        %2314 = vmatprep.subr.bf16.mxu0 0
        %2315 = vmatpush1.bf16.msra.mxu0 0
        %2316 = vmatprep.subr.bf16.mxu0 0
        %2317 = vmatpush1.bf16.msra.mxu0 0
        %2318 = vmatprep.subr.bf16.mxu0 0
        %2319 = vmatpush1.bf16.msra.mxu0 0
        %2320 = vmatprep.subr.bf16.mxu0 0
        %2321 = vmatpush1.bf16.msra.mxu0 0
        %2322 = vmatprep.subr.bf16.mxu0 0
        %2323 = vmatpush1.bf16.msra.mxu0 0
        %2324 = vmatprep.subr.bf16.mxu0 0
        %2325 = vmatpush1.bf16.msra.mxu0 0
        %2326 = vmatprep.subr.bf16.mxu0 0
        %2327 = vmatpush1.bf16.msra.mxu0 0
        %2328 = vmatprep.subr.bf16.mxu0 0
        %2329 = vmatpush1.bf16.msra.mxu0 0
        %2330 = vmatprep.mubr.bf16.mxu0 0
        %2331 = vmatmul.mubr.bf16.gmra.mrb[0].mxu0 %v2269
        %v2332 = vpop.f32.mrb[0].mxu0
        %v2333 = vadd.f32 %v2266, %v2332
        %v2334 = vpop.f32.mrb[0].mxu0
        %v2335 = vpop.f32.mrb[0].mxu0
        %v2336 = vadd.f32 %v2266, %v2335
        %v2337 = vpop.f32.mrb[0].mxu0
        %2338 = vmatprep.mubr.bf16.mxu0 0
        %2339 = vmatmul.mubr.bf16.gmra.mrb[0].mxu0 %v2272
        %v2340 = vpop.f32.mrb[0].mxu0
        %v2341 = vadd.f32 %v2266, %v2340
        %v2342 = vpop.f32.mrb[0].mxu0
        %v2343 = vpop.f32.mrb[0].mxu0
        %v2344 = vadd.f32 %v2266, %v2343
        %v2345 = vpop.f32.mrb[0].mxu0
        %2346 = vmatprep.mubr.bf16.mxu0 0
        %2347 = vmatmul.mubr.bf16.gmra.mrb[0].mxu0 %v2275
        %v2348 = vpop.f32.mrb[0].mxu0
        %v2349 = vadd.f32 %v2266, %v2348
        %v2350 = vpop.f32.mrb[0].mxu0
        %v2351 = vpop.f32.mrb[0].mxu0
        %v2352 = vadd.f32 %v2266, %v2351
        %v2353 = vpop.f32.mrb[0].mxu0
        %2354 = vmatprep.mubr.bf16.mxu0 0
        %2355 = vmatmul.mubr.bf16.gmra.mrb[0].mxu0 %v2278
        %v2356 = vpop.f32.mrb[0].mxu0
        %v2357 = vadd.f32 %v2266, %v2356
        %v2358 = vpop.f32.mrb[0].mxu0
        %v2359 = vpop.f32.mrb[0].mxu0
        %v2360 = vadd.f32 %v2266, %v2359
        %v2361 = vpop.f32.mrb[0].mxu0
        %2362 = vmatprep.mubr.bf16.mxu0 0
        %2363 = vmatmul.mubr.bf16.gmra.mrb[0].mxu0 %v2281
        %v2364 = vpop.f32.mrb[0].mxu0
        %v2365 = vadd.f32 %v2266, %v2364
        %v2366 = vpop.f32.mrb[0].mxu0
        %v2367 = vpop.f32.mrb[0].mxu0
        %v2368 = vadd.f32 %v2266, %v2367
        %v2369 = vpop.f32.mrb[0].mxu0
        %2370 = vmatprep.mubr.bf16.mxu0 0
        %2371 = vmatmul.mubr.bf16.gmra.mrb[0].mxu0 %v2284
        %v2372 = vpop.f32.mrb[0].mxu0
        %v2373 = vadd.f32 %v2266, %v2372
        %v2374 = vpop.f32.mrb[0].mxu0
        %v2375 = vpop.f32.mrb[0].mxu0
        %v2376 = vadd.f32 %v2266, %v2375
        %v2377 = vpop.f32.mrb[0].mxu0
        %2378 = vmatprep.mubr.bf16.mxu0 0
        %2379 = vmatmul.mubr.bf16.gmra.mrb[0].mxu0 %v2287
        %v2380 = vpop.f32.mrb[0].mxu0
        %v2381 = vadd.f32 %v2266, %v2380
        %v2382 = vpop.f32.mrb[0].mxu0
        %v2383 = vpop.f32.mrb[0].mxu0
        %v2384 = vadd.f32 %v2266, %v2383
        %v2385 = vpop.f32.mrb[0].mxu0
        %2386 = vmatprep.mubr.bf16.mxu0 0
        %2387 = vmatmul.mubr.bf16.gmra.mrb[0].mxu0 %v2290
        %v2388 = vpop.f32.mrb[0].mxu0
        %v2389 = vadd.f32 %v2266, %v2388
        %v2390 = vpop.f32.mrb[0].mxu0
        %v2391 = vpop.f32.mrb[0].mxu0
        %v2392 = vadd.f32 %v2266, %v2391
        %v2393 = vpop.f32.mrb[0].mxu0
        %2394 = vmatprep.mubr.bf16.mxu0 0
        %2395 = vmatmul.mubr.bf16.gmra.mrb[0].mxu0 %v2293
        %v2396 = vpop.f32.mrb[0].mxu0
        %v2397 = vadd.f32 %v2266, %v2396
        %v2398 = vpop.f32.mrb[0].mxu0
        %v2399 = vpop.f32.mrb[0].mxu0
        %v2400 = vadd.f32 %v2266, %v2399
        %v2401 = vpop.f32.mrb[0].mxu0
        %2402 = vmatprep.mubr.bf16.mxu0 0
        %2403 = vmatmul.mubr.bf16.gmra.mrb[0].mxu0 %v2296
        %v2404 = vpop.f32.mrb[0].mxu0
        %v2405 = vadd.f32 %v2266, %v2404
        %v2406 = vpop.f32.mrb[0].mxu0
        %v2407 = vpop.f32.mrb[0].mxu0
        %v2408 = vadd.f32 %v2266, %v2407
        %v2409 = vpop.f32.mrb[0].mxu0
        %2410 = vdwg.mxu0
        %v2411 = vmax.f32 %v2333, 0.0
        %v2412 = vmax.f32 %v2336, 0.0
        %v2413 = vmax.f32 %v2341, 0.0
        %v2414 = vmax.f32 %v2344, 0.0
        %v2415 = vmax.f32 %v2349, 0.0
        %v2416 = vmax.f32 %v2352, 0.0
        %v2417 = vmax.f32 %v2357, 0.0
        %v2418 = vmax.f32 %v2360, 0.0
        %v2419 = vmax.f32 %v2365, 0.0
        %v2420 = vmax.f32 %v2368, 0.0
        %v2421 = vmax.f32 %v2373, 0.0
        %v2422 = vmax.f32 %v2376, 0.0
        %v2423 = vmax.f32 %v2381, 0.0
        %v2424 = vmax.f32 %v2384, 0.0
        %v2425 = vmax.f32 %v2389, 0.0
        %v2426 = vmax.f32 %v2392, 0.0
        %v2427 = vmax.f32 %v2397, 0.0
        %v2428 = vmax.f32 %v2400, 0.0
        %v2429 = vmax.f32 %v2405, 0.0
        %v2430 = vmax.f32 %v2408, 0.0
        %v2431 = vld [vmem:[%s3 + $0x138] sm:$0xff]
        %v2432 = vld [vmem:[%s3 + $0x140] sm:$0xff]
        %v2433 = vld [vmem:[%s3 + $0x148] sm:$0xff]
        %v2434 = vld [vmem:[%s3 + $0x150] sm:$0xff]
        %v2435 = vld [vmem:[%s3 + $0x158] sm:$0xff]
        %v2436 = vld [vmem:[%s3 + $0x160] sm:$0xff]
        %v2437 = vld [vmem:[%s3 + $0x168] sm:$0xff]
        %v2438 = vld [vmem:[%s3 + $0x170] sm:$0xff]
        %v2439 = vpack.c.bf16 %v2412, %v2411
        %v2440 = vpack.c.bf16 %v2414, %v2413
        %v2441 = vpack.c.bf16 %v2416, %v2415
        %v2442 = vpack.c.bf16 %v2418, %v2417
        %v2443 = vpack.c.bf16 %v2420, %v2419
        %v2444 = vpack.c.bf16 %v2422, %v2421
        %v2445 = vpack.c.bf16 %v2424, %v2423
        %v2446 = vpack.c.bf16 %v2426, %v2425
        %v2447 = vpack.c.bf16 %v2428, %v2427
        %v2448 = vpack.c.bf16 %v2430, %v2429
        %v2449 = vpack.c.bf16 %v2432, %v2431
        %v2450 = vpack.c.bf16 %v2434, %v2433
        %v2451 = vpack.c.bf16 %v2436, %v2435
        %v2452 = vpack.c.bf16 %v2438, %v2437
        %v2453 = vld [vmem:[%s3 + $0x178] sm:$0x1]
        %v2454 = vlaneseq
        %v2455 = vshrl.u32 %v2454, 7
        %v2456 = vsub.s32 0, %v2455
        %v2457 = vrot.slane %v2453, %v2456
        %v2459 = vsel %vm2267, %v2439, 0
        %v2462 = vsel %vm2267, %v2440, 0
        %v2465 = vsel %vm2267, %v2441, 0
        %v2468 = vsel %vm2267, %v2442, 0
        %v2471 = vsel %vm2267, %v2443, 0
        %v2474 = vsel %vm2267, %v2444, 0
        %v2477 = vsel %vm2267, %v2445, 0
        %v2480 = vsel %vm2267, %v2446, 0
        %v2483 = vsel %vm2267, %v2447, 0
        %v2486 = vsel %vm2267, %v2448, 0
        %2488 = vmatprep.subr.bf16.mxu0 0
        %2489 = vmatpush1.bf16.msra.mxu0 %v2449
        %2490 = vmatprep.subr.bf16.mxu0 0
        %2491 = vmatpush1.bf16.msra.mxu0 %v2450
        %2492 = vmatprep.subr.bf16.mxu0 0
        %2493 = vmatpush1.bf16.msra.mxu0 %v2451
        %2494 = vmatprep.subr.bf16.mxu0 0
        %2495 = vmatpush1.bf16.msra.mxu0 %v2452
        %2496 = vmatprep.subr.bf16.mxu0 0
        %2497 = vmatpush1.bf16.msra.mxu0 0
        %2498 = vmatprep.subr.bf16.mxu0 0
        %2499 = vmatpush1.bf16.msra.mxu0 0
        %2500 = vmatprep.subr.bf16.mxu0 0
        %2501 = vmatpush1.bf16.msra.mxu0 0
        %2502 = vmatprep.subr.bf16.mxu0 0
        %2503 = vmatpush1.bf16.msra.mxu0 0
        %2504 = vmatprep.subr.bf16.mxu0 0
        %2505 = vmatpush1.bf16.msra.mxu0 0
        %2506 = vmatprep.subr.bf16.mxu0 0
        %2507 = vmatpush1.bf16.msra.mxu0 0
        %2508 = vmatprep.subr.bf16.mxu0 0
        %2509 = vmatpush1.bf16.msra.mxu0 0
        %2510 = vmatprep.subr.bf16.mxu0 0
        %2511 = vmatpush1.bf16.msra.mxu0 0
        %2512 = vmatprep.subr.bf16.mxu0 0
        %2513 = vmatpush1.bf16.msra.mxu0 0
        %2514 = vmatprep.subr.bf16.mxu0 0
        %2515 = vmatpush1.bf16.msra.mxu0 0
        %2516 = vmatprep.subr.bf16.mxu0 0
        %2517 = vmatpush1.bf16.msra.mxu0 0
        %2518 = vmatprep.subr.bf16.mxu0 0
        %2519 = vmatpush1.bf16.msra.mxu0 0
        %2520 = vmatprep.mubr.bf16.mxu0 0
        %2521 = vmatmul.mubr.bf16.gmra.mrb[0].mxu0 %v2459
        %v2522 = vpop.f32.mrb[0].mxu0
        %v2523 = vadd.f32 %v2457, %v2522
        %v2524 = vpop.f32.mrb[0].mxu0
        %v2525 = vpop.f32.mrb[0].mxu0
        %v2526 = vadd.f32 %v2457, %v2525
        %v2527 = vpop.f32.mrb[0].mxu0
        %2528 = vmatprep.mubr.bf16.mxu0 0
        %2529 = vmatmul.mubr.bf16.gmra.mrb[0].mxu0 %v2462
        %v2530 = vpop.f32.mrb[0].mxu0
        %v2531 = vadd.f32 %v2457, %v2530
        %v2532 = vpop.f32.mrb[0].mxu0
        %v2533 = vpop.f32.mrb[0].mxu0
        %v2534 = vadd.f32 %v2457, %v2533
        %v2535 = vpop.f32.mrb[0].mxu0
        %2536 = vmatprep.mubr.bf16.mxu0 0
        %2537 = vmatmul.mubr.bf16.gmra.mrb[0].mxu0 %v2465
        %v2538 = vpop.f32.mrb[0].mxu0
        %v2539 = vadd.f32 %v2457, %v2538
        %v2540 = vpop.f32.mrb[0].mxu0
        %v2541 = vpop.f32.mrb[0].mxu0
        %v2542 = vadd.f32 %v2457, %v2541
        %v2543 = vpop.f32.mrb[0].mxu0
        %2544 = vmatprep.mubr.bf16.mxu0 0
        %2545 = vmatmul.mubr.bf16.gmra.mrb[0].mxu0 %v2468
        %v2546 = vpop.f32.mrb[0].mxu0
        %v2547 = vadd.f32 %v2457, %v2546
        %v2548 = vpop.f32.mrb[0].mxu0
        %v2549 = vpop.f32.mrb[0].mxu0
        %v2550 = vadd.f32 %v2457, %v2549
        %v2551 = vpop.f32.mrb[0].mxu0
        %2552 = vmatprep.mubr.bf16.mxu0 0
        %2553 = vmatmul.mubr.bf16.gmra.mrb[0].mxu0 %v2471
        %v2554 = vpop.f32.mrb[0].mxu0
        %v2555 = vadd.f32 %v2457, %v2554
        %v2556 = vpop.f32.mrb[0].mxu0
        %v2557 = vpop.f32.mrb[0].mxu0
        %v2558 = vadd.f32 %v2457, %v2557
        %v2559 = vpop.f32.mrb[0].mxu0
        %2560 = vmatprep.mubr.bf16.mxu0 0
        %2561 = vmatmul.mubr.bf16.gmra.mrb[0].mxu0 %v2474
        %v2562 = vpop.f32.mrb[0].mxu0
        %v2563 = vadd.f32 %v2457, %v2562
        %v2564 = vpop.f32.mrb[0].mxu0
        %v2565 = vpop.f32.mrb[0].mxu0
        %v2566 = vadd.f32 %v2457, %v2565
        %v2567 = vpop.f32.mrb[0].mxu0
        %2568 = vmatprep.mubr.bf16.mxu0 0
        %2569 = vmatmul.mubr.bf16.gmra.mrb[0].mxu0 %v2477
        %v2570 = vpop.f32.mrb[0].mxu0
        %v2571 = vadd.f32 %v2457, %v2570
        %v2572 = vpop.f32.mrb[0].mxu0
        %v2573 = vpop.f32.mrb[0].mxu0
        %v2574 = vadd.f32 %v2457, %v2573
        %v2575 = vpop.f32.mrb[0].mxu0
        %2576 = vmatprep.mubr.bf16.mxu0 0
        %2577 = vmatmul.mubr.bf16.gmra.mrb[0].mxu0 %v2480
        %v2578 = vpop.f32.mrb[0].mxu0
        %v2579 = vadd.f32 %v2457, %v2578
        %v2580 = vpop.f32.mrb[0].mxu0
        %v2581 = vpop.f32.mrb[0].mxu0
        %v2582 = vadd.f32 %v2457, %v2581
        %v2583 = vpop.f32.mrb[0].mxu0
        %2584 = vmatprep.mubr.bf16.mxu0 0
        %2585 = vmatmul.mubr.bf16.gmra.mrb[0].mxu0 %v2483
        %v2586 = vpop.f32.mrb[0].mxu0
        %v2587 = vadd.f32 %v2457, %v2586
        %v2588 = vpop.f32.mrb[0].mxu0
        %v2589 = vpop.f32.mrb[0].mxu0
        %v2590 = vadd.f32 %v2457, %v2589
        %v2591 = vpop.f32.mrb[0].mxu0
        %2592 = vmatprep.mubr.bf16.mxu0 0
        %2593 = vmatmul.mubr.bf16.gmra.mrb[0].mxu0 %v2486
        %v2594 = vpop.f32.mrb[0].mxu0
        %v2595 = vadd.f32 %v2457, %v2594
        %v2596 = vpop.f32.mrb[0].mxu0
        %v2597 = vpop.f32.mrb[0].mxu0
        %v2598 = vadd.f32 %v2457, %v2597
        %v2599 = vpop.f32.mrb[0].mxu0
        %2600 = vdwg.mxu0
        %v2601 = vmax.f32 %v2523, 0.0
        %v2602 = vmax.f32 %v2526, 0.0
        %v2603 = vmax.f32 %v2531, 0.0
        %v2604 = vmax.f32 %v2534, 0.0
        %v2605 = vmax.f32 %v2539, 0.0
        %v2606 = vmax.f32 %v2542, 0.0
        %v2607 = vmax.f32 %v2547, 0.0
        %v2608 = vmax.f32 %v2550, 0.0
        %v2609 = vmax.f32 %v2555, 0.0
        %v2610 = vmax.f32 %v2558, 0.0
        %v2611 = vmax.f32 %v2563, 0.0
        %v2612 = vmax.f32 %v2566, 0.0
        %v2613 = vmax.f32 %v2571, 0.0
        %v2614 = vmax.f32 %v2574, 0.0
        %v2615 = vmax.f32 %v2579, 0.0
        %v2616 = vmax.f32 %v2582, 0.0
        %v2617 = vmax.f32 %v2587, 0.0
        %v2618 = vmax.f32 %v2590, 0.0
        %v2619 = vmax.f32 %v2595, 0.0
        %v2620 = vmax.f32 %v2598, 0.0
        %v2621 = vld [vmem:[%s3 + $0x180] sm:$0xff]
        %v2622 = vld [vmem:[%s3 + $0x188] sm:$0xff]
        %v2623 = vld [vmem:[%s3 + $0x190] sm:$0xff]
        %v2624 = vld [vmem:[%s3 + $0x198] sm:$0xff]
        %v2625 = vld [vmem:[%s3 + $0x1a0] sm:$0xff]
        %v2626 = vld [vmem:[%s3 + $0x1a8] sm:$0xff]
        %v2627 = vld [vmem:[%s3 + $0x1b0] sm:$0xff]
        %v2628 = vld [vmem:[%s3 + $0x1b8] sm:$0xff]
        %v2629 = vpack.c.bf16 %v2602, %v2601
        %v2630 = vpack.c.bf16 %v2604, %v2603
        %v2631 = vpack.c.bf16 %v2606, %v2605
        %v2632 = vpack.c.bf16 %v2608, %v2607
        %v2633 = vpack.c.bf16 %v2610, %v2609
        %v2634 = vpack.c.bf16 %v2612, %v2611
        %v2635 = vpack.c.bf16 %v2614, %v2613
        %v2636 = vpack.c.bf16 %v2616, %v2615
        %v2637 = vpack.c.bf16 %v2618, %v2617
        %v2638 = vpack.c.bf16 %v2620, %v2619
        %v2639 = vpack.c.bf16 %v2622, %v2621
        %v2640 = vpack.c.bf16 %v2624, %v2623
        %v2641 = vpack.c.bf16 %v2626, %v2625
        %v2642 = vpack.c.bf16 %v2628, %v2627
        %v2643 = vld [vmem:[%s3 + $0x1c0] sm:$0x1]
        %v2644 = vlaneseq
        %v2645 = vshrl.u32 %v2644, 7
        %v2646 = vsub.s32 0, %v2645
        %v2647 = vrot.slane %v2643, %v2646
        %v2649 = vsel %vm2267, %v2629, 0
        %v2652 = vsel %vm2267, %v2630, 0
        %v2655 = vsel %vm2267, %v2631, 0
        %v2658 = vsel %vm2267, %v2632, 0
        %v2661 = vsel %vm2267, %v2633, 0
        %v2664 = vsel %vm2267, %v2634, 0
        %v2667 = vsel %vm2267, %v2635, 0
        %v2670 = vsel %vm2267, %v2636, 0
        %v2673 = vsel %vm2267, %v2637, 0
        %v2676 = vsel %vm2267, %v2638, 0
        %2678 = vmatprep.subr.bf16.mxu0 0
        %2679 = vmatpush1.bf16.msra.mxu0 %v2639
        %2680 = vmatprep.subr.bf16.mxu0 0
        %2681 = vmatpush1.bf16.msra.mxu0 %v2640
        %2682 = vmatprep.subr.bf16.mxu0 0
        %2683 = vmatpush1.bf16.msra.mxu0 %v2641
        %2684 = vmatprep.subr.bf16.mxu0 0
        %2685 = vmatpush1.bf16.msra.mxu0 %v2642
        %2686 = vmatprep.subr.bf16.mxu0 0
        %2687 = vmatpush1.bf16.msra.mxu0 0
        %2688 = vmatprep.subr.bf16.mxu0 0
        %2689 = vmatpush1.bf16.msra.mxu0 0
        %2690 = vmatprep.subr.bf16.mxu0 0
        %2691 = vmatpush1.bf16.msra.mxu0 0
        %2692 = vmatprep.subr.bf16.mxu0 0
        %2693 = vmatpush1.bf16.msra.mxu0 0
        %2694 = vmatprep.subr.bf16.mxu0 0
        %2695 = vmatpush1.bf16.msra.mxu0 0
        %2696 = vmatprep.subr.bf16.mxu0 0
        %2697 = vmatpush1.bf16.msra.mxu0 0
        %2698 = vmatprep.subr.bf16.mxu0 0
        %2699 = vmatpush1.bf16.msra.mxu0 0
        %2700 = vmatprep.subr.bf16.mxu0 0
        %2701 = vmatpush1.bf16.msra.mxu0 0
        %2702 = vmatprep.subr.bf16.mxu0 0
        %2703 = vmatpush1.bf16.msra.mxu0 0
        %2704 = vmatprep.subr.bf16.mxu0 0
        %2705 = vmatpush1.bf16.msra.mxu0 0
        %2706 = vmatprep.subr.bf16.mxu0 0
        %2707 = vmatpush1.bf16.msra.mxu0 0
        %2708 = vmatprep.subr.bf16.mxu0 0
        %2709 = vmatpush1.bf16.msra.mxu0 0
        %2710 = vmatprep.mubr.bf16.mxu0 0
        %2711 = vmatmul.mubr.bf16.gmra.mrb[0].mxu0 %v2649
        %v2712 = vpop.f32.mrb[0].mxu0
        %v2713 = vadd.f32 %v2647, %v2712
        %v2714 = vpop.f32.mrb[0].mxu0
        %v2715 = vpop.f32.mrb[0].mxu0
        %v2716 = vadd.f32 %v2647, %v2715
        %v2717 = vpop.f32.mrb[0].mxu0
        %2718 = vmatprep.mubr.bf16.mxu0 0
        %2719 = vmatmul.mubr.bf16.gmra.mrb[0].mxu0 %v2652
        %v2720 = vpop.f32.mrb[0].mxu0
        %v2721 = vadd.f32 %v2647, %v2720
        %v2722 = vpop.f32.mrb[0].mxu0
        %v2723 = vpop.f32.mrb[0].mxu0
        %v2724 = vadd.f32 %v2647, %v2723
        %v2725 = vpop.f32.mrb[0].mxu0
        %2726 = vmatprep.mubr.bf16.mxu0 0
        %2727 = vmatmul.mubr.bf16.gmra.mrb[0].mxu0 %v2655
        %v2728 = vpop.f32.mrb[0].mxu0
        %v2729 = vadd.f32 %v2647, %v2728
        %v2730 = vpop.f32.mrb[0].mxu0
        %v2731 = vpop.f32.mrb[0].mxu0
        %v2732 = vadd.f32 %v2647, %v2731
        %v2733 = vpop.f32.mrb[0].mxu0
        %2734 = vmatprep.mubr.bf16.mxu0 0
        %2735 = vmatmul.mubr.bf16.gmra.mrb[0].mxu0 %v2658
        %v2736 = vpop.f32.mrb[0].mxu0
        %v2737 = vadd.f32 %v2647, %v2736
        %v2738 = vpop.f32.mrb[0].mxu0
        %v2739 = vpop.f32.mrb[0].mxu0
        %v2740 = vadd.f32 %v2647, %v2739
        %v2741 = vpop.f32.mrb[0].mxu0
        %2742 = vmatprep.mubr.bf16.mxu0 0
        %2743 = vmatmul.mubr.bf16.gmra.mrb[0].mxu0 %v2661
        %v2744 = vpop.f32.mrb[0].mxu0
        %v2745 = vadd.f32 %v2647, %v2744
        %v2746 = vpop.f32.mrb[0].mxu0
        %v2747 = vpop.f32.mrb[0].mxu0
        %v2748 = vadd.f32 %v2647, %v2747
        %v2749 = vpop.f32.mrb[0].mxu0
        %2750 = vmatprep.mubr.bf16.mxu0 0
        %2751 = vmatmul.mubr.bf16.gmra.mrb[0].mxu0 %v2664
        %v2752 = vpop.f32.mrb[0].mxu0
        %v2753 = vadd.f32 %v2647, %v2752
        %v2754 = vpop.f32.mrb[0].mxu0
        %v2755 = vpop.f32.mrb[0].mxu0
        %v2756 = vadd.f32 %v2647, %v2755
        %v2757 = vpop.f32.mrb[0].mxu0
        %2758 = vmatprep.mubr.bf16.mxu0 0
        %2759 = vmatmul.mubr.bf16.gmra.mrb[0].mxu0 %v2667
        %v2760 = vpop.f32.mrb[0].mxu0
        %v2761 = vadd.f32 %v2647, %v2760
        %v2762 = vpop.f32.mrb[0].mxu0
        %v2763 = vpop.f32.mrb[0].mxu0
        %v2764 = vadd.f32 %v2647, %v2763
        %v2765 = vpop.f32.mrb[0].mxu0
        %2766 = vmatprep.mubr.bf16.mxu0 0
        %2767 = vmatmul.mubr.bf16.gmra.mrb[0].mxu0 %v2670
        %v2768 = vpop.f32.mrb[0].mxu0
        %v2769 = vadd.f32 %v2647, %v2768
        %v2770 = vpop.f32.mrb[0].mxu0
        %v2771 = vpop.f32.mrb[0].mxu0
        %v2772 = vadd.f32 %v2647, %v2771
        %v2773 = vpop.f32.mrb[0].mxu0
        %2774 = vmatprep.mubr.bf16.mxu0 0
        %2775 = vmatmul.mubr.bf16.gmra.mrb[0].mxu0 %v2673
        %v2776 = vpop.f32.mrb[0].mxu0
        %v2777 = vadd.f32 %v2647, %v2776
        %v2778 = vpop.f32.mrb[0].mxu0
        %v2779 = vpop.f32.mrb[0].mxu0
        %v2780 = vadd.f32 %v2647, %v2779
        %v2781 = vpop.f32.mrb[0].mxu0
        %2782 = vmatprep.mubr.bf16.mxu0 0
        %2783 = vmatmul.mubr.bf16.gmra.mrb[0].mxu0 %v2676
        %v2784 = vpop.f32.mrb[0].mxu0
        %v2785 = vadd.f32 %v2647, %v2784
        %v2786 = vpop.f32.mrb[0].mxu0
        %v2787 = vpop.f32.mrb[0].mxu0
        %v2788 = vadd.f32 %v2647, %v2787
        %v2789 = vpop.f32.mrb[0].mxu0
        %2790 = vdwg.mxu0
        %v2791 = vadd.f32 %v2036, %v2713
        %v2792 = vadd.f32 %v2037, %v2716
        %v2793 = vadd.f32 %v2038, %v2721
        %v2794 = vadd.f32 %v2039, %v2724
        %v2795 = vadd.f32 %v2040, %v2729
        %v2796 = vadd.f32 %v2041, %v2732
        %v2797 = vadd.f32 %v2042, %v2737
        %v2798 = vadd.f32 %v2043, %v2740
        %v2799 = vadd.f32 %v2044, %v2745
        %v2800 = vadd.f32 %v2045, %v2748
        %v2801 = vadd.f32 %v2046, %v2753
        %v2802 = vadd.f32 %v2047, %v2756
        %v2803 = vadd.f32 %v2048, %v2761
        %v2804 = vadd.f32 %v2049, %v2764
        %v2805 = vadd.f32 %v2050, %v2769
        %v2806 = vadd.f32 %v2051, %v2772
        %v2807 = vadd.f32 %v2052, %v2777
        %v2808 = vadd.f32 %v2053, %v2780
        %v2809 = vadd.f32 %v2054, %v2785
        %v2810 = vadd.f32 %v2055, %v2788
        %v2811 = vld [vmem:[%s3 + $0x1c8] sm:$0x1]
        %v2812 = vld [vmem:[%s3 + $0x1d0] sm:$0x1]
        %v2813 = vsel %vm560, %v2791, 0.0
        %2814 = vadd.xlane.f32.xlu0 %v2813
        %v2815 = vpop.xlane.xlu0 %2814
        %v2816 = vsel %vm560, %v2792, 0.0
        %2817 = vadd.xlane.f32.xlu0 %v2816
        %v2818 = vpop.xlane.xlu0 %2817
        %v2819 = vsel %vm560, %v2793, 0.0
        %2820 = vadd.xlane.f32.xlu0 %v2819
        %v2821 = vpop.xlane.xlu0 %2820
        %v2822 = vsel %vm560, %v2794, 0.0
        %2823 = vadd.xlane.f32.xlu0 %v2822
        %v2824 = vpop.xlane.xlu0 %2823
        %v2825 = vsel %vm560, %v2795, 0.0
        %2826 = vadd.xlane.f32.xlu0 %v2825
        %v2827 = vpop.xlane.xlu0 %2826
        %v2828 = vsel %vm560, %v2796, 0.0
        %2829 = vadd.xlane.f32.xlu0 %v2828
        %v2830 = vpop.xlane.xlu0 %2829
        %v2831 = vsel %vm560, %v2797, 0.0
        %2832 = vadd.xlane.f32.xlu0 %v2831
        %v2833 = vpop.xlane.xlu0 %2832
        %v2834 = vsel %vm560, %v2798, 0.0
        %2835 = vadd.xlane.f32.xlu0 %v2834
        %v2836 = vpop.xlane.xlu0 %2835
        %v2837 = vsel %vm560, %v2799, 0.0
        %2838 = vadd.xlane.f32.xlu0 %v2837
        %v2839 = vpop.xlane.xlu0 %2838
        %v2840 = vsel %vm560, %v2800, 0.0
        %2841 = vadd.xlane.f32.xlu0 %v2840
        %v2842 = vpop.xlane.xlu0 %2841
        %v2843 = vsel %vm560, %v2801, 0.0
        %2844 = vadd.xlane.f32.xlu0 %v2843
        %v2845 = vpop.xlane.xlu0 %2844
        %v2846 = vsel %vm560, %v2802, 0.0
        %2847 = vadd.xlane.f32.xlu0 %v2846
        %v2848 = vpop.xlane.xlu0 %2847
        %v2849 = vsel %vm560, %v2803, 0.0
        %2850 = vadd.xlane.f32.xlu0 %v2849
        %v2851 = vpop.xlane.xlu0 %2850
        %v2852 = vsel %vm560, %v2804, 0.0
        %2853 = vadd.xlane.f32.xlu0 %v2852
        %v2854 = vpop.xlane.xlu0 %2853
        %v2855 = vsel %vm560, %v2805, 0.0
        %2856 = vadd.xlane.f32.xlu0 %v2855
        %v2857 = vpop.xlane.xlu0 %2856
        %v2858 = vsel %vm560, %v2806, 0.0
        %2859 = vadd.xlane.f32.xlu0 %v2858
        %v2860 = vpop.xlane.xlu0 %2859
        %v2861 = vsel %vm560, %v2807, 0.0
        %2862 = vadd.xlane.f32.xlu0 %v2861
        %v2863 = vpop.xlane.xlu0 %2862
        %v2864 = vsel %vm560, %v2808, 0.0
        %2865 = vadd.xlane.f32.xlu0 %v2864
        %v2866 = vpop.xlane.xlu0 %2865
        %v2867 = vsel %vm560, %v2809, 0.0
        %2868 = vadd.xlane.f32.xlu0 %v2867
        %v2869 = vpop.xlane.xlu0 %2868
        %v2870 = vsel %vm560, %v2810, 0.0
        %2871 = vadd.xlane.f32.xlu0 %v2870
        %v2872 = vpop.xlane.xlu0 %2871
        %v2873 = vmul.f32 %v2815, %v1807
        %v2874 = vmul.f32 %v2818, %v1807
        %v2875 = vmul.f32 %v2821, %v1807
        %v2876 = vmul.f32 %v2824, %v1807
        %v2877 = vmul.f32 %v2827, %v1807
        %v2878 = vmul.f32 %v2830, %v1807
        %v2879 = vmul.f32 %v2833, %v1807
        %v2880 = vmul.f32 %v2836, %v1807
        %v2881 = vmul.f32 %v2839, %v1807
        %v2882 = vmul.f32 %v2842, %v1807
        %v2883 = vmul.f32 %v2845, %v1807
        %v2884 = vmul.f32 %v2848, %v1807
        %v2885 = vmul.f32 %v2851, %v1807
        %v2886 = vmul.f32 %v2854, %v1807
        %v2887 = vmul.f32 %v2857, %v1807
        %v2888 = vmul.f32 %v2860, %v1807
        %v2889 = vmul.f32 %v2863, %v1807
        %v2890 = vmul.f32 %v2866, %v1807
        %v2891 = vmul.f32 %v2869, %v1807
        %v2892 = vmul.f32 %v2872, %v1807
        %v2893 = vsub.f32 %v2791, %v2873
        %v2894 = vsub.f32 %v2792, %v2874
        %v2895 = vsub.f32 %v2793, %v2875
        %v2896 = vsub.f32 %v2794, %v2876
        %v2897 = vsub.f32 %v2795, %v2877
        %v2898 = vsub.f32 %v2796, %v2878
        %v2899 = vsub.f32 %v2797, %v2879
        %v2900 = vsub.f32 %v2798, %v2880
        %v2901 = vsub.f32 %v2799, %v2881
        %v2902 = vsub.f32 %v2800, %v2882
        %v2903 = vsub.f32 %v2801, %v2883
        %v2904 = vsub.f32 %v2802, %v2884
        %v2905 = vsub.f32 %v2803, %v2885
        %v2906 = vsub.f32 %v2804, %v2886
        %v2907 = vsub.f32 %v2805, %v2887
        %v2908 = vsub.f32 %v2806, %v2888
        %v2909 = vsub.f32 %v2807, %v2889
        %v2910 = vsub.f32 %v2808, %v2890
        %v2911 = vsub.f32 %v2809, %v2891
        %v2912 = vsub.f32 %v2810, %v2892
        %v2913 = vmul.f32 %v2893, %v2893
        %v2914 = vmul.f32 %v2894, %v2894
        %v2915 = vmul.f32 %v2895, %v2895
        %v2916 = vmul.f32 %v2896, %v2896
        %v2917 = vmul.f32 %v2897, %v2897
        %v2918 = vmul.f32 %v2898, %v2898
        %v2919 = vmul.f32 %v2899, %v2899
        %v2920 = vmul.f32 %v2900, %v2900
        %v2921 = vmul.f32 %v2901, %v2901
        %v2922 = vmul.f32 %v2902, %v2902
        %v2923 = vmul.f32 %v2903, %v2903
        %v2924 = vmul.f32 %v2904, %v2904
        %v2925 = vmul.f32 %v2905, %v2905
        %v2926 = vmul.f32 %v2906, %v2906
        %v2927 = vmul.f32 %v2907, %v2907
        %v2928 = vmul.f32 %v2908, %v2908
        %v2929 = vmul.f32 %v2909, %v2909
        %v2930 = vmul.f32 %v2910, %v2910
        %v2931 = vmul.f32 %v2911, %v2911
        %v2932 = vmul.f32 %v2912, %v2912
        %v2933 = vsel %vm560, %v2913, 0.0
        %2934 = vadd.xlane.f32.xlu0 %v2933
        %v2935 = vpop.xlane.xlu0 %2934
        %v2936 = vsel %vm560, %v2914, 0.0
        %2937 = vadd.xlane.f32.xlu0 %v2936
        %v2938 = vpop.xlane.xlu0 %2937
        %v2939 = vsel %vm560, %v2915, 0.0
        %2940 = vadd.xlane.f32.xlu0 %v2939
        %v2941 = vpop.xlane.xlu0 %2940
        %v2942 = vsel %vm560, %v2916, 0.0
        %2943 = vadd.xlane.f32.xlu0 %v2942
        %v2944 = vpop.xlane.xlu0 %2943
        %v2945 = vsel %vm560, %v2917, 0.0
        %2946 = vadd.xlane.f32.xlu0 %v2945
        %v2947 = vpop.xlane.xlu0 %2946
        %v2948 = vsel %vm560, %v2918, 0.0
        %2949 = vadd.xlane.f32.xlu0 %v2948
        %v2950 = vpop.xlane.xlu0 %2949
        %v2951 = vsel %vm560, %v2919, 0.0
        %2952 = vadd.xlane.f32.xlu0 %v2951
        %v2953 = vpop.xlane.xlu0 %2952
        %v2954 = vsel %vm560, %v2920, 0.0
        %2955 = vadd.xlane.f32.xlu0 %v2954
        %v2956 = vpop.xlane.xlu0 %2955
        %v2957 = vsel %vm560, %v2921, 0.0
        %2958 = vadd.xlane.f32.xlu0 %v2957
        %v2959 = vpop.xlane.xlu0 %2958
        %v2960 = vsel %vm560, %v2922, 0.0
        %2961 = vadd.xlane.f32.xlu0 %v2960
        %v2962 = vpop.xlane.xlu0 %2961
        %v2963 = vsel %vm560, %v2923, 0.0
        %2964 = vadd.xlane.f32.xlu0 %v2963
        %v2965 = vpop.xlane.xlu0 %2964
        %v2966 = vsel %vm560, %v2924, 0.0
        %2967 = vadd.xlane.f32.xlu0 %v2966
        %v2968 = vpop.xlane.xlu0 %2967
        %v2969 = vsel %vm560, %v2925, 0.0
        %2970 = vadd.xlane.f32.xlu0 %v2969
        %v2971 = vpop.xlane.xlu0 %2970
        %v2972 = vsel %vm560, %v2926, 0.0
        %2973 = vadd.xlane.f32.xlu0 %v2972
        %v2974 = vpop.xlane.xlu0 %2973
        %v2975 = vsel %vm560, %v2927, 0.0
        %2976 = vadd.xlane.f32.xlu0 %v2975
        %v2977 = vpop.xlane.xlu0 %2976
        %v2978 = vsel %vm560, %v2928, 0.0
        %2979 = vadd.xlane.f32.xlu0 %v2978
        %v2980 = vpop.xlane.xlu0 %2979
        %v2981 = vsel %vm560, %v2929, 0.0
        %2982 = vadd.xlane.f32.xlu0 %v2981
        %v2983 = vpop.xlane.xlu0 %2982
        %v2984 = vsel %vm560, %v2930, 0.0
        %2985 = vadd.xlane.f32.xlu0 %v2984
        %v2986 = vpop.xlane.xlu0 %2985
        %v2987 = vsel %vm560, %v2931, 0.0
        %2988 = vadd.xlane.f32.xlu0 %v2987
        %v2989 = vpop.xlane.xlu0 %2988
        %v2990 = vsel %vm560, %v2932, 0.0
        %2991 = vadd.xlane.f32.xlu0 %v2990
        %v2992 = vpop.xlane.xlu0 %2991
        %v2993 = vmul.f32 %v2935, %v1807
        %v2994 = vmul.f32 %v2938, %v1807
        %v2995 = vmul.f32 %v2941, %v1807
        %v2996 = vmul.f32 %v2944, %v1807
        %v2997 = vmul.f32 %v2947, %v1807
        %v2998 = vmul.f32 %v2950, %v1807
        %v2999 = vmul.f32 %v2953, %v1807
        %v3000 = vmul.f32 %v2956, %v1807
        %v3001 = vmul.f32 %v2959, %v1807
        %v3002 = vmul.f32 %v2962, %v1807
        %v3003 = vmul.f32 %v2965, %v1807
        %v3004 = vmul.f32 %v2968, %v1807
        %v3005 = vmul.f32 %v2971, %v1807
        %v3006 = vmul.f32 %v2974, %v1807
        %v3007 = vmul.f32 %v2977, %v1807
        %v3008 = vmul.f32 %v2980, %v1807
        %v3009 = vmul.f32 %v2983, %v1807
        %v3010 = vmul.f32 %v2986, %v1807
        %v3011 = vmul.f32 %v2989, %v1807
        %v3012 = vmul.f32 %v2992, %v1807
        %v3013 = vadd.f32 %v2993, 1e-05
        %v3014 = vadd.f32 %v2994, 1e-05
        %v3015 = vadd.f32 %v2995, 1e-05
        %v3016 = vadd.f32 %v2996, 1e-05
        %v3017 = vadd.f32 %v2997, 1e-05
        %v3018 = vadd.f32 %v2998, 1e-05
        %v3019 = vadd.f32 %v2999, 1e-05
        %v3020 = vadd.f32 %v3000, 1e-05
        %v3021 = vadd.f32 %v3001, 1e-05
        %v3022 = vadd.f32 %v3002, 1e-05
        %v3023 = vadd.f32 %v3003, 1e-05
        %v3024 = vadd.f32 %v3004, 1e-05
        %v3025 = vadd.f32 %v3005, 1e-05
        %v3026 = vadd.f32 %v3006, 1e-05
        %v3027 = vadd.f32 %v3007, 1e-05
        %v3028 = vadd.f32 %v3008, 1e-05
        %v3029 = vadd.f32 %v3009, 1e-05
        %v3030 = vadd.f32 %v3010, 1e-05
        %v3031 = vadd.f32 %v3011, 1e-05
        %v3032 = vadd.f32 %v3012, 1e-05
        %v3033 = vrsqrt.pop %v3013
        %v3034 = vrsqrt.pop %v3014
        %v3035 = vrsqrt.pop %v3015
        %v3036 = vrsqrt.pop %v3016
        %v3037 = vrsqrt.pop %v3017
        %v3038 = vrsqrt.pop %v3018
        %v3039 = vrsqrt.pop %v3019
        %v3040 = vrsqrt.pop %v3020
        %v3041 = vrsqrt.pop %v3021
        %v3042 = vrsqrt.pop %v3022
        %v3043 = vrsqrt.pop %v3023
        %v3044 = vrsqrt.pop %v3024
        %v3045 = vrsqrt.pop %v3025
        %v3046 = vrsqrt.pop %v3026
        %v3047 = vrsqrt.pop %v3027
        %v3048 = vrsqrt.pop %v3028
        %v3049 = vrsqrt.pop %v3029
        %v3050 = vrsqrt.pop %v3030
        %v3051 = vrsqrt.pop %v3031
        %v3052 = vrsqrt.pop %v3032
        %v3053 = vmul.f32 %v2893, %v3033
        %v3054 = vmul.f32 %v2894, %v3034
        %v3055 = vmul.f32 %v2895, %v3035
        %v3056 = vmul.f32 %v2896, %v3036
        %v3057 = vmul.f32 %v2897, %v3037
        %v3058 = vmul.f32 %v2898, %v3038
        %v3059 = vmul.f32 %v2899, %v3039
        %v3060 = vmul.f32 %v2900, %v3040
        %v3061 = vmul.f32 %v2901, %v3041
        %v3062 = vmul.f32 %v2902, %v3042
        %v3063 = vmul.f32 %v2903, %v3043
        %v3064 = vmul.f32 %v2904, %v3044
        %v3065 = vmul.f32 %v2905, %v3045
        %v3066 = vmul.f32 %v2906, %v3046
        %v3067 = vmul.f32 %v2907, %v3047
        %v3068 = vmul.f32 %v2908, %v3048
        %v3069 = vmul.f32 %v2909, %v3049
        %v3070 = vmul.f32 %v2910, %v3050
        %v3071 = vmul.f32 %v2911, %v3051
        %v3072 = vmul.f32 %v2912, %v3052
        %v3073 = vlaneseq
        %v3074 = vshrl.u32 %v3073, 7
        %v3075 = vsub.s32 0, %v3074
        %v3076 = vrot.slane %v2811, %v3075
        %v3077 = vmul.f32 %v3053, %v3076
        %v3078 = vmul.f32 %v3054, %v3076
        %v3079 = vmul.f32 %v3055, %v3076
        %v3080 = vmul.f32 %v3056, %v3076
        %v3081 = vmul.f32 %v3057, %v3076
        %v3082 = vmul.f32 %v3058, %v3076
        %v3083 = vmul.f32 %v3059, %v3076
        %v3084 = vmul.f32 %v3060, %v3076
        %v3085 = vmul.f32 %v3061, %v3076
        %v3086 = vmul.f32 %v3062, %v3076
        %v3087 = vmul.f32 %v3063, %v3076
        %v3088 = vmul.f32 %v3064, %v3076
        %v3089 = vmul.f32 %v3065, %v3076
        %v3090 = vmul.f32 %v3066, %v3076
        %v3091 = vmul.f32 %v3067, %v3076
        %v3092 = vmul.f32 %v3068, %v3076
        %v3093 = vmul.f32 %v3069, %v3076
        %v3094 = vmul.f32 %v3070, %v3076
        %v3095 = vmul.f32 %v3071, %v3076
        %v3096 = vmul.f32 %v3072, %v3076
        %v3097 = vlaneseq
        %v3098 = vshrl.u32 %v3097, 7
        %v3099 = vsub.s32 0, %v3098
        %v3100 = vrot.slane %v2812, %v3099
        %v3101 = vadd.f32 %v3077, %v3100
        %v3102 = vadd.f32 %v3078, %v3100
        %v3103 = vadd.f32 %v3079, %v3100
        %v3104 = vadd.f32 %v3080, %v3100
        %v3105 = vadd.f32 %v3081, %v3100
        %v3106 = vadd.f32 %v3082, %v3100
        %v3107 = vadd.f32 %v3083, %v3100
        %v3108 = vadd.f32 %v3084, %v3100
        %v3109 = vadd.f32 %v3085, %v3100
        %v3110 = vadd.f32 %v3086, %v3100
        %v3111 = vadd.f32 %v3087, %v3100
        %v3112 = vadd.f32 %v3088, %v3100
        %v3113 = vadd.f32 %v3089, %v3100
        %v3114 = vadd.f32 %v3090, %v3100
        %v3115 = vadd.f32 %v3091, %v3100
        %v3116 = vadd.f32 %v3092, %v3100
        %v3117 = vadd.f32 %v3093, %v3100
        %v3118 = vadd.f32 %v3094, %v3100
        %v3119 = vadd.f32 %v3095, %v3100
        %v3120 = vadd.f32 %v3096, %v3100
        %v3121 = vld [vmem:[%s4] sm:$0xff]
        %v3122 = vld [vmem:[%s4 + $0x8] sm:$0xff]
        %v3123 = vld [vmem:[%s4 + $0x10] sm:$0xff]
        %v3124 = vld [vmem:[%s4 + $0x18] sm:$0xff]
        %v3125 = vld [vmem:[%s4 + $0x20] sm:$0xf]
        %v3126 = vld [vmem:[%s4 + $0x28] sm:$0xf]
        %v3128 = vsel %vm560, %v3122, 0
        %v3131 = vsel %vm560, %v3124, 0
        %v3134 = vsel %vm560, %v3126, 0
        %3136 = vmatprep.subr.mxu0 0.0
        %3137 = vmatpush1.msra.mxu0 %v3101
        %3138 = vmatprep.subr.mxu0 0.0
        %3139 = vmatpush1.msra.mxu0 %v3102
        %3140 = vmatprep.subr.mxu0 0.0
        %3141 = vmatpush1.msra.mxu0 %v3103
        %3142 = vmatprep.subr.mxu0 0.0
        %3143 = vmatpush1.msra.mxu0 %v3104
        %3144 = vmatprep.subr.mxu0 0.0
        %3145 = vmatpush1.msra.mxu0 %v3105
        %3146 = vmatprep.subr.mxu0 0.0
        %3147 = vmatpush1.msra.mxu0 %v3106
        %3148 = vmatprep.subr.mxu0 0.0
        %3149 = vmatpush1.msra.mxu0 %v3107
        %3150 = vmatprep.subr.mxu0 0.0
        %3151 = vmatpush1.msra.mxu0 %v3108
        %3152 = vmatprep.subr.mxu0 0.0
        %3153 = vmatpush1.msra.mxu0 %v3109
        %3154 = vmatprep.subr.mxu0 0.0
        %3155 = vmatpush1.msra.mxu0 %v3110
        %3156 = vmatprep.subr.mxu0 0.0
        %3157 = vmatpush1.msra.mxu0 %v3111
        %3158 = vmatprep.subr.mxu0 0.0
        %3159 = vmatpush1.msra.mxu0 %v3112
        %3160 = vmatprep.subr.mxu0 0.0
        %3161 = vmatpush1.msra.mxu0 %v3113
        %3162 = vmatprep.subr.mxu0 0.0
        %3163 = vmatpush1.msra.mxu0 %v3114
        %3164 = vmatprep.subr.mxu0 0.0
        %3165 = vmatpush1.msra.mxu0 %v3115
        %3166 = vmatprep.subr.mxu0 0.0
        %3167 = vmatpush1.msra.mxu0 %v3116
        %3168 = vmatprep.subr.mxu0 0.0
        %3169 = vmatpush1.msra.mxu0 %v3117
        %3170 = vmatprep.subr.mxu0 0.0
        %3171 = vmatpush1.msra.mxu0 %v3118
        %3172 = vmatprep.subr.mxu0 0.0
        %3173 = vmatpush1.msra.mxu0 %v3119
        %3174 = vmatprep.subr.mxu0 0.0
        %3175 = vmatpush1.msra.mxu0 %v3120
        %3176 = vmatprep.subr.mxu0 0.0
        %3177 = vmatpush1.msra.mxu0 0.0
        %3178 = vmatprep.subr.mxu0 0.0
        %3179 = vmatpush1.msra.mxu0 0.0
        %3180 = vmatprep.subr.mxu0 0.0
        %3181 = vmatpush1.msra.mxu0 0.0
        %3182 = vmatprep.subr.mxu0 0.0
        %3183 = vmatpush1.msra.mxu0 0.0
        %3184 = vmatprep.subr.mxu0 0.0
        %3185 = vmatpush1.msra.mxu0 0.0
        %3186 = vmatprep.subr.mxu0 0.0
        %3187 = vmatpush1.msra.mxu0 0.0
        %3188 = vmatprep.subr.mxu0 0.0
        %3189 = vmatpush1.msra.mxu0 0.0
        %3190 = vmatprep.subr.mxu0 0.0
        %3191 = vmatpush1.msra.mxu0 0.0
        %3192 = vmatprep.subr.mxu0 0.0
        %3193 = vmatpush1.msra.mxu0 0.0
        %3194 = vmatprep.subr.mxu0 0.0
        %3195 = vmatpush1.msra.mxu0 0.0
        %3196 = vmatprep.subr.mxu0 0.0
        %3197 = vmatpush1.msra.mxu0 0.0
        %3198 = vmatprep.subr.mxu0 0.0
        %3199 = vmatpush1.msra.mxu0 0.0
        %3200 = vmatprep.mubr.f32.mxu0 %v3128
        %3201 = vmatmul.mubr.f32.gmra.mrb[0].mxu0 %v3121
        %v3202 = vpop.f32.mrb[0].mxu0
        %v3203 = vadd.f32 0.0, %v3202
        %v3204 = vpop.f32.mrb[0].mxu0
        %3205 = vmatprep.mubr.f32.mxu0 %v3131
        %3206 = vmatmul.mubr.f32.gmra.mrb[0].mxu0 %v3123
        %v3207 = vpop.f32.mrb[0].mxu0
        %v3208 = vadd.f32 0.0, %v3207
        %v3209 = vpop.f32.mrb[0].mxu0
        %3210 = vmatprep.mubr.f32.mxu0 %v3134
        %3211 = vmatmul.mubr.f32.gmra.mrb[0].mxu0 %v3125
        %v3212 = vpop.f32.mrb[0].mxu0
        %v3213 = vadd.f32 0.0, %v3212
        %v3214 = vpop.f32.mrb[0].mxu0
        %3215 = vdwg.mxu0
        %v3216 = vld [vmem:[%s3 + $0x68] sm:$0xff]
        %v3217 = vld [vmem:[%s3 + $0x70] sm:$0xff]
        %v3218 = vld [vmem:[%s3 + $0x78] sm:$0xff]
        %v3219 = vld [vmem:[%s3 + $0x80] sm:$0xff]
        %v3220 = vpack.c.bf16 %v3208, %v3203
        %v3221 = vpack.c.bf16 %v3213, %v3213
        %v3222 = vpack.c.bf16 %v3217, %v3216
        %v3223 = vpack.c.bf16 %v3219, %v3218
        %v3224 = vld [vmem:[%s3 + $0x88] sm:$0x1]
        %v3225 = vlaneseq
        %v3226 = vshrl.u32 %v3225, 7
        %v3227 = vsub.s32 0, %v3226
        %v3228 = vrot.slane %v3224, %v3227
        %v3230 = vsel %vm560, %v3220, 0
        %v3233 = vsel %vm560, %v3221, 0
        %3235 = vmatprep.subr.bf16.mxu0 0
        %3236 = vmatpush1.bf16.msra.mxu0 %v3222
        %3237 = vmatprep.subr.bf16.mxu0 0
        %3238 = vmatpush1.bf16.msra.mxu0 %v3223
        %3239 = vmatprep.subr.bf16.mxu0 0
        %3240 = vmatpush1.bf16.msra.mxu0 0
        %3241 = vmatprep.subr.bf16.mxu0 0
        %3242 = vmatpush1.bf16.msra.mxu0 0
        %3243 = vmatprep.subr.bf16.mxu0 0
        %3244 = vmatpush1.bf16.msra.mxu0 0
        %3245 = vmatprep.subr.bf16.mxu0 0
        %3246 = vmatpush1.bf16.msra.mxu0 0
        %3247 = vmatprep.subr.bf16.mxu0 0
        %3248 = vmatpush1.bf16.msra.mxu0 0
        %3249 = vmatprep.subr.bf16.mxu0 0
        %3250 = vmatpush1.bf16.msra.mxu0 0
        %3251 = vmatprep.subr.bf16.mxu0 0
        %3252 = vmatpush1.bf16.msra.mxu0 0
        %3253 = vmatprep.subr.bf16.mxu0 0
        %3254 = vmatpush1.bf16.msra.mxu0 0
        %3255 = vmatprep.subr.bf16.mxu0 0
        %3256 = vmatpush1.bf16.msra.mxu0 0
        %3257 = vmatprep.subr.bf16.mxu0 0
        %3258 = vmatpush1.bf16.msra.mxu0 0
        %3259 = vmatprep.subr.bf16.mxu0 0
        %3260 = vmatpush1.bf16.msra.mxu0 0
        %3261 = vmatprep.subr.bf16.mxu0 0
        %3262 = vmatpush1.bf16.msra.mxu0 0
        %3263 = vmatprep.subr.bf16.mxu0 0
        %3264 = vmatpush1.bf16.msra.mxu0 0
        %3265 = vmatprep.subr.bf16.mxu0 0
        %3266 = vmatpush1.bf16.msra.mxu0 0
        %3267 = vmatprep.mubr.bf16.mxu0 0
        %3268 = vmatmul.mubr.bf16.gmra.mrb[0].mxu0 %v3230
        %v3269 = vpop.f32.mrb[0].mxu0
        %v3270 = vadd.f32 %v3228, %v3269
        %v3271 = vpop.f32.mrb[0].mxu0
        %v3272 = vpop.f32.mrb[0].mxu0
        %v3273 = vadd.f32 %v3228, %v3272
        %v3274 = vpop.f32.mrb[0].mxu0
        %3275 = vmatprep.mubr.bf16.mxu0 0
        %3276 = vmatmul.mubr.bf16.gmra.mrb[0].mxu0 %v3233
        %v3277 = vpop.f32.mrb[0].mxu0
        %v3278 = vadd.f32 %v3228, %v3277
        %v3279 = vpop.f32.mrb[0].mxu0
        %v3280 = vpop.f32.mrb[0].mxu0
        %v3281 = vpop.f32.mrb[0].mxu0
        %3282 = vdwg.mxu0
        %v3283 = vld [vmem:[%s3 + $0x90] sm:$0xff]
        %v3284 = vld [vmem:[%s3 + $0x98] sm:$0xff]
        %v3285 = vld [vmem:[%s3 + $0xa0] sm:$0xff]
        %v3286 = vld [vmem:[%s3 + $0xa8] sm:$0xff]
        %v3287 = vpack.c.bf16 %v3284, %v3283
        %v3288 = vpack.c.bf16 %v3286, %v3285
        %v3289 = vld [vmem:[%s3 + $0xb0] sm:$0x1]
        %v3290 = vlaneseq
        %v3291 = vshrl.u32 %v3290, 7
        %v3292 = vsub.s32 0, %v3291
        %v3293 = vrot.slane %v3289, %v3292
        %3294 = vmatprep.subr.bf16.mxu0 0
        %3295 = vmatpush1.bf16.msra.mxu0 %v3287
        %3296 = vmatprep.subr.bf16.mxu0 0
        %3297 = vmatpush1.bf16.msra.mxu0 %v3288
        %3298 = vmatprep.subr.bf16.mxu0 0
        %3299 = vmatpush1.bf16.msra.mxu0 0
        %3300 = vmatprep.subr.bf16.mxu0 0
        %3301 = vmatpush1.bf16.msra.mxu0 0
        %3302 = vmatprep.subr.bf16.mxu0 0
        %3303 = vmatpush1.bf16.msra.mxu0 0
        %3304 = vmatprep.subr.bf16.mxu0 0
        %3305 = vmatpush1.bf16.msra.mxu0 0
        %3306 = vmatprep.subr.bf16.mxu0 0
        %3307 = vmatpush1.bf16.msra.mxu0 0
        %3308 = vmatprep.subr.bf16.mxu0 0
        %3309 = vmatpush1.bf16.msra.mxu0 0
        %3310 = vmatprep.subr.bf16.mxu0 0
        %3311 = vmatpush1.bf16.msra.mxu0 0
        %3312 = vmatprep.subr.bf16.mxu0 0
        %3313 = vmatpush1.bf16.msra.mxu0 0
        %3314 = vmatprep.subr.bf16.mxu0 0
        %3315 = vmatpush1.bf16.msra.mxu0 0
        %3316 = vmatprep.subr.bf16.mxu0 0
        %3317 = vmatpush1.bf16.msra.mxu0 0
        %3318 = vmatprep.subr.bf16.mxu0 0
        %3319 = vmatpush1.bf16.msra.mxu0 0
        %3320 = vmatprep.subr.bf16.mxu0 0
        %3321 = vmatpush1.bf16.msra.mxu0 0
        %3322 = vmatprep.subr.bf16.mxu0 0
        %3323 = vmatpush1.bf16.msra.mxu0 0
        %3324 = vmatprep.subr.bf16.mxu0 0
        %3325 = vmatpush1.bf16.msra.mxu0 0
        %3326 = vmatprep.mubr.bf16.mxu0 0
        %3327 = vmatmul.mubr.bf16.gmra.mrb[0].mxu0 %v3230
        %v3328 = vpop.f32.mrb[0].mxu0
        %v3329 = vadd.f32 %v3293, %v3328
        %v3330 = vpop.f32.mrb[0].mxu0
        %v3331 = vpop.f32.mrb[0].mxu0
        %v3332 = vadd.f32 %v3293, %v3331
        %v3333 = vpop.f32.mrb[0].mxu0
        %3334 = vmatprep.mubr.bf16.mxu0 0
        %3335 = vmatmul.mubr.bf16.gmra.mrb[0].mxu0 %v3233
        %v3336 = vpop.f32.mrb[0].mxu0
        %v3337 = vadd.f32 %v3293, %v3336
        %v3338 = vpop.f32.mrb[0].mxu0
        %v3339 = vpop.f32.mrb[0].mxu0
        %v3340 = vpop.f32.mrb[0].mxu0
        %3341 = vdwg.mxu0
        %v3342 = vpack.c.bf16 %v3273, %v3270
        %v3343 = vpack.c.bf16 %v3278, %v3278
        %v3344 = vpack.c.bf16 %v3332, %v3329
        %v3345 = vpack.c.bf16 %v3337, %v3337
        %v3346 = vld [vmem:[%s5] sm:$0xff]
        %v3347 = vld [vmem:[%s5 + $0x8] sm:$0xff]
        %v3348 = vld [vmem:[%s5 + $0x10] sm:$0xf]
        %v3350 = vsel %vm888, %v3342, 0
        %v3353 = vsel %vm888, %v3343, 0
        %v3356 = vsel %vm888, %v3344, 0
        %v3359 = vsel %vm888, %v3345, 0
        %3361 = vmatprep.subr.bf16.mxu0 0
        %3362 = vmatpush1.bf16.xpose.msra.mxu0 %v3356
        %3363 = vmatprep.subr.bf16.mxu0 0
        %3364 = vmatpush1.bf16.xpose.msra.mxu0 %v3359
        %3365 = vmatprep.subr.bf16.mxu0 0
        %3366 = vmatpush1.bf16.xpose.msra.mxu0 0
        %3367 = vmatprep.subr.bf16.mxu0 0
        %3368 = vmatpush1.bf16.xpose.msra.mxu0 0
        %3369 = vmatprep.subr.bf16.mxu0 0
        %3370 = vmatpush1.bf16.xpose.msra.mxu0 0
        %3371 = vmatprep.subr.bf16.mxu0 0
        %3372 = vmatpush1.bf16.xpose.msra.mxu0 0
        %3373 = vmatprep.subr.bf16.mxu0 0
        %3374 = vmatpush1.bf16.xpose.msra.mxu0 0
        %3375 = vmatprep.subr.bf16.mxu0 0
        %3376 = vmatpush1.bf16.xpose.msra.mxu0 0
        %3377 = vmatprep.subr.bf16.mxu0 0
        %3378 = vmatpush1.bf16.xpose.msra.mxu0 0
        %3379 = vmatprep.subr.bf16.mxu0 0
        %3380 = vmatpush1.bf16.xpose.msra.mxu0 0
        %3381 = vmatprep.subr.bf16.mxu0 0
        %3382 = vmatpush1.bf16.xpose.msra.mxu0 0
        %3383 = vmatprep.subr.bf16.mxu0 0
        %3384 = vmatpush1.bf16.xpose.msra.mxu0 0
        %3385 = vmatprep.subr.bf16.mxu0 0
        %3386 = vmatpush1.bf16.xpose.msra.mxu0 0
        %3387 = vmatprep.subr.bf16.mxu0 0
        %3388 = vmatpush1.bf16.xpose.msra.mxu0 0
        %3389 = vmatprep.subr.bf16.mxu0 0
        %3390 = vmatpush1.bf16.xpose.msra.mxu0 0
        %3391 = vmatprep.subr.bf16.mxu0 0
        %3392 = vmatpush1.bf16.xpose.msra.mxu0 0
        %3393 = vmatprep.mubr.bf16.mxu0 0
        %3394 = vmatmul.mubr.bf16.gmra.mrb[0].mxu0 %v3350
        %v3395 = vpop.f32.mrb[0].mxu0
        %v3396 = vadd.f32 %v3346, %v3395
        %v3397 = vpop.f32.mrb[0].mxu0
        %v3398 = vpop.f32.mrb[0].mxu0
        %v3399 = vadd.f32 %v3347, %v3398
        %v3400 = vpop.f32.mrb[0].mxu0
        %3401 = vmatprep.mubr.bf16.mxu0 0
        %3402 = vmatmul.mubr.bf16.gmra.mrb[0].mxu0 %v3353
        %v3403 = vpop.f32.mrb[0].mxu0
        %v3404 = vadd.f32 %v3348, %v3403
        %v3405 = vpop.f32.mrb[0].mxu0
        %v3406 = vpop.f32.mrb[0].mxu0
        %v3407 = vpop.f32.mrb[0].mxu0
        %3408 = vdwg.mxu0
        %vm3409 = vcmask 162816
        %v3410 = vsel %vm3409, %v3396, -inf
        %3411 = vmax.xlane.f32.xlu0 %v3410
        %v3412 = vpop.xlane.xlu0 %3411
        %v3413 = vsel %vm3409, %v3399, -inf
        %3414 = vmax.xlane.f32.xlu0 %v3413
        %v3415 = vpop.xlane.xlu0 %3414
        %vm3416 = vcmask 158720
        %v3417 = vsel %vm3416, %v3404, -inf
        %3418 = vmax.xlane.f32.xlu0 %v3417
        %v3419 = vpop.xlane.xlu0 %3418
        %v3420 = vsub.f32 %v3396, %v3412
        %v3421 = vsub.f32 %v3399, %v3415
        %v3422 = vsub.f32 %v3404, %v3419
        %v3423 = vmul.f32 %v3420, 1.442695
        %v3424 = vpow.pop %v3423
        %v3425 = vmul.f32 %v3421, 1.442695
        %v3426 = vpow.pop %v3425
        %v3427 = vmul.f32 %v3422, 1.442695
        %v3428 = vpow.pop %v3427
        %v3429 = vsel %vm3409, %v3424, 0.0
        %3430 = vadd.xlane.f32.xlu0 %v3429
        %v3431 = vpop.xlane.xlu0 %3430
        %v3432 = vsel %vm3409, %v3426, 0.0
        %3433 = vadd.xlane.f32.xlu0 %v3432
        %v3434 = vpop.xlane.xlu0 %3433
        %v3435 = vsel %vm3416, %v3428, 0.0
        %3436 = vadd.xlane.f32.xlu0 %v3435
        %v3437 = vpop.xlane.xlu0 %3436
        %v3438 = vrcp.pop %v3431
        %v3439 = vrcp.pop %v3434
        %v3440 = vrcp.pop %v3437
        %v3441 = vmul.f32 %v3424, %v3438
        %v3442 = vmul.f32 %v3426, %v3439
        %v3443 = vmul.f32 %v3428, %v3440
        %v3444 = vpack.c.bf16 %v3442, %v3441
        %v3445 = vpack.c.bf16 %v3443, %v3443
        %v3447 = vsel %vm3409, %v3444, 0
        %v3450 = vsel %vm3409, %v3445, 0
        %vm3452 = vcmask 1041408
        %v3453 = vsel %vm3452, %v3221, 0
        %3455 = vmatprep.subr.bf16.mxu0 0
        %3456 = vmatpush1.bf16.msra.mxu0 %v3220
        %3457 = vmatprep.subr.bf16.mxu0 0
        %3458 = vmatpush1.bf16.msra.mxu0 %v3453
        %3459 = vmatprep.subr.bf16.mxu0 0
        %3460 = vmatpush1.bf16.msra.mxu0 0
        %3461 = vmatprep.subr.bf16.mxu0 0
        %3462 = vmatpush1.bf16.msra.mxu0 0
        %3463 = vmatprep.subr.bf16.mxu0 0
        %3464 = vmatpush1.bf16.msra.mxu0 0
        %3465 = vmatprep.subr.bf16.mxu0 0
        %3466 = vmatpush1.bf16.msra.mxu0 0
        %3467 = vmatprep.subr.bf16.mxu0 0
        %3468 = vmatpush1.bf16.msra.mxu0 0
        %3469 = vmatprep.subr.bf16.mxu0 0
        %3470 = vmatpush1.bf16.msra.mxu0 0
        %3471 = vmatprep.subr.bf16.mxu0 0
        %3472 = vmatpush1.bf16.msra.mxu0 0
        %3473 = vmatprep.subr.bf16.mxu0 0
        %3474 = vmatpush1.bf16.msra.mxu0 0
        %3475 = vmatprep.subr.bf16.mxu0 0
        %3476 = vmatpush1.bf16.msra.mxu0 0
        %3477 = vmatprep.subr.bf16.mxu0 0
        %3478 = vmatpush1.bf16.msra.mxu0 0
        %3479 = vmatprep.subr.bf16.mxu0 0
        %3480 = vmatpush1.bf16.msra.mxu0 0
        %3481 = vmatprep.subr.bf16.mxu0 0
        %3482 = vmatpush1.bf16.msra.mxu0 0
        %3483 = vmatprep.subr.bf16.mxu0 0
        %3484 = vmatpush1.bf16.msra.mxu0 0
        %3485 = vmatprep.subr.bf16.mxu0 0
        %3486 = vmatpush1.bf16.msra.mxu0 0
        %3487 = vmatprep.mubr.bf16.mxu0 0
        %3488 = vmatmul.mubr.bf16.gmra.mrb[0].mxu0 %v3447
        %v3489 = vpop.f32.mrb[0].mxu0
        %v3490 = vadd.f32 %v3203, %v3489
        %v3491 = vpop.f32.mrb[0].mxu0
        %v3492 = vpop.f32.mrb[0].mxu0
        %v3493 = vadd.f32 %v3208, %v3492
        %v3494 = vpop.f32.mrb[0].mxu0
        %3495 = vmatprep.mubr.bf16.mxu0 0
        %3496 = vmatmul.mubr.bf16.gmra.mrb[0].mxu0 %v3450
        %v3497 = vpop.f32.mrb[0].mxu0
        %v3498 = vadd.f32 %v3213, %v3497
        %v3499 = vpop.f32.mrb[0].mxu0
        %v3500 = vpop.f32.mrb[0].mxu0
        %v3501 = vpop.f32.mrb[0].mxu0
        %3502 = vdwg.mxu0
        %v3503 = vld [vmem:[%s3 + $0x1d8] sm:$0x1]
        %v3504 = vld [vmem:[%s3 + $0x1e0] sm:$0x1]
        %v3505 = vsel %vm560, %v3490, 0.0
        %3506 = vadd.xlane.f32.xlu0 %v3505
        %v3507 = vpop.xlane.xlu0 %3506
        %v3508 = vsel %vm560, %v3493, 0.0
        %3509 = vadd.xlane.f32.xlu0 %v3508
        %v3510 = vpop.xlane.xlu0 %3509
        %vm3511 = vcmask 257024
        %v3512 = vsel %vm3511, %v3498, 0.0
        %3513 = vadd.xlane.f32.xlu0 %v3512
        %v3514 = vpop.xlane.xlu0 %3513
        %v3515 = vmul.f32 %v3507, %v1807
        %v3516 = vmul.f32 %v3510, %v1807
        %v3517 = vmul.f32 %v3514, %v1807
        %v3518 = vsub.f32 %v3490, %v3515
        %v3519 = vsub.f32 %v3493, %v3516
        %v3520 = vsub.f32 %v3498, %v3517
        %v3521 = vmul.f32 %v3518, %v3518
        %v3522 = vmul.f32 %v3519, %v3519
        %v3523 = vmul.f32 %v3520, %v3520
        %v3524 = vsel %vm560, %v3521, 0.0
        %3525 = vadd.xlane.f32.xlu0 %v3524
        %v3526 = vpop.xlane.xlu0 %3525
        %v3527 = vsel %vm560, %v3522, 0.0
        %3528 = vadd.xlane.f32.xlu0 %v3527
        %v3529 = vpop.xlane.xlu0 %3528
        %v3530 = vsel %vm3511, %v3523, 0.0
        %3531 = vadd.xlane.f32.xlu0 %v3530
        %v3532 = vpop.xlane.xlu0 %3531
        %v3533 = vmul.f32 %v3526, %v1807
        %v3534 = vmul.f32 %v3529, %v1807
        %v3535 = vmul.f32 %v3532, %v1807
        %v3536 = vadd.f32 %v3533, 1e-05
        %v3537 = vadd.f32 %v3534, 1e-05
        %v3538 = vadd.f32 %v3535, 1e-05
        %v3539 = vrsqrt.pop %v3536
        %v3540 = vrsqrt.pop %v3537
        %v3541 = vrsqrt.pop %v3538
        %v3542 = vmul.f32 %v3518, %v3539
        %v3543 = vmul.f32 %v3519, %v3540
        %v3544 = vmul.f32 %v3520, %v3541
        %v3545 = vlaneseq
        %v3546 = vshrl.u32 %v3545, 7
        %v3547 = vsub.s32 0, %v3546
        %v3548 = vrot.slane %v3503, %v3547
        %v3549 = vmul.f32 %v3542, %v3548
        %v3550 = vmul.f32 %v3543, %v3548
        %v3551 = vmul.f32 %v3544, %v3548
        %v3552 = vlaneseq
        %v3553 = vshrl.u32 %v3552, 7
        %v3554 = vsub.s32 0, %v3553
        %v3555 = vrot.slane %v3504, %v3554
        %v3556 = vadd.f32 %v3549, %v3555
        %v3557 = vadd.f32 %v3550, %v3555
        %v3558 = vadd.f32 %v3551, %v3555
        %v3559 = vld [vmem:[%s3 + $0x1e8] sm:$0xff]
        %v3560 = vld [vmem:[%s3 + $0x1f0] sm:$0xff]
        %v3561 = vld [vmem:[%s3 + $0x1f8] sm:$0xff]
        %v3562 = vld [vmem:[%s3 + $0x200] sm:$0xff]
        %v3563 = vpack.c.bf16 %v3557, %v3556
        %v3564 = vpack.c.bf16 %v3558, %v3558
        %v3565 = vpack.c.bf16 %v3560, %v3559
        %v3566 = vpack.c.bf16 %v3562, %v3561
        %v3567 = vld [vmem:[%s3 + $0x208] sm:$0x1]
        %v3568 = vlaneseq
        %v3569 = vshrl.u32 %v3568, 7
        %v3570 = vsub.s32 0, %v3569
        %v3571 = vrot.slane %v3567, %v3570
        %v3573 = vsel %vm560, %v3563, 0
        %v3576 = vsel %vm560, %v3564, 0
        %3578 = vmatprep.subr.bf16.mxu0 0
        %3579 = vmatpush1.bf16.msra.mxu0 %v3565
        %3580 = vmatprep.subr.bf16.mxu0 0
        %3581 = vmatpush1.bf16.msra.mxu0 %v3566
        %3582 = vmatprep.subr.bf16.mxu0 0
        %3583 = vmatpush1.bf16.msra.mxu0 0
        %3584 = vmatprep.subr.bf16.mxu0 0
        %3585 = vmatpush1.bf16.msra.mxu0 0
        %3586 = vmatprep.subr.bf16.mxu0 0
        %3587 = vmatpush1.bf16.msra.mxu0 0
        %3588 = vmatprep.subr.bf16.mxu0 0
        %3589 = vmatpush1.bf16.msra.mxu0 0
        %3590 = vmatprep.subr.bf16.mxu0 0
        %3591 = vmatpush1.bf16.msra.mxu0 0
        %3592 = vmatprep.subr.bf16.mxu0 0
        %3593 = vmatpush1.bf16.msra.mxu0 0
        %3594 = vmatprep.subr.bf16.mxu0 0
        %3595 = vmatpush1.bf16.msra.mxu0 0
        %3596 = vmatprep.subr.bf16.mxu0 0
        %3597 = vmatpush1.bf16.msra.mxu0 0
        %3598 = vmatprep.subr.bf16.mxu0 0
        %3599 = vmatpush1.bf16.msra.mxu0 0
        %3600 = vmatprep.subr.bf16.mxu0 0
        %3601 = vmatpush1.bf16.msra.mxu0 0
        %3602 = vmatprep.subr.bf16.mxu0 0
        %3603 = vmatpush1.bf16.msra.mxu0 0
        %3604 = vmatprep.subr.bf16.mxu0 0
        %3605 = vmatpush1.bf16.msra.mxu0 0
        %3606 = vmatprep.subr.bf16.mxu0 0
        %3607 = vmatpush1.bf16.msra.mxu0 0
        %3608 = vmatprep.subr.bf16.mxu0 0
        %3609 = vmatpush1.bf16.msra.mxu0 0
        %3610 = vmatprep.mubr.bf16.mxu0 0
        %3611 = vmatmul.mubr.bf16.gmra.mrb[0].mxu0 %v3573
        %v3612 = vpop.f32.mrb[0].mxu0
        %v3613 = vadd.f32 %v3571, %v3612
        %v3614 = vpop.f32.mrb[0].mxu0
        %v3615 = vpop.f32.mrb[0].mxu0
        %v3616 = vadd.f32 %v3571, %v3615
        %v3617 = vpop.f32.mrb[0].mxu0
        %3618 = vmatprep.mubr.bf16.mxu0 0
        %3619 = vmatmul.mubr.bf16.gmra.mrb[0].mxu0 %v3576
        %v3620 = vpop.f32.mrb[0].mxu0
        %v3621 = vadd.f32 %v3571, %v3620
        %v3622 = vpop.f32.mrb[0].mxu0
        %v3623 = vpop.f32.mrb[0].mxu0
        %v3624 = vpop.f32.mrb[0].mxu0
        %3625 = vdwg.mxu0
        %v3626 = vmax.f32 %v3613, 0.0
        %v3627 = vmax.f32 %v3616, 0.0
        %v3628 = vmax.f32 %v3621, 0.0
        %v3629 = vld [vmem:[%s3 + $0x210] sm:$0xff]
        %v3630 = vld [vmem:[%s3 + $0x218] sm:$0xff]
        %v3631 = vld [vmem:[%s3 + $0x220] sm:$0xff]
        %v3632 = vld [vmem:[%s3 + $0x228] sm:$0xff]
        %v3633 = vld [vmem:[%s3 + $0x230] sm:$0xff]
        %v3634 = vld [vmem:[%s3 + $0x238] sm:$0xff]
        %v3635 = vld [vmem:[%s3 + $0x240] sm:$0xff]
        %v3636 = vld [vmem:[%s3 + $0x248] sm:$0xff]
        %v3637 = vpack.c.bf16 %v3627, %v3626
        %v3638 = vpack.c.bf16 %v3628, %v3628
        %v3639 = vpack.c.bf16 %v3630, %v3629
        %v3640 = vpack.c.bf16 %v3632, %v3631
        %v3641 = vpack.c.bf16 %v3634, %v3633
        %v3642 = vpack.c.bf16 %v3636, %v3635
        %v3643 = vld [vmem:[%s3 + $0x250] sm:$0x1]
        %v3644 = vlaneseq
        %v3645 = vshrl.u32 %v3644, 7
        %v3646 = vsub.s32 0, %v3645
        %v3647 = vrot.slane %v3643, %v3646
        %v3649 = vsel %vm2267, %v3637, 0
        %v3652 = vsel %vm2267, %v3638, 0
        %3654 = vmatprep.subr.bf16.mxu0 0
        %3655 = vmatpush1.bf16.msra.mxu0 %v3639
        %3656 = vmatprep.subr.bf16.mxu0 0
        %3657 = vmatpush1.bf16.msra.mxu0 %v3640
        %3658 = vmatprep.subr.bf16.mxu0 0
        %3659 = vmatpush1.bf16.msra.mxu0 %v3641
        %3660 = vmatprep.subr.bf16.mxu0 0
        %3661 = vmatpush1.bf16.msra.mxu0 %v3642
        %3662 = vmatprep.subr.bf16.mxu0 0
        %3663 = vmatpush1.bf16.msra.mxu0 0
        %3664 = vmatprep.subr.bf16.mxu0 0
        %3665 = vmatpush1.bf16.msra.mxu0 0
        %3666 = vmatprep.subr.bf16.mxu0 0
        %3667 = vmatpush1.bf16.msra.mxu0 0
        %3668 = vmatprep.subr.bf16.mxu0 0
        %3669 = vmatpush1.bf16.msra.mxu0 0
        %3670 = vmatprep.subr.bf16.mxu0 0
        %3671 = vmatpush1.bf16.msra.mxu0 0
        %3672 = vmatprep.subr.bf16.mxu0 0
        %3673 = vmatpush1.bf16.msra.mxu0 0
        %3674 = vmatprep.subr.bf16.mxu0 0
        %3675 = vmatpush1.bf16.msra.mxu0 0
        %3676 = vmatprep.subr.bf16.mxu0 0
        %3677 = vmatpush1.bf16.msra.mxu0 0
        %3678 = vmatprep.subr.bf16.mxu0 0
        %3679 = vmatpush1.bf16.msra.mxu0 0
        %3680 = vmatprep.subr.bf16.mxu0 0
        %3681 = vmatpush1.bf16.msra.mxu0 0
        %3682 = vmatprep.subr.bf16.mxu0 0
        %3683 = vmatpush1.bf16.msra.mxu0 0
        %3684 = vmatprep.subr.bf16.mxu0 0
        %3685 = vmatpush1.bf16.msra.mxu0 0
        %3686 = vmatprep.mubr.bf16.mxu0 0
        %3687 = vmatmul.mubr.bf16.gmra.mrb[0].mxu0 %v3649
        %v3688 = vpop.f32.mrb[0].mxu0
        %v3689 = vadd.f32 %v3647, %v3688
        %v3690 = vpop.f32.mrb[0].mxu0
        %v3691 = vpop.f32.mrb[0].mxu0
        %v3692 = vadd.f32 %v3647, %v3691
        %v3693 = vpop.f32.mrb[0].mxu0
        %3694 = vmatprep.mubr.bf16.mxu0 0
        %3695 = vmatmul.mubr.bf16.gmra.mrb[0].mxu0 %v3652
        %v3696 = vpop.f32.mrb[0].mxu0
        %v3697 = vadd.f32 %v3647, %v3696
        %v3698 = vpop.f32.mrb[0].mxu0
        %v3699 = vpop.f32.mrb[0].mxu0
        %v3700 = vpop.f32.mrb[0].mxu0
        %3701 = vdwg.mxu0
        %v3702 = vmax.f32 %v3689, 0.0
        %v3703 = vmax.f32 %v3692, 0.0
        %v3704 = vmax.f32 %v3697, 0.0
        %v3705 = vld [vmem:[%s3 + $0x258] sm:$0xff]
        %v3706 = vld [vmem:[%s3 + $0x260] sm:$0xff]
        %v3707 = vld [vmem:[%s3 + $0x268] sm:$0xff]
        %v3708 = vld [vmem:[%s3 + $0x270] sm:$0xff]
        %v3709 = vld [vmem:[%s3 + $0x278] sm:$0xff]
        %v3710 = vld [vmem:[%s3 + $0x280] sm:$0xff]
        %v3711 = vld [vmem:[%s3 + $0x288] sm:$0xff]
        %v3712 = vld [vmem:[%s3 + $0x290] sm:$0xff]
        %v3713 = vpack.c.bf16 %v3703, %v3702
        %v3714 = vpack.c.bf16 %v3704, %v3704
        %v3715 = vpack.c.bf16 %v3706, %v3705
        %v3716 = vpack.c.bf16 %v3708, %v3707
        %v3717 = vpack.c.bf16 %v3710, %v3709
        %v3718 = vpack.c.bf16 %v3712, %v3711
        %v3719 = vld [vmem:[%s3 + $0x298] sm:$0x1]
        %v3720 = vlaneseq
        %v3721 = vshrl.u32 %v3720, 7
        %v3722 = vsub.s32 0, %v3721
        %v3723 = vrot.slane %v3719, %v3722
        %v3725 = vsel %vm2267, %v3713, 0
        %v3728 = vsel %vm2267, %v3714, 0
        %3730 = vmatprep.subr.bf16.mxu0 0
        %3731 = vmatpush1.bf16.msra.mxu0 %v3715
        %3732 = vmatprep.subr.bf16.mxu0 0
        %3733 = vmatpush1.bf16.msra.mxu0 %v3716
        %3734 = vmatprep.subr.bf16.mxu0 0
        %3735 = vmatpush1.bf16.msra.mxu0 %v3717
        %3736 = vmatprep.subr.bf16.mxu0 0
        %3737 = vmatpush1.bf16.msra.mxu0 %v3718
        %3738 = vmatprep.subr.bf16.mxu0 0
        %3739 = vmatpush1.bf16.msra.mxu0 0
        %3740 = vmatprep.subr.bf16.mxu0 0
        %3741 = vmatpush1.bf16.msra.mxu0 0
        %3742 = vmatprep.subr.bf16.mxu0 0
        %3743 = vmatpush1.bf16.msra.mxu0 0
        %3744 = vmatprep.subr.bf16.mxu0 0
        %3745 = vmatpush1.bf16.msra.mxu0 0
        %3746 = vmatprep.subr.bf16.mxu0 0
        %3747 = vmatpush1.bf16.msra.mxu0 0
        %3748 = vmatprep.subr.bf16.mxu0 0
        %3749 = vmatpush1.bf16.msra.mxu0 0
        %3750 = vmatprep.subr.bf16.mxu0 0
        %3751 = vmatpush1.bf16.msra.mxu0 0
        %3752 = vmatprep.subr.bf16.mxu0 0
        %3753 = vmatpush1.bf16.msra.mxu0 0
        %3754 = vmatprep.subr.bf16.mxu0 0
        %3755 = vmatpush1.bf16.msra.mxu0 0
        %3756 = vmatprep.subr.bf16.mxu0 0
        %3757 = vmatpush1.bf16.msra.mxu0 0
        %3758 = vmatprep.subr.bf16.mxu0 0
        %3759 = vmatpush1.bf16.msra.mxu0 0
        %3760 = vmatprep.subr.bf16.mxu0 0
        %3761 = vmatpush1.bf16.msra.mxu0 0
        %3762 = vmatprep.mubr.bf16.mxu0 0
        %3763 = vmatmul.mubr.bf16.gmra.mrb[0].mxu0 %v3725
        %v3764 = vpop.f32.mrb[0].mxu0
        %v3765 = vadd.f32 %v3723, %v3764
        %v3766 = vpop.f32.mrb[0].mxu0
        %v3767 = vpop.f32.mrb[0].mxu0
        %v3768 = vadd.f32 %v3723, %v3767
        %v3769 = vpop.f32.mrb[0].mxu0
        %3770 = vmatprep.mubr.bf16.mxu0 0
        %3771 = vmatmul.mubr.bf16.gmra.mrb[0].mxu0 %v3728
        %v3772 = vpop.f32.mrb[0].mxu0
        %v3773 = vadd.f32 %v3723, %v3772
        %v3774 = vpop.f32.mrb[0].mxu0
        %v3775 = vpop.f32.mrb[0].mxu0
        %v3776 = vpop.f32.mrb[0].mxu0
        %3777 = vdwg.mxu0
        %v3778 = vmax.f32 %v3765, 0.0
        %v3779 = vmax.f32 %v3768, 0.0
        %v3780 = vmax.f32 %v3773, 0.0
        %v3781 = vld [vmem:[%s3 + $0x2a0] sm:$0xff]
        %v3782 = vld [vmem:[%s3 + $0x2a8] sm:$0xff]
        %v3783 = vld [vmem:[%s3 + $0x2b0] sm:$0xff]
        %v3784 = vld [vmem:[%s3 + $0x2b8] sm:$0xff]
        %v3785 = vld [vmem:[%s3 + $0x2c0] sm:$0xff]
        %v3786 = vld [vmem:[%s3 + $0x2c8] sm:$0xff]
        %v3787 = vld [vmem:[%s3 + $0x2d0] sm:$0xff]
        %v3788 = vld [vmem:[%s3 + $0x2d8] sm:$0xff]
        %v3789 = vpack.c.bf16 %v3779, %v3778
        %v3790 = vpack.c.bf16 %v3780, %v3780
        %v3791 = vpack.c.bf16 %v3782, %v3781
        %v3792 = vpack.c.bf16 %v3784, %v3783
        %v3793 = vpack.c.bf16 %v3786, %v3785
        %v3794 = vpack.c.bf16 %v3788, %v3787
        %v3795 = vld [vmem:[%s3 + $0x2e0] sm:$0x1]
        %v3796 = vlaneseq
        %v3797 = vshrl.u32 %v3796, 7
        %v3798 = vsub.s32 0, %v3797
        %v3799 = vrot.slane %v3795, %v3798
        %v3801 = vsel %vm2267, %v3789, 0
        %v3804 = vsel %vm2267, %v3790, 0
        %3806 = vmatprep.subr.bf16.mxu0 0
        %3807 = vmatpush1.bf16.msra.mxu0 %v3791
        %3808 = vmatprep.subr.bf16.mxu0 0
        %3809 = vmatpush1.bf16.msra.mxu0 %v3792
        %3810 = vmatprep.subr.bf16.mxu0 0
        %3811 = vmatpush1.bf16.msra.mxu0 %v3793
        %3812 = vmatprep.subr.bf16.mxu0 0
        %3813 = vmatpush1.bf16.msra.mxu0 %v3794
        %3814 = vmatprep.subr.bf16.mxu0 0
        %3815 = vmatpush1.bf16.msra.mxu0 0
        %3816 = vmatprep.subr.bf16.mxu0 0
        %3817 = vmatpush1.bf16.msra.mxu0 0
        %3818 = vmatprep.subr.bf16.mxu0 0
        %3819 = vmatpush1.bf16.msra.mxu0 0
        %3820 = vmatprep.subr.bf16.mxu0 0
        %3821 = vmatpush1.bf16.msra.mxu0 0
        %3822 = vmatprep.subr.bf16.mxu0 0
        %3823 = vmatpush1.bf16.msra.mxu0 0
        %3824 = vmatprep.subr.bf16.mxu0 0
        %3825 = vmatpush1.bf16.msra.mxu0 0
        %3826 = vmatprep.subr.bf16.mxu0 0
        %3827 = vmatpush1.bf16.msra.mxu0 0
        %3828 = vmatprep.subr.bf16.mxu0 0
        %3829 = vmatpush1.bf16.msra.mxu0 0
        %3830 = vmatprep.subr.bf16.mxu0 0
        %3831 = vmatpush1.bf16.msra.mxu0 0
        %3832 = vmatprep.subr.bf16.mxu0 0
        %3833 = vmatpush1.bf16.msra.mxu0 0
        %3834 = vmatprep.subr.bf16.mxu0 0
        %3835 = vmatpush1.bf16.msra.mxu0 0
        %3836 = vmatprep.subr.bf16.mxu0 0
        %3837 = vmatpush1.bf16.msra.mxu0 0
        %3838 = vmatprep.mubr.bf16.mxu0 0
        %3839 = vmatmul.mubr.bf16.gmra.mrb[0].mxu0 %v3801
        %v3840 = vpop.f32.mrb[0].mxu0
        %v3841 = vadd.f32 %v3799, %v3840
        %v3842 = vpop.f32.mrb[0].mxu0
        %v3843 = vpop.f32.mrb[0].mxu0
        %v3844 = vadd.f32 %v3799, %v3843
        %v3845 = vpop.f32.mrb[0].mxu0
        %3846 = vmatprep.mubr.bf16.mxu0 0
        %3847 = vmatmul.mubr.bf16.gmra.mrb[0].mxu0 %v3804
        %v3848 = vpop.f32.mrb[0].mxu0
        %v3849 = vadd.f32 %v3799, %v3848
        %v3850 = vpop.f32.mrb[0].mxu0
        %v3851 = vpop.f32.mrb[0].mxu0
        %v3852 = vpop.f32.mrb[0].mxu0
        %3853 = vdwg.mxu0
        %v3854 = vadd.f32 %v3556, %v3841
        %v3855 = vadd.f32 %v3557, %v3844
        %v3856 = vadd.f32 %v3558, %v3849
        %v3857 = vld [vmem:[%s3 + $0x2e8] sm:$0x1]
        %v3858 = vld [vmem:[%s3 + $0x2f0] sm:$0x1]
        %v3859 = vsel %vm560, %v3854, 0.0
        %3860 = vadd.xlane.f32.xlu0 %v3859
        %v3861 = vpop.xlane.xlu0 %3860
        %v3862 = vsel %vm560, %v3855, 0.0
        %3863 = vadd.xlane.f32.xlu0 %v3862
        %v3864 = vpop.xlane.xlu0 %3863
        %v3865 = vsel %vm3511, %v3856, 0.0
        %3866 = vadd.xlane.f32.xlu0 %v3865
        %v3867 = vpop.xlane.xlu0 %3866
        %v3868 = vmul.f32 %v3861, %v1807
        %v3869 = vmul.f32 %v3864, %v1807
        %v3870 = vmul.f32 %v3867, %v1807
        %v3871 = vsub.f32 %v3854, %v3868
        %v3872 = vsub.f32 %v3855, %v3869
        %v3873 = vsub.f32 %v3856, %v3870
        %v3874 = vmul.f32 %v3871, %v3871
        %v3875 = vmul.f32 %v3872, %v3872
        %v3876 = vmul.f32 %v3873, %v3873
        %v3877 = vsel %vm560, %v3874, 0.0
        %3878 = vadd.xlane.f32.xlu0 %v3877
        %v3879 = vpop.xlane.xlu0 %3878
        %v3880 = vsel %vm560, %v3875, 0.0
        %3881 = vadd.xlane.f32.xlu0 %v3880
        %v3882 = vpop.xlane.xlu0 %3881
        %v3883 = vsel %vm3511, %v3876, 0.0
        %3884 = vadd.xlane.f32.xlu0 %v3883
        %v3885 = vpop.xlane.xlu0 %3884
        %v3886 = vmul.f32 %v3879, %v1807
        %v3887 = vmul.f32 %v3882, %v1807
        %v3888 = vmul.f32 %v3885, %v1807
        %v3889 = vadd.f32 %v3886, 1e-05
        %v3890 = vadd.f32 %v3887, 1e-05
        %v3891 = vadd.f32 %v3888, 1e-05
        %v3892 = vrsqrt.pop %v3889
        %v3893 = vrsqrt.pop %v3890
        %v3894 = vrsqrt.pop %v3891
        %v3895 = vmul.f32 %v3871, %v3892
        %v3896 = vmul.f32 %v3872, %v3893
        %v3897 = vmul.f32 %v3873, %v3894
        %v3898 = vlaneseq
        %v3899 = vshrl.u32 %v3898, 7
        %v3900 = vsub.s32 0, %v3899
        %v3901 = vrot.slane %v3857, %v3900
        %v3902 = vmul.f32 %v3895, %v3901
        %v3903 = vmul.f32 %v3896, %v3901
        %v3904 = vmul.f32 %v3897, %v3901
        %v3905 = vlaneseq
        %v3906 = vshrl.u32 %v3905, 7
        %v3907 = vsub.s32 0, %v3906
        %v3908 = vrot.slane %v3858, %v3907
        %v3909 = vadd.f32 %v3902, %v3908
        %v3910 = vadd.f32 %v3903, %v3908
        %v3911 = vadd.f32 %v3904, %v3908
        %v3912 = vld [vmem:[%s6] sm:$0xf]
        %v3914 = vsel %vm3409, %v3912, 0
        %vm3916 = vcmask 1043456
        %v3918 = vsel %vm3916, %v3911, 0
        %3920 = vmatprep.subr.mxu0 0.0
        %3921 = vmatpush1.msra.mxu0 %v3909
        %3922 = vmatprep.subr.mxu0 0.0
        %3923 = vmatpush1.msra.mxu0 %v3910
        %3924 = vmatprep.subr.mxu0 0.0
        %3925 = vmatpush1.msra.mxu0 %v3918
        %3926 = vmatprep.subr.mxu0 0.0
        %3927 = vmatpush1.msra.mxu0 0.0
        %3928 = vmatprep.subr.mxu0 0.0
        %3929 = vmatpush1.msra.mxu0 0.0
        %3930 = vmatprep.subr.mxu0 0.0
        %3931 = vmatpush1.msra.mxu0 0.0
        %3932 = vmatprep.subr.mxu0 0.0
        %3933 = vmatpush1.msra.mxu0 0.0
        %3934 = vmatprep.subr.mxu0 0.0
        %3935 = vmatpush1.msra.mxu0 0.0
        %3936 = vmatprep.subr.mxu0 0.0
        %3937 = vmatpush1.msra.mxu0 0.0
        %3938 = vmatprep.subr.mxu0 0.0
        %3939 = vmatpush1.msra.mxu0 0.0
        %3940 = vmatprep.subr.mxu0 0.0
        %3941 = vmatpush1.msra.mxu0 0.0
        %3942 = vmatprep.subr.mxu0 0.0
        %3943 = vmatpush1.msra.mxu0 0.0
        %3944 = vmatprep.subr.mxu0 0.0
        %3945 = vmatpush1.msra.mxu0 0.0
        %3946 = vmatprep.subr.mxu0 0.0
        %3947 = vmatpush1.msra.mxu0 0.0
        %3948 = vmatprep.subr.mxu0 0.0
        %3949 = vmatpush1.msra.mxu0 0.0
        %3950 = vmatprep.subr.mxu0 0.0
        %3951 = vmatpush1.msra.mxu0 0.0
        %3952 = vmatprep.subr.mxu0 0.0
        %3953 = vmatpush1.msra.mxu0 0.0
        %3954 = vmatprep.subr.mxu0 0.0
        %3955 = vmatpush1.msra.mxu0 0.0
        %3956 = vmatprep.subr.mxu0 0.0
        %3957 = vmatpush1.msra.mxu0 0.0
        %3958 = vmatprep.subr.mxu0 0.0
        %3959 = vmatpush1.msra.mxu0 0.0
        %3960 = vmatprep.subr.mxu0 0.0
        %3961 = vmatpush1.msra.mxu0 0.0
        %3962 = vmatprep.subr.mxu0 0.0
        %3963 = vmatpush1.msra.mxu0 0.0
        %3964 = vmatprep.subr.mxu0 0.0
        %3965 = vmatpush1.msra.mxu0 0.0
        %3966 = vmatprep.subr.mxu0 0.0
        %3967 = vmatpush1.msra.mxu0 0.0
        %3968 = vmatprep.subr.mxu0 0.0
        %3969 = vmatpush1.msra.mxu0 0.0
        %3970 = vmatprep.subr.mxu0 0.0
        %3971 = vmatpush1.msra.mxu0 0.0
        %3972 = vmatprep.subr.mxu0 0.0
        %3973 = vmatpush1.msra.mxu0 0.0
        %3974 = vmatprep.subr.mxu0 0.0
        %3975 = vmatpush1.msra.mxu0 0.0
        %3976 = vmatprep.subr.mxu0 0.0
        %3977 = vmatpush1.msra.mxu0 0.0
        %3978 = vmatprep.subr.mxu0 0.0
        %3979 = vmatpush1.msra.mxu0 0.0
        %3980 = vmatprep.subr.mxu0 0.0
        %3981 = vmatpush1.msra.mxu0 0.0
        %3982 = vmatprep.subr.mxu0 0.0
        %3983 = vmatpush1.msra.mxu0 0.0
        %3984 = vmatprep.mubr.f32.mxu0 0.0
        %3985 = vmatmul.mubr.f32.gmra.mrb[0].mxu0 %v3914
        %v3986 = vpop.f32.mrb[0].mxu0
        %v3987 = vadd.f32 0.0, %v3986
        %v3988 = vpop.f32.mrb[0].mxu0
        %3989 = vdwg.mxu0
        %v3990 = vld [vmem:[%s3 + $0x2f8] sm:$0xff]
        %v3991 = vld [vmem:[%s3 + $0x300] sm:$0xff]
        %v3992 = vld [vmem:[%s3 + $0x308] sm:$0xff]
        %v3993 = vld [vmem:[%s3 + $0x310] sm:$0xff]
        %v3994 = vpack.c.bf16 %v3987, %v3987
        %v3995 = vpack.c.bf16 %v3991, %v3990
        %v3996 = vpack.c.bf16 %v3993, %v3992
        %v3997 = vld [vmem:[%s3 + $0x318] sm:$0x1]
        %v3998 = vlaneseq
        %v3999 = vshrl.u32 %v3998, 7
        %v4000 = vsub.s32 0, %v3999
        %v4001 = vrot.slane %v3997, %v4000
        %v4003 = vsel %vm560, %v3994, 0
        %4005 = vmatprep.subr.bf16.mxu0 0
        %4006 = vmatpush1.bf16.msra.mxu0 %v3995
        %4007 = vmatprep.subr.bf16.mxu0 0
        %4008 = vmatpush1.bf16.msra.mxu0 %v3996
        %4009 = vmatprep.subr.bf16.mxu0 0
        %4010 = vmatpush1.bf16.msra.mxu0 0
        %4011 = vmatprep.subr.bf16.mxu0 0
        %4012 = vmatpush1.bf16.msra.mxu0 0
        %4013 = vmatprep.subr.bf16.mxu0 0
        %4014 = vmatpush1.bf16.msra.mxu0 0
        %4015 = vmatprep.subr.bf16.mxu0 0
        %4016 = vmatpush1.bf16.msra.mxu0 0
        %4017 = vmatprep.subr.bf16.mxu0 0
        %4018 = vmatpush1.bf16.msra.mxu0 0
        %4019 = vmatprep.subr.bf16.mxu0 0
        %4020 = vmatpush1.bf16.msra.mxu0 0
        %4021 = vmatprep.subr.bf16.mxu0 0
        %4022 = vmatpush1.bf16.msra.mxu0 0
        %4023 = vmatprep.subr.bf16.mxu0 0
        %4024 = vmatpush1.bf16.msra.mxu0 0
        %4025 = vmatprep.subr.bf16.mxu0 0
        %4026 = vmatpush1.bf16.msra.mxu0 0
        %4027 = vmatprep.subr.bf16.mxu0 0
        %4028 = vmatpush1.bf16.msra.mxu0 0
        %4029 = vmatprep.subr.bf16.mxu0 0
        %4030 = vmatpush1.bf16.msra.mxu0 0
        %4031 = vmatprep.subr.bf16.mxu0 0
        %4032 = vmatpush1.bf16.msra.mxu0 0
        %4033 = vmatprep.subr.bf16.mxu0 0
        %4034 = vmatpush1.bf16.msra.mxu0 0
        %4035 = vmatprep.subr.bf16.mxu0 0
        %4036 = vmatpush1.bf16.msra.mxu0 0
        %4037 = vmatprep.mubr.bf16.mxu0 0
        %4038 = vmatmul.mubr.bf16.gmra.mrb[0].mxu0 %v4003
        %v4039 = vpop.f32.mrb[0].mxu0
        %v4040 = vadd.f32 %v4001, %v4039
        %v4041 = vpop.f32.mrb[0].mxu0
        %v4042 = vpop.f32.mrb[0].mxu0
        %v4043 = vpop.f32.mrb[0].mxu0
        %4044 = vdwg.mxu0
        %v4045 = vand.u32 2147483647, %v4040
        %vm4046 = vcmask 60416
        %4047 = vst.msk [vmem:[%s329] sm:$0xf] %vm4046, %v4045
        %v4048 = vld [vmem:[%s3 + $0x320] sm:$0xff]
        %v4049 = vld [vmem:[%s3 + $0x328] sm:$0xff]
        %v4050 = vld [vmem:[%s3 + $0x330] sm:$0xff]
        %v4051 = vld [vmem:[%s3 + $0x338] sm:$0xff]
        %v4052 = vpack.c.bf16 %v3102, %v3101
        %v4053 = vpack.c.bf16 %v3104, %v3103
        %v4054 = vpack.c.bf16 %v3106, %v3105
        %v4055 = vpack.c.bf16 %v3108, %v3107
        %v4056 = vpack.c.bf16 %v3110, %v3109
        %v4057 = vpack.c.bf16 %v3112, %v3111
        %v4058 = vpack.c.bf16 %v3114, %v3113
        %v4059 = vpack.c.bf16 %v3116, %v3115
        %v4060 = vpack.c.bf16 %v3118, %v3117
        %v4061 = vpack.c.bf16 %v3120, %v3119
        %v4062 = vpack.c.bf16 %v4049, %v4048
        %v4063 = vpack.c.bf16 %v4051, %v4050
        %v4064 = vld [vmem:[%s3 + $0x340] sm:$0x1]
        %v4065 = vlaneseq
        %v4066 = vshrl.u32 %v4065, 7
        %v4067 = vsub.s32 0, %v4066
        %v4068 = vrot.slane %v4064, %v4067
        %v4070 = vsel %vm560, %v4052, 0
        %v4073 = vsel %vm560, %v4053, 0
        %v4076 = vsel %vm560, %v4054, 0
        %v4079 = vsel %vm560, %v4055, 0
        %v4082 = vsel %vm560, %v4056, 0
        %v4085 = vsel %vm560, %v4057, 0
        %v4088 = vsel %vm560, %v4058, 0
        %v4091 = vsel %vm560, %v4059, 0
        %v4094 = vsel %vm560, %v4060, 0
        %v4097 = vsel %vm560, %v4061, 0
        %4099 = vmatprep.subr.bf16.mxu0 0
        %4100 = vmatpush1.bf16.msra.mxu0 %v4062
        %4101 = vmatprep.subr.bf16.mxu0 0
        %4102 = vmatpush1.bf16.msra.mxu0 %v4063
        %4103 = vmatprep.subr.bf16.mxu0 0
        %4104 = vmatpush1.bf16.msra.mxu0 0
        %4105 = vmatprep.subr.bf16.mxu0 0
        %4106 = vmatpush1.bf16.msra.mxu0 0
        %4107 = vmatprep.subr.bf16.mxu0 0
        %4108 = vmatpush1.bf16.msra.mxu0 0
        %4109 = vmatprep.subr.bf16.mxu0 0
        %4110 = vmatpush1.bf16.msra.mxu0 0
        %4111 = vmatprep.subr.bf16.mxu0 0
        %4112 = vmatpush1.bf16.msra.mxu0 0
        %4113 = vmatprep.subr.bf16.mxu0 0
        %4114 = vmatpush1.bf16.msra.mxu0 0
        %4115 = vmatprep.subr.bf16.mxu0 0
        %4116 = vmatpush1.bf16.msra.mxu0 0
        %4117 = vmatprep.subr.bf16.mxu0 0
        %4118 = vmatpush1.bf16.msra.mxu0 0
        %4119 = vmatprep.subr.bf16.mxu0 0
        %4120 = vmatpush1.bf16.msra.mxu0 0
        %4121 = vmatprep.subr.bf16.mxu0 0
        %4122 = vmatpush1.bf16.msra.mxu0 0
        %4123 = vmatprep.subr.bf16.mxu0 0
        %4124 = vmatpush1.bf16.msra.mxu0 0
        %4125 = vmatprep.subr.bf16.mxu0 0
        %4126 = vmatpush1.bf16.msra.mxu0 0
        %4127 = vmatprep.subr.bf16.mxu0 0
        %4128 = vmatpush1.bf16.msra.mxu0 0
        %4129 = vmatprep.subr.bf16.mxu0 0
        %4130 = vmatpush1.bf16.msra.mxu0 0
        %4131 = vmatprep.mubr.bf16.mxu0 0
        %4132 = vmatmul.mubr.bf16.gmra.mrb[0].mxu0 %v4070
        %v4133 = vpop.f32.mrb[0].mxu0
        %v4134 = vadd.f32 %v4068, %v4133
        %v4135 = vpop.f32.mrb[0].mxu0
        %v4136 = vpop.f32.mrb[0].mxu0
        %v4137 = vadd.f32 %v4068, %v4136
        %v4138 = vpop.f32.mrb[0].mxu0
        %4139 = vmatprep.mubr.bf16.mxu0 0
        %4140 = vmatmul.mubr.bf16.gmra.mrb[0].mxu0 %v4073
        %v4141 = vpop.f32.mrb[0].mxu0
        %v4142 = vadd.f32 %v4068, %v4141
        %v4143 = vpop.f32.mrb[0].mxu0
        %v4144 = vpop.f32.mrb[0].mxu0
        %v4145 = vadd.f32 %v4068, %v4144
        %v4146 = vpop.f32.mrb[0].mxu0
        %4147 = vmatprep.mubr.bf16.mxu0 0
        %4148 = vmatmul.mubr.bf16.gmra.mrb[0].mxu0 %v4076
        %v4149 = vpop.f32.mrb[0].mxu0
        %v4150 = vadd.f32 %v4068, %v4149
        %v4151 = vpop.f32.mrb[0].mxu0
        %v4152 = vpop.f32.mrb[0].mxu0
        %v4153 = vadd.f32 %v4068, %v4152
        %v4154 = vpop.f32.mrb[0].mxu0
        %4155 = vmatprep.mubr.bf16.mxu0 0
        %4156 = vmatmul.mubr.bf16.gmra.mrb[0].mxu0 %v4079
        %v4157 = vpop.f32.mrb[0].mxu0
        %v4158 = vadd.f32 %v4068, %v4157
        %v4159 = vpop.f32.mrb[0].mxu0
        %v4160 = vpop.f32.mrb[0].mxu0
        %v4161 = vadd.f32 %v4068, %v4160
        %v4162 = vpop.f32.mrb[0].mxu0
        %4163 = vmatprep.mubr.bf16.mxu0 0
        %4164 = vmatmul.mubr.bf16.gmra.mrb[0].mxu0 %v4082
        %v4165 = vpop.f32.mrb[0].mxu0
        %v4166 = vadd.f32 %v4068, %v4165
        %v4167 = vpop.f32.mrb[0].mxu0
        %v4168 = vpop.f32.mrb[0].mxu0
        %v4169 = vadd.f32 %v4068, %v4168
        %v4170 = vpop.f32.mrb[0].mxu0
        %4171 = vmatprep.mubr.bf16.mxu0 0
        %4172 = vmatmul.mubr.bf16.gmra.mrb[0].mxu0 %v4085
        %v4173 = vpop.f32.mrb[0].mxu0
        %v4174 = vadd.f32 %v4068, %v4173
        %v4175 = vpop.f32.mrb[0].mxu0
        %v4176 = vpop.f32.mrb[0].mxu0
        %v4177 = vadd.f32 %v4068, %v4176
        %v4178 = vpop.f32.mrb[0].mxu0
        %4179 = vmatprep.mubr.bf16.mxu0 0
        %4180 = vmatmul.mubr.bf16.gmra.mrb[0].mxu0 %v4088
        %v4181 = vpop.f32.mrb[0].mxu0
        %v4182 = vadd.f32 %v4068, %v4181
        %v4183 = vpop.f32.mrb[0].mxu0
        %v4184 = vpop.f32.mrb[0].mxu0
        %v4185 = vadd.f32 %v4068, %v4184
        %v4186 = vpop.f32.mrb[0].mxu0
        %4187 = vmatprep.mubr.bf16.mxu0 0
        %4188 = vmatmul.mubr.bf16.gmra.mrb[0].mxu0 %v4091
        %v4189 = vpop.f32.mrb[0].mxu0
        %v4190 = vadd.f32 %v4068, %v4189
        %v4191 = vpop.f32.mrb[0].mxu0
        %v4192 = vpop.f32.mrb[0].mxu0
        %v4193 = vadd.f32 %v4068, %v4192
        %v4194 = vpop.f32.mrb[0].mxu0
        %4195 = vmatprep.mubr.bf16.mxu0 0
        %4196 = vmatmul.mubr.bf16.gmra.mrb[0].mxu0 %v4094
        %v4197 = vpop.f32.mrb[0].mxu0
        %v4198 = vadd.f32 %v4068, %v4197
        %v4199 = vpop.f32.mrb[0].mxu0
        %v4200 = vpop.f32.mrb[0].mxu0
        %v4201 = vadd.f32 %v4068, %v4200
        %v4202 = vpop.f32.mrb[0].mxu0
        %4203 = vmatprep.mubr.bf16.mxu0 0
        %4204 = vmatmul.mubr.bf16.gmra.mrb[0].mxu0 %v4097
        %v4205 = vpop.f32.mrb[0].mxu0
        %v4206 = vadd.f32 %v4068, %v4205
        %v4207 = vpop.f32.mrb[0].mxu0
        %v4208 = vpop.f32.mrb[0].mxu0
        %v4209 = vadd.f32 %v4068, %v4208
        %v4210 = vpop.f32.mrb[0].mxu0
        %4211 = vdwg.mxu0
        %v4212 = vmax.f32 %v4134, 0.0
        %v4213 = vmax.f32 %v4137, 0.0
        %v4214 = vmax.f32 %v4142, 0.0
        %v4215 = vmax.f32 %v4145, 0.0
        %v4216 = vmax.f32 %v4150, 0.0
        %v4217 = vmax.f32 %v4153, 0.0
        %v4218 = vmax.f32 %v4158, 0.0
        %v4219 = vmax.f32 %v4161, 0.0
        %v4220 = vmax.f32 %v4166, 0.0
        %v4221 = vmax.f32 %v4169, 0.0
        %v4222 = vmax.f32 %v4174, 0.0
        %v4223 = vmax.f32 %v4177, 0.0
        %v4224 = vmax.f32 %v4182, 0.0
        %v4225 = vmax.f32 %v4185, 0.0
        %v4226 = vmax.f32 %v4190, 0.0
        %v4227 = vmax.f32 %v4193, 0.0
        %v4228 = vmax.f32 %v4198, 0.0
        %v4229 = vmax.f32 %v4201, 0.0
        %v4230 = vmax.f32 %v4206, 0.0
        %v4231 = vmax.f32 %v4209, 0.0
        %v4232 = vld [vmem:[%s3 + $0x348] sm:$0xff]
        %v4233 = vld [vmem:[%s3 + $0x350] sm:$0xff]
        %v4234 = vld [vmem:[%s3 + $0x358] sm:$0xff]
        %v4235 = vld [vmem:[%s3 + $0x360] sm:$0xff]
        %v4236 = vpack.c.bf16 %v4213, %v4212
        %v4237 = vpack.c.bf16 %v4215, %v4214
        %v4238 = vpack.c.bf16 %v4217, %v4216
        %v4239 = vpack.c.bf16 %v4219, %v4218
        %v4240 = vpack.c.bf16 %v4221, %v4220
        %v4241 = vpack.c.bf16 %v4223, %v4222
        %v4242 = vpack.c.bf16 %v4225, %v4224
        %v4243 = vpack.c.bf16 %v4227, %v4226
        %v4244 = vpack.c.bf16 %v4229, %v4228
        %v4245 = vpack.c.bf16 %v4231, %v4230
        %v4246 = vpack.c.bf16 %v4233, %v4232
        %v4247 = vpack.c.bf16 %v4235, %v4234
        %v4248 = vld [vmem:[%s3 + $0x368] sm:$0x1]
        %v4249 = vlaneseq
        %v4250 = vshrl.u32 %v4249, 7
        %v4251 = vsub.s32 0, %v4250
        %v4252 = vrot.slane %v4248, %v4251
        %v4254 = vsel %vm560, %v4236, 0
        %v4257 = vsel %vm560, %v4237, 0
        %v4260 = vsel %vm560, %v4238, 0
        %v4263 = vsel %vm560, %v4239, 0
        %v4266 = vsel %vm560, %v4240, 0
        %v4269 = vsel %vm560, %v4241, 0
        %v4272 = vsel %vm560, %v4242, 0
        %v4275 = vsel %vm560, %v4243, 0
        %v4278 = vsel %vm560, %v4244, 0
        %v4281 = vsel %vm560, %v4245, 0
        %4283 = vmatprep.subr.bf16.mxu0 0
        %4284 = vmatpush1.bf16.msra.mxu0 %v4246
        %4285 = vmatprep.subr.bf16.mxu0 0
        %4286 = vmatpush1.bf16.msra.mxu0 %v4247
        %4287 = vmatprep.subr.bf16.mxu0 0
        %4288 = vmatpush1.bf16.msra.mxu0 0
        %4289 = vmatprep.subr.bf16.mxu0 0
        %4290 = vmatpush1.bf16.msra.mxu0 0
        %4291 = vmatprep.subr.bf16.mxu0 0
        %4292 = vmatpush1.bf16.msra.mxu0 0
        %4293 = vmatprep.subr.bf16.mxu0 0
        %4294 = vmatpush1.bf16.msra.mxu0 0
        %4295 = vmatprep.subr.bf16.mxu0 0
        %4296 = vmatpush1.bf16.msra.mxu0 0
        %4297 = vmatprep.subr.bf16.mxu0 0
        %4298 = vmatpush1.bf16.msra.mxu0 0
        %4299 = vmatprep.subr.bf16.mxu0 0
        %4300 = vmatpush1.bf16.msra.mxu0 0
        %4301 = vmatprep.subr.bf16.mxu0 0
        %4302 = vmatpush1.bf16.msra.mxu0 0
        %4303 = vmatprep.subr.bf16.mxu0 0
        %4304 = vmatpush1.bf16.msra.mxu0 0
        %4305 = vmatprep.subr.bf16.mxu0 0
        %4306 = vmatpush1.bf16.msra.mxu0 0
        %4307 = vmatprep.subr.bf16.mxu0 0
        %4308 = vmatpush1.bf16.msra.mxu0 0
        %4309 = vmatprep.subr.bf16.mxu0 0
        %4310 = vmatpush1.bf16.msra.mxu0 0
        %4311 = vmatprep.subr.bf16.mxu0 0
        %4312 = vmatpush1.bf16.msra.mxu0 0
        %4313 = vmatprep.subr.bf16.mxu0 0
        %4314 = vmatpush1.bf16.msra.mxu0 0
        %4315 = vmatprep.mubr.bf16.mxu0 0
        %4316 = vmatmul.mubr.bf16.gmra.mrb[0].mxu0 %v4254
        %v4317 = vpop.f32.mrb[0].mxu0
        %v4318 = vadd.f32 %v4252, %v4317
        %v4319 = vpop.f32.mrb[0].mxu0
        %v4320 = vpop.f32.mrb[0].mxu0
        %v4321 = vadd.f32 %v4252, %v4320
        %v4322 = vpop.f32.mrb[0].mxu0
        %4323 = vmatprep.mubr.bf16.mxu0 0
        %4324 = vmatmul.mubr.bf16.gmra.mrb[0].mxu0 %v4257
        %v4325 = vpop.f32.mrb[0].mxu0
        %v4326 = vadd.f32 %v4252, %v4325
        %v4327 = vpop.f32.mrb[0].mxu0
        %v4328 = vpop.f32.mrb[0].mxu0
        %v4329 = vadd.f32 %v4252, %v4328
        %v4330 = vpop.f32.mrb[0].mxu0
        %4331 = vmatprep.mubr.bf16.mxu0 0
        %4332 = vmatmul.mubr.bf16.gmra.mrb[0].mxu0 %v4260
        %v4333 = vpop.f32.mrb[0].mxu0
        %v4334 = vadd.f32 %v4252, %v4333
        %v4335 = vpop.f32.mrb[0].mxu0
        %v4336 = vpop.f32.mrb[0].mxu0
        %v4337 = vadd.f32 %v4252, %v4336
        %v4338 = vpop.f32.mrb[0].mxu0
        %4339 = vmatprep.mubr.bf16.mxu0 0
        %4340 = vmatmul.mubr.bf16.gmra.mrb[0].mxu0 %v4263
        %v4341 = vpop.f32.mrb[0].mxu0
        %v4342 = vadd.f32 %v4252, %v4341
        %v4343 = vpop.f32.mrb[0].mxu0
        %v4344 = vpop.f32.mrb[0].mxu0
        %v4345 = vadd.f32 %v4252, %v4344
        %v4346 = vpop.f32.mrb[0].mxu0
        %4347 = vmatprep.mubr.bf16.mxu0 0
        %4348 = vmatmul.mubr.bf16.gmra.mrb[0].mxu0 %v4266
        %v4349 = vpop.f32.mrb[0].mxu0
        %v4350 = vadd.f32 %v4252, %v4349
        %v4351 = vpop.f32.mrb[0].mxu0
        %v4352 = vpop.f32.mrb[0].mxu0
        %v4353 = vadd.f32 %v4252, %v4352
        %v4354 = vpop.f32.mrb[0].mxu0
        %4355 = vmatprep.mubr.bf16.mxu0 0
        %4356 = vmatmul.mubr.bf16.gmra.mrb[0].mxu0 %v4269
        %v4357 = vpop.f32.mrb[0].mxu0
        %v4358 = vadd.f32 %v4252, %v4357
        %v4359 = vpop.f32.mrb[0].mxu0
        %v4360 = vpop.f32.mrb[0].mxu0
        %v4361 = vadd.f32 %v4252, %v4360
        %v4362 = vpop.f32.mrb[0].mxu0
        %4363 = vmatprep.mubr.bf16.mxu0 0
        %4364 = vmatmul.mubr.bf16.gmra.mrb[0].mxu0 %v4272
        %v4365 = vpop.f32.mrb[0].mxu0
        %v4366 = vadd.f32 %v4252, %v4365
        %v4367 = vpop.f32.mrb[0].mxu0
        %v4368 = vpop.f32.mrb[0].mxu0
        %v4369 = vadd.f32 %v4252, %v4368
        %v4370 = vpop.f32.mrb[0].mxu0
        %4371 = vmatprep.mubr.bf16.mxu0 0
        %4372 = vmatmul.mubr.bf16.gmra.mrb[0].mxu0 %v4275
        %v4373 = vpop.f32.mrb[0].mxu0
        %v4374 = vadd.f32 %v4252, %v4373
        %v4375 = vpop.f32.mrb[0].mxu0
        %v4376 = vpop.f32.mrb[0].mxu0
        %v4377 = vadd.f32 %v4252, %v4376
        %v4378 = vpop.f32.mrb[0].mxu0
        %4379 = vmatprep.mubr.bf16.mxu0 0
        %4380 = vmatmul.mubr.bf16.gmra.mrb[0].mxu0 %v4278
        %v4381 = vpop.f32.mrb[0].mxu0
        %v4382 = vadd.f32 %v4252, %v4381
        %v4383 = vpop.f32.mrb[0].mxu0
        %v4384 = vpop.f32.mrb[0].mxu0
        %v4385 = vadd.f32 %v4252, %v4384
        %v4386 = vpop.f32.mrb[0].mxu0
        %4387 = vmatprep.mubr.bf16.mxu0 0
        %4388 = vmatmul.mubr.bf16.gmra.mrb[0].mxu0 %v4281
        %v4389 = vpop.f32.mrb[0].mxu0
        %v4390 = vadd.f32 %v4252, %v4389
        %v4391 = vpop.f32.mrb[0].mxu0
        %v4392 = vpop.f32.mrb[0].mxu0
        %v4393 = vadd.f32 %v4252, %v4392
        %v4394 = vpop.f32.mrb[0].mxu0
        %4395 = vdwg.mxu0
        %v4396 = vmax.f32 %v4318, 0.0
        %v4397 = vmax.f32 %v4321, 0.0
        %v4398 = vmax.f32 %v4326, 0.0
        %v4399 = vmax.f32 %v4329, 0.0
        %v4400 = vmax.f32 %v4334, 0.0
        %v4401 = vmax.f32 %v4337, 0.0
        %v4402 = vmax.f32 %v4342, 0.0
        %v4403 = vmax.f32 %v4345, 0.0
        %v4404 = vmax.f32 %v4350, 0.0
        %v4405 = vmax.f32 %v4353, 0.0
        %v4406 = vmax.f32 %v4358, 0.0
        %v4407 = vmax.f32 %v4361, 0.0
        %v4408 = vmax.f32 %v4366, 0.0
        %v4409 = vmax.f32 %v4369, 0.0
        %v4410 = vmax.f32 %v4374, 0.0
        %v4411 = vmax.f32 %v4377, 0.0
        %v4412 = vmax.f32 %v4382, 0.0
        %v4413 = vmax.f32 %v4385, 0.0
        %v4414 = vmax.f32 %v4390, 0.0
        %v4415 = vmax.f32 %v4393, 0.0
        %v4416 = vld [vmem:[%s3 + $0x370] sm:$0x1]
        %v4417 = vpack.c.bf16 %v4416, %v4416
        %v4418 = vpack.c.bf16 %v4397, %v4396
        %v4419 = vpack.c.bf16 %v4399, %v4398
        %v4420 = vpack.c.bf16 %v4401, %v4400
        %v4421 = vpack.c.bf16 %v4403, %v4402
        %v4422 = vpack.c.bf16 %v4405, %v4404
        %v4423 = vpack.c.bf16 %v4407, %v4406
        %v4424 = vpack.c.bf16 %v4409, %v4408
        %v4425 = vpack.c.bf16 %v4411, %v4410
        %v4426 = vpack.c.bf16 %v4413, %v4412
        %v4427 = vpack.c.bf16 %v4415, %v4414
        %v4428 = vld [vmem:[%s3 + $0x378] sm:$0x1]
        %4430 = vset.pattern.permute.xlu0 0
        %4431 = vperm.xlu0 %4430, %v4428
        %v4432 = vpop.permute.xlu0 %4431
        %v4435 = vsel %vm560, %v4417, 0
        %v4438 = vsel %vm560, %v4418, 0
        %v4441 = vsel %vm560, %v4419, 0
        %v4444 = vsel %vm560, %v4420, 0
        %v4447 = vsel %vm560, %v4421, 0
        %v4450 = vsel %vm560, %v4422, 0
        %v4453 = vsel %vm560, %v4423, 0
        %v4456 = vsel %vm560, %v4424, 0
        %v4459 = vsel %vm560, %v4425, 0
        %v4462 = vsel %vm560, %v4426, 0
        %v4465 = vsel %vm560, %v4427, 0
        %4467 = vmatprep.subr.bf16.mxu0 0
        %4468 = vmatpush1.bf16.xpose.msra.mxu0 %v4438
        %4469 = vmatprep.subr.bf16.mxu0 0
        %4470 = vmatpush1.bf16.xpose.msra.mxu0 %v4441
        %4471 = vmatprep.subr.bf16.mxu0 0
        %4472 = vmatpush1.bf16.xpose.msra.mxu0 %v4444
        %4473 = vmatprep.subr.bf16.mxu0 0
        %4474 = vmatpush1.bf16.xpose.msra.mxu0 %v4447
        %4475 = vmatprep.subr.bf16.mxu0 0
        %4476 = vmatpush1.bf16.xpose.msra.mxu0 %v4450
        %4477 = vmatprep.subr.bf16.mxu0 0
        %4478 = vmatpush1.bf16.xpose.msra.mxu0 %v4453
        %4479 = vmatprep.subr.bf16.mxu0 0
        %4480 = vmatpush1.bf16.xpose.msra.mxu0 %v4456
        %4481 = vmatprep.subr.bf16.mxu0 0
        %4482 = vmatpush1.bf16.xpose.msra.mxu0 %v4459
        %4483 = vmatprep.subr.bf16.mxu0 0
        %4484 = vmatpush1.bf16.xpose.msra.mxu0 %v4462
        %4485 = vmatprep.subr.bf16.mxu0 0
        %4486 = vmatpush1.bf16.xpose.msra.mxu0 %v4465
        %4487 = vmatprep.subr.bf16.mxu0 0
        %4488 = vmatpush1.bf16.xpose.msra.mxu0 0
        %4489 = vmatprep.subr.bf16.mxu0 0
        %4490 = vmatpush1.bf16.xpose.msra.mxu0 0
        %4491 = vmatprep.subr.bf16.mxu0 0
        %4492 = vmatpush1.bf16.xpose.msra.mxu0 0
        %4493 = vmatprep.subr.bf16.mxu0 0
        %4494 = vmatpush1.bf16.xpose.msra.mxu0 0
        %4495 = vmatprep.subr.bf16.mxu0 0
        %4496 = vmatpush1.bf16.xpose.msra.mxu0 0
        %4497 = vmatprep.subr.bf16.mxu0 0
        %4498 = vmatpush1.bf16.xpose.msra.mxu0 0
        %4499 = vmatprep.mubr.bf16.mxu0 0
        %4500 = vmatmul.mubr.bf16.gmra.mrb[0].mxu0 %v4435
        %v4501 = vpop.f32.mrb[0].mxu0
        %v4502 = vadd.f32 %v4432, %v4501
        %v4503 = vpop.f32.mrb[0].mxu0
        %v4504 = vadd.f32 %v4432, %v4503
        %v4505 = vpop.f32.mrb[0].mxu0
        %v4506 = vpop.f32.mrb[0].mxu0
        %4507 = vdwg.mxu0
        %v4508 = vand.u32 2147483647, %v4502
        %v4509 = vand.u32 2147483647, %v4504
        %v4512 = vcombine.low %v4508, %v4509
        %v4514 = vunpack.c.l.s4 1966171168
        %v4515 = vunpack.c.0.s8 %v4514
        %v4516 = vlaneseq
        %v4517 = vshrl.u32 %v4516, 7
        %v4518 = vsub.s32 %v4515, %v4517
        %v4519 = vrot.slane %v4512, %v4518
        %v4521 = vunpack.c.l.s4 1966171168
        %v4522 = vunpack.c.0.s8 %v4521
        %v4523 = vlaneseq
        %v4524 = vshrl.u32 %v4523, 7
        %v4525 = vsub.s32 %v4522, %v4524
        %v4526 = vrot.slane %v4519, %v4525
        %v4528 = vlaneseq
        %vm4529 = vcmp.ge.s32.totalorder %v4528, 0
        %vm4530 = vcmp.lt.s32.totalorder %v4528, 160
        %vm4531 = vmand %vm4529, %vm4530
        %4532 = vst.msk [vmem:[%s354] sm:$0x3] %vm4531, %v4526
        %s4533 = sand.u32 %s193, 1
        %s4534 = scalar_lea.sflag [#allocation3], %s4533
        %s4535 = sand.u32 %s193, 1
        %s4536 = smul.addr %s4535, 4
        %s4537 = scalar_lea.vmem [#allocation2], %s4536
        %p4538 = scmp.lt.s32.totalorder %s23, 1
        %s4539 = scalar_select %p4538, %s23, 1
        %s4540 = smul.addr %s4539, 2
        %s4541 = scalar_lea.vmem %s8, %s4540
        // Predicated region
        $region49: #{task_head_forward.1} parent=47 // pred_check
          %p4542 = pneg %p203
        $region50: #{task_head_forward.1} parent=47 // pred_check_branch
          %4544 = sbr.rel (%p4542) target = $region52
        $region51: #{task_head_forward.1} parent=47 // pred_region
          %s4546 = ssub.s32 64, 64
          %4547 = vsyncadd %s4534, %s4546
          %s4548 = smul.addr %s23, 64
          %s4549 = scalar_lea.hbm %s7, %s4548
          %s4551 = sshll.u32 %s4537, 4
          %s4552 = int_to_ptr.vmem [resolvable:$true] %s4551
          %4554 = dma.vmem_to_hbm [thread:$0]  %s4552, 64, %s4549, %s4534
        $region52: #{task_head_forward.1} parent=47 // pred_fallthru
          _
        // Predicated region
        $region53: #{task_head_forward.1} parent=47 // pred_check
          %p4555 = pneg %p229
        $region54: #{task_head_forward.1} parent=47 // pred_check_branch
          %4557 = sbr.rel (%p4555) target = $region56
        $region55: #{task_head_forward.1} parent=47 // pred_region
          _
        $region56: #{task_head_forward.1} parent=47 // pred_fallthru
          _
      $region48: #{task_head_forward.1} parent=5 // pred_fallthru
        _
      %p4558 = scmp.le.s32.totalorder 2, %s18
      // Predicated region
      $region57: #{task_head_forward.1} parent=5 // pred_check
        %p4559 = pneg %p4558
      $region58: #{task_head_forward.1} parent=5 // pred_check_branch
        %4561 = sbr.rel (%p4559) target = $region60
      $region59: #{task_head_forward.1} parent=5 // pred_region
        %s4562 = ssub.s32 %s18, 2
        // Predicated region
        $region61: #{task_head_forward.1} parent=59 // pred_check
          %p4563 = pneg %p209
        $region62: #{task_head_forward.1} parent=59 // pred_check_branch
          %4565 = sbr.rel (%p4563) target = $region64
        $region63: #{task_head_forward.1} parent=59 // pred_region
          %s4566 = sand.u32 %s194, 1
          %s4567 = scalar_lea.sflag [#allocation3], %s4566
          %s4568 = sand.u32 %s194, 1
          %s4569 = smul.addr %s4568, 4
          %s4570 = scalar_lea.vmem [#allocation2], %s4569
          %4571 = dma.done %s4567, 64
        $region64: #{task_head_forward.1} parent=59 // pred_fallthru
          _
        // Predicated region
        $region65: #{task_head_forward.1} parent=59 // pred_check
          %p4572 = pneg %p235
        $region66: #{task_head_forward.1} parent=59 // pred_check_branch
          %4574 = sbr.rel (%p4572) target = $region68
        $region67: #{task_head_forward.1} parent=59 // pred_region
          %p4575 = scmp.lt.s32.totalorder %s24, 1
          %s4576 = scalar_select %p4575, %s24, 1
          %s4577 = smul.addr %s4576, 2
          %s4578 = scalar_lea.vmem %s8, %s4577
        $region68: #{task_head_forward.1} parent=59 // pred_fallthru
          _
      $region60: #{task_head_forward.1} parent=5 // pred_fallthru
        _
    $region6: #{task_head_forward.1} parent=1 // loop_footer
      %s22 = sadd.s32 1, %s18
    $region7: #{task_head_forward.1} parent=1 // loop_footer_branch
      %17 = sbr.rel target = $region3
    $region8: #{task_head_forward.1} parent=1 // loop_exit
      _
    %4579 = vsyncpa [#allocation3], 1
    %s4580 = scalar_lea.sflag [#allocation3], 1
    %4581 = vsyncpa %s4580, 1

</llo_original>
